<compile_context>
chip_gen: v6e
topology: v6e:2x2x1
jax: 0.10.0
libtpu: 0.0.40
codegen_flags: <defaults>
</compile_context>

<pallas_src>
import jax
import jax.numpy as jnp
from jax.experimental import pallas as pl
from jax.experimental.pallas import tpu as pltpu

LN_EPS = 1e-5  # torch.nn.LayerNorm default


def _cond_adapter_kernel(h_ref, w_ref, g_ref, beta_ref, o_ref):
    """Fused proj (Linear 1024->77 over token axis, bias-free) + LayerNorm(768), one batch elem.

    h_ref   : (S, D)  bf16  siglip last_hidden_state slice (leading batch dim squeezed)
    w_ref   : (T, S)  bf16  proj weight (nn.Linear stores (out, in)); VMEM-resident
    g_ref   : (1, D)  f32   LayerNorm weight
    beta_ref: (1, D)  f32   LayerNorm bias
    o_ref   : (T, D)        cond_emb slice
    """
    # proj(h.transpose(1,2)).transpose(1,2) == W @ H ; bias[t] is constant along D so it is
    # cancelled exactly by the LayerNorm mean subtraction and is omitted.
    c = jnp.dot(w_ref[...], h_ref[...], preferred_element_type=jnp.float32)  # (T, D) f32 on MXU
    # LayerNorm over last dim (D = 768), biased variance (PyTorch semantics), all in f32.
    mean = jnp.mean(c, axis=-1, keepdims=True)
    var = jnp.mean(jnp.square(c - mean), axis=-1, keepdims=True)
    xhat = (c - mean) * jax.lax.rsqrt(var + LN_EPS)
    o_ref[...] = (xhat * g_ref[...] + beta_ref[...]).astype(o_ref.dtype)


def cond_adapter(hidden, proj_w, norm_g, norm_b, *,
                 compute_dtype=jnp.bfloat16, out_dtype=jnp.float32):
    """hidden: (B, S, D) -> cond_emb: (B, T, D).

    Inputs are cast to `compute_dtype` (bf16 by default) to halve HBM traffic; accumulation
    and LayerNorm stay in f32.  Set out_dtype=jnp.bfloat16 if the downstream UNet takes bf16.
    """
    B, S, D = hidden.shape
    T = proj_w.shape[0]

    h = hidden.astype(compute_dtype)
    w = proj_w.astype(compute_dtype)
    g2 = norm_g.reshape(1, D).astype(jnp.float32)
    beta2 = norm_b.reshape(1, D).astype(jnp.float32)

    in_bytes = jnp.dtype(compute_dtype).itemsize
    out_bytes = jnp.dtype(out_dtype).itemsize
    cost = pl.CostEstimate(
        flops=2 * B * T * S * D,
        transcendentals=0,
        bytes_accessed=(B * S * D * in_bytes      # hidden read
                        + T * S * in_bytes        # proj weight read (once)
                        + 2 * D * 4               # LN gamma/beta
                        + B * T * D * out_bytes), # output write
    )

    return pl.pallas_call(
        _cond_adapter_kernel,
        out_shape=jax.ShapeDtypeStruct((B, T, D), out_dtype),
        grid_spec=pltpu.PrefetchScalarGridSpec(
            num_scalar_prefetch=0,
            grid=(B,),
            in_specs=[
                pl.BlockSpec((None, S, D), lambda i: (i, 0, 0)),  # per-batch hidden slab (squeezed)
                pl.BlockSpec((T, S), lambda i: (0, 0)),            # proj weight, VMEM-resident
                pl.BlockSpec((1, D), lambda i: (0, 0)),            # LN gamma, VMEM-resident
                pl.BlockSpec((1, D), lambda i: (0, 0)),            # LN beta, VMEM-resident
            ],
            out_specs=pl.BlockSpec((None, T, D), lambda i: (i, 0, 0)),
        ),
        compiler_params=pltpu.CompilerParams(
            dimension_semantics=("parallel",)),
        cost_estimate=cost,
    )(h, w, g2, beta2)


def tryoffdiff_v2_multi_forward(noisy_latents, t, siglip_hidden, class_labels, params):
    """Mirrors TryOffDiffv2Multi.forward up to the UNet call.

    noisy_latents: (B, 4, 64, 64) NCHW   (unused here; UNet not translated)
    t:             () or (1,) timestep    (unused here)
    siglip_hidden: (B, 1024, 768)         image_encoder(...).last_hidden_state
    class_labels:  (B,)                   (unused here)
    """
    del noisy_latents, t, class_labels
    cond_emb = cond_adapter(
        siglip_hidden,
        params["proj_w"],
        params["norm_g"], params["norm_b"],
    )
    # TODO(synk): pass cond_emb as encoder_hidden_states into the (untranslated) SD UNet.
    return cond_emb


def _reference(siglip_hidden, params, compute_dtype=jnp.bfloat16):
    """Pure-JAX reference of the Pallas path (same bf16-cast inputs, f32 accumulation).

    The proj bias IS applied here (as in the PyTorch module) to demonstrate that dropping it
    in the kernel is semantics-preserving: it cancels under the LayerNorm mean subtraction.
    """
    h = siglip_hidden.astype(compute_dtype)
    w = params["proj_w"].astype(compute_dtype)
    c = jnp.einsum("ts,bsd->btd", w, h, preferred_element_type=jnp.float32)
    c = c + params["proj_b"][None, :, None].astype(jnp.float32)
    mean = c.mean(-1, keepdims=True)
    var = jnp.square(c - mean).mean(-1, keepdims=True)
    xhat = (c - mean) / jnp.sqrt(var + LN_EPS)
    return xhat * params["norm_g"] + params["norm_b"]


if __name__ == "__main__":
    key = jax.random.PRNGKey(0)
    k_lat, k_hid, k_w, k_b = jax.random.split(key, 4)

    B, S, D, T = 2, 1024, 768, 77   # module-fixed dims: Linear(1024, 77), LayerNorm(768)

    noisy_latents = jax.random.normal(k_lat, (B, 4, 64, 64), jnp.float32)
    t = jnp.array([10], jnp.int32)
    class_labels = jnp.array([0, 1], jnp.int32)
    siglip_hidden = jax.random.normal(k_hid, (B, S, D), jnp.float32)

    # Deterministic parameter init (matches __init__ shapes; xavier_uniform on proj.weight).
    xav = (6.0 / (S + T)) ** 0.5
    lim = 1.0 / (S ** 0.5)
    params = {
        "proj_w": jax.random.uniform(k_w, (T, S), jnp.float32, -xav, xav),
        "proj_b": jax.random.uniform(k_b, (T,), jnp.float32, -lim, lim),  # cancelled by LN
        "norm_g": jnp.ones((D,), jnp.float32),
        "norm_b": jnp.zeros((D,), jnp.float32),
    }

    out = tryoffdiff_v2_multi_forward(noisy_latents, t, siglip_hidden, class_labels, params)
    out = jax.block_until_ready(out)

    ref = _reference(siglip_hidden, params)
    assert out.shape == (B, T, D), out.shape
    assert jnp.allclose(out, ref, atol=5e-3, rtol=5e-3), float(jnp.abs(out - ref).max())
    print("KERNEL_OK")
</pallas_src>

<mosaic_0001>
module attributes {stable_mosaic.version = 11 : i64} {
  func.func @_cond_adapter_kernel(%arg0: i32, %arg1: memref<1x1024x768xbf16, #tpu.memory_space<vmem>>, %arg2: memref<77x1024xbf16, #tpu.memory_space<vmem>>, %arg3: memref<1x768xf32, #tpu.memory_space<vmem>>, %arg4: memref<1x768xf32, #tpu.memory_space<vmem>>, %arg5: memref<1x77x768xf32, #tpu.memory_space<vmem>>) attributes {dimension_semantics = [#tpu.dimension_semantics<parallel>], iteration_bounds = array<i64: 2>, scalar_prefetch = 0 : i64, scratch_operands = 0 : i64, tpu.core_type = #tpu.core_type<tc>, window_params = [{transform_indices = @transform_0, window_bounds = array<i64: 1, 1024, 768>}, {pipeline_mode = #tpu.pipeline_mode<synchronous>, transform_indices = @transform_1, window_bounds = array<i64: 77, 1024>}, {pipeline_mode = #tpu.pipeline_mode<synchronous>, transform_indices = @transform_2, window_bounds = array<i64: 1, 768>}, {pipeline_mode = #tpu.pipeline_mode<synchronous>, transform_indices = @transform_3, window_bounds = array<i64: 1, 768>}, {transform_indices = @transform_4, window_bounds = array<i64: 1, 77, 768>}]} {
    %c0 = arith.constant 0 : index
    %c0_0 = arith.constant 0 : index
    %0 = vector.load %arg2[%c0, %c0_0] : memref<77x1024xbf16, #tpu.memory_space<vmem>>, vector<77x1024xbf16>
    %c0_1 = arith.constant 0 : index
    %c0_2 = arith.constant 0 : index
    %c0_3 = arith.constant 0 : index
    %1 = vector.load %arg1[%c0_1, %c0_2, %c0_3] : memref<1x1024x768xbf16, #tpu.memory_space<vmem>>, vector<1x1024x768xbf16>
    %2 = vector.shape_cast %1 : vector<1x1024x768xbf16> to vector<1024x768xbf16>
    %cst = arith.constant dense<0.000000e+00> : vector<77x768xf32>
    %3 = tpu.matmul %0, %2, %cst {dimension_numbers = #tpu.dot_dimension_numbers<[1], [0], [0], [1], [0, 0, 1, 1], [], []>} : vector<77x1024xbf16>, vector<1024x768xbf16>, vector<77x768xf32> -> vector<77x768xf32>
    %cst_4 = arith.constant dense<0.000000e+00> : vector<77xf32>
    %4 = vector.multi_reduction <add>, %3, %cst_4 [1] : vector<77x768xf32> to vector<77xf32>
    %5 = vector.shape_cast %4 : vector<77xf32> to vector<77x1xf32>
    %cst_5 = arith.constant 7.680000e+02 : f32
    %6 = vector.broadcast %cst_5 : f32 to vector<77x1xf32>
    %7 = arith.divf %5, %6 : vector<77x1xf32>
    %8 = vector.broadcast %7 : vector<77x1xf32> to vector<77x768xf32>
    %9 = arith.subf %3, %8 : vector<77x768xf32>
    %10 = arith.mulf %9, %9 : vector<77x768xf32>
    %cst_6 = arith.constant dense<0.000000e+00> : vector<77xf32>
    %11 = vector.multi_reduction <add>, %10, %cst_6 [1] : vector<77x768xf32> to vector<77xf32>
    %12 = vector.shape_cast %11 : vector<77xf32> to vector<77x1xf32>
    %cst_7 = arith.constant 7.680000e+02 : f32
    %13 = vector.broadcast %cst_7 : f32 to vector<77x1xf32>
    %14 = arith.divf %12, %13 : vector<77x1xf32>
    %15 = vector.broadcast %7 : vector<77x1xf32> to vector<77x768xf32>
    %16 = arith.subf %3, %15 : vector<77x768xf32>
    %cst_8 = arith.constant 9.99999974E-6 : f32
    %17 = vector.broadcast %cst_8 : f32 to vector<77x1xf32>
    %18 = arith.addf %14, %17 : vector<77x1xf32>
    %19 = math.rsqrt %18 : vector<77x1xf32>
    %20 = vector.broadcast %19 : vector<77x1xf32> to vector<77x768xf32>
    %21 = arith.mulf %16, %20 : vector<77x768xf32>
    %c0_9 = arith.constant 0 : index
    %c0_10 = arith.constant 0 : index
    %22 = vector.load %arg3[%c0_9, %c0_10] : memref<1x768xf32, #tpu.memory_space<vmem>>, vector<1x768xf32>
    %23 = vector.broadcast %22 : vector<1x768xf32> to vector<77x768xf32>
    %24 = arith.mulf %21, %23 : vector<77x768xf32>
    %c0_11 = arith.constant 0 : index
    %c0_12 = arith.constant 0 : index
    %25 = vector.load %arg4[%c0_11, %c0_12] : memref<1x768xf32, #tpu.memory_space<vmem>>, vector<1x768xf32>
    %26 = vector.broadcast %25 : vector<1x768xf32> to vector<77x768xf32>
    %27 = arith.addf %24, %26 : vector<77x768xf32>
    %c0_13 = arith.constant 0 : index
    %c0_14 = arith.constant 0 : index
    %c0_15 = arith.constant 0 : index
    %28 = vector.load %arg5[%c0_13, %c0_14, %c0_15] : memref<1x77x768xf32, #tpu.memory_space<vmem>>, vector<1x77x768xf32>
    %29 = vector.shape_cast %28 : vector<1x77x768xf32> to vector<77x768xf32>
    %30 = vector.shape_cast %27 : vector<77x768xf32> to vector<1x77x768xf32>
    tpu.vector_store %arg5[%c0_13, %c0_14, %c0_15], %30 {strides = array<i32>} : memref<1x77x768xf32, #tpu.memory_space<vmem>>, vector<1x77x768xf32>,
    return
  }
  func.func @transform_0(%arg0: i32) -> (i32, i32, i32) {
    %c0_i32 = arith.constant 0 : i32
    %c0_i32_0 = arith.constant 0 : i32
    %c0_i32_1 = arith.constant 0 : i32
    return %arg0, %c0_i32, %c0_i32_0 : i32, i32, i32
  }
  func.func @transform_1(%arg0: i32) -> (i32, i32) {
    %c0_i32 = arith.constant 0 : i32
    %c0_i32_0 = arith.constant 0 : i32
    %c0_i32_1 = arith.constant 0 : i32
    return %c0_i32, %c0_i32_0 : i32, i32
  }
  func.func @transform_2(%arg0: i32) -> (i32, i32) {
    %c0_i32 = arith.constant 0 : i32
    %c0_i32_0 = arith.constant 0 : i32
    %c0_i32_1 = arith.constant 0 : i32
    return %c0_i32, %c0_i32_0 : i32, i32
  }
  func.func @transform_3(%arg0: i32) -> (i32, i32) {
    %c0_i32 = arith.constant 0 : i32
    %c0_i32_0 = arith.constant 0 : i32
    %c0_i32_1 = arith.constant 0 : i32
    return %c0_i32, %c0_i32_0 : i32, i32
  }
  func.func @transform_4(%arg0: i32) -> (i32, i32, i32) {
    %c0_i32 = arith.constant 0 : i32
    %c0_i32_0 = arith.constant 0 : i32
    %c0_i32_1 = arith.constant 0 : i32
    return %arg0, %c0_i32, %c0_i32_0 : i32, i32, i32
  }
}

</mosaic_0001>

<llo_original>
// kernel: tpu_custom_call.1
$region0: #{tpu_custom_call.1}
  #allocation0 [shape = 'u32[]', space=smem, size = 0x4, offset = 0x4, fixed_abs, tag = 'smem constant byte address 0x4 - core index']
  #allocation1 [shape = 'u32[144,128]{1,0:T(1,128)}', space=vmem, size = 0x12000, scoped, tag = 'internal scratch']
  %s0 = inlined_call_operand.hbm [shape: bf16[2,1024,768], index: 0, kind: input, shape index: {}]
  %s1 = inlined_call_operand.hbm [shape: bf16[77,1024], index: 1, kind: input, shape index: {}]
  %s2 = inlined_call_operand.hbm [shape: f32[1,768], index: 2, kind: input, shape index: {}]
  %s3 = inlined_call_operand.hbm [shape: f32[1,768], index: 3, kind: input, shape index: {}]
  %s4 = inlined_call_operand.vmem [shape: f32[2,77,768], index: 4, kind: output, shape index: {}]
  %s5 = sld [smem:[#allocation0]]
  $region65: #{tpu_custom_call.1} parent=0
    _
  %s7 = ssub.s32 1, %s5
  %s8 = scalar_select 0, %s7, %s5
  $region1: #{tpu_custom_call.1} parent=0
    #allocation2 [shape = 'u8[3145728]{0}', space=vmem, size = 0x300000, scoped, tag = 'input window, operand 0']
    #allocation3 [shape = 's32[2]{0}', space=sflag, size = 0x8, scoped, tag = 'scoped memory for tpu_custom_call.1']
    #allocation4 [shape = 'u8[163840]{0}', space=vmem, size = 0x28000, scoped, tag = 'input window, operand 1, single buffered']
    #allocation5 [shape = 's32[1]{0}', space=sflag, size = 0x4, scoped, tag = 'scoped memory for tpu_custom_call.1']
    #allocation6 [shape = 'u8[3072]{0}', space=vmem, size = 0xc00, scoped, tag = 'input window, operand 2, single buffered']
    #allocation7 [shape = 'u8[3072]{0}', space=vmem, size = 0xc00, scoped, tag = 'input window, operand 3, single buffered']
    #allocation8 [shape = 's32[1]{0}', space=sflag, size = 0x4, scoped, tag = 'scoped memory for tpu_custom_call.1']
    %9 = vsyncpa [#allocation3], 0
    %s10 = scalar_lea.sflag [#allocation3], 1
    %11 = vsyncpa %s10, 0
    %12 = vsyncpa [#allocation5], 0
    %13 = vsyncpa [#allocation8], 0
    loop: start=0, step=1, limit=4
    $region2: #{tpu_custom_call.1} parent=1 // loop_pre_header
      _
    $region3: #{tpu_custom_call.1} parent=1 // loop_header
      %s15 = sphi 0, %s19
      %p16 = scmp.ge.s32.totalorder %s15, 4
      %s25 = sphi 0, %s27
      %s28 = sphi 0, %s25
      %s29 = sphi 0, %s28
      %s45 = sphi 0, %s29
      %s49 = sphi 0, %s49
      %s51 = sphi 0, %s49
      %s52 = sphi 0, %s51
      %s66 = sphi 0, %s52
      %s70 = sphi 0, %s70
      %s72 = sphi 0, %s70
      %s73 = sphi 0, %s72
      %s87 = sphi 0, %s73
      %s91 = sphi 0, %s91
      %s93 = sphi 0, %s91
      %s94 = sphi 0, %s93
      %s108 = sphi 0, %s94
      %s114 = sphi 0, %s116
      %s117 = sphi 0, %s114
      %s118 = sphi 0, %s117
      %s134 = sphi 0, %s118
    $region4: #{tpu_custom_call.1} parent=1 // loop_header_branch
      %18 = sbr.rel (%p16) target = $region8
    $region5: #{tpu_custom_call.1} parent=1 // loop_body
      %s20 = ssub.s32 %s15, 1
      %s21 = ssub.s32 %s15, 2
      %s22 = sadd.s32 %s15, 1
      %s23 = ssub.s32 %s15, %s22
      %p24 = scmp.eq.s32.totalorder %s23, 0
      %s26 = sadd.s32 %s25, 1
      %s27 = scalar_select %p24, %s25, %s26
      %p30 = pneg %p24
      %p31 = scmp.eq.s32.totalorder %s15, 1
      %p32 = por %p30, %p31
      %p33 = scmp.ne.s32.totalorder %s25, %s28
      %p34 = scmp.eq.s32.totalorder %s15, 0
      %p35 = por %p33, %p34
      %p36 = scmp.ne.s32.totalorder %s25, %s28
      %p37 = scmp.eq.s32.totalorder %s20, 1
      %p38 = por %p36, %p37
      %p39 = scmp.ne.s32.totalorder %s28, %s29
      %p40 = scmp.eq.s32.totalorder %s20, 0
      %p41 = por %p39, %p40
      %p42 = scmp.ne.s32.totalorder %s28, %s29
      %p43 = scmp.eq.s32.totalorder %s21, 1
      %p44 = por %p42, %p43
      %p46 = scmp.ne.s32.totalorder %s29, %s45
      %p47 = scmp.eq.s32.totalorder %s21, 0
      %p48 = por %p46, %p47
      %s50 = sadd.s32 %s49, 1
      %p53 = scmp.eq.s32.totalorder %s15, 1
      %p54 = scmp.ne.s32.totalorder %s49, %s51
      %p55 = scmp.eq.s32.totalorder %s15, 0
      %p56 = por %p54, %p55
      %p57 = scmp.ne.s32.totalorder %s49, %s51
      %p58 = scmp.eq.s32.totalorder %s20, 1
      %p59 = por %p57, %p58
      %p60 = scmp.ne.s32.totalorder %s51, %s52
      %p61 = scmp.eq.s32.totalorder %s20, 0
      %p62 = por %p60, %p61
      %p63 = scmp.ne.s32.totalorder %s51, %s52
      %p64 = scmp.eq.s32.totalorder %s21, 1
      %p65 = por %p63, %p64
      %p67 = scmp.ne.s32.totalorder %s52, %s66
      %p68 = scmp.eq.s32.totalorder %s21, 0
      %p69 = por %p67, %p68
      %s71 = sadd.s32 %s70, 1
      %p74 = scmp.eq.s32.totalorder %s15, 1
      %p75 = scmp.ne.s32.totalorder %s70, %s72
      %p76 = scmp.eq.s32.totalorder %s15, 0
      %p77 = por %p75, %p76
      %p78 = scmp.ne.s32.totalorder %s70, %s72
      %p79 = scmp.eq.s32.totalorder %s20, 1
      %p80 = por %p78, %p79
      %p81 = scmp.ne.s32.totalorder %s72, %s73
      %p82 = scmp.eq.s32.totalorder %s20, 0
      %p83 = por %p81, %p82
      %p84 = scmp.ne.s32.totalorder %s72, %s73
      %p85 = scmp.eq.s32.totalorder %s21, 1
      %p86 = por %p84, %p85
      %p88 = scmp.ne.s32.totalorder %s73, %s87
      %p89 = scmp.eq.s32.totalorder %s21, 0
      %p90 = por %p88, %p89
      %s92 = sadd.s32 %s91, 1
      %p95 = scmp.eq.s32.totalorder %s15, 1
      %p96 = scmp.ne.s32.totalorder %s91, %s93
      %p97 = scmp.eq.s32.totalorder %s15, 0
      %p98 = por %p96, %p97
      %p99 = scmp.ne.s32.totalorder %s91, %s93
      %p100 = scmp.eq.s32.totalorder %s20, 1
      %p101 = por %p99, %p100
      %p102 = scmp.ne.s32.totalorder %s93, %s94
      %p103 = scmp.eq.s32.totalorder %s20, 0
      %p104 = por %p102, %p103
      %p105 = scmp.ne.s32.totalorder %s93, %s94
      %p106 = scmp.eq.s32.totalorder %s21, 1
      %p107 = por %p105, %p106
      %p109 = scmp.ne.s32.totalorder %s94, %s108
      %p110 = scmp.eq.s32.totalorder %s21, 0
      %p111 = por %p109, %p110
      %s112 = ssub.s32 %s15, %s22
      %p113 = scmp.eq.s32.totalorder %s112, 0
      %s115 = sadd.s32 %s114, 1
      %s116 = scalar_select %p113, %s114, %s115
      %p119 = pneg %p113
      %p120 = scmp.eq.s32.totalorder %s15, 1
      %p121 = por %p119, %p120
      %p122 = scmp.ne.s32.totalorder %s114, %s117
      %p123 = scmp.eq.s32.totalorder %s15, 0
      %p124 = por %p122, %p123
      %p125 = scmp.ne.s32.totalorder %s114, %s117
      %p126 = scmp.eq.s32.totalorder %s20, 1
      %p127 = por %p125, %p126
      %p128 = scmp.ne.s32.totalorder %s117, %s118
      %p129 = scmp.eq.s32.totalorder %s20, 0
      %p130 = por %p128, %p129
      %p131 = scmp.ne.s32.totalorder %s117, %s118
      %p132 = scmp.eq.s32.totalorder %s21, 1
      %p133 = por %p131, %p132
      %p135 = scmp.ne.s32.totalorder %s118, %s134
      %p136 = scmp.eq.s32.totalorder %s21, 0
      %p137 = por %p135, %p136
      %p138 = scmp.le.s32.totalorder 1, %s15
      %p139 = scmp.lt.s32.totalorder %s15, 3
      %p140 = pnand %p138, %p139
      %p141 = pneg %p140
      // Predicated region
      $region9: #{tpu_custom_call.1} parent=5 // pred_check
        _
      $region10: #{tpu_custom_call.1} parent=5 // pred_check_branch
        %143 = sbr.rel (%p140) target = $region12
      $region11: #{tpu_custom_call.1} parent=5 // pred_region
        %s144 = ssub.s32 %s15, 1
        // Predicated region
        $region13: #{tpu_custom_call.1} parent=11 // pred_check
          %p145 = pneg %p62
        $region14: #{tpu_custom_call.1} parent=11 // pred_check_branch
          %147 = sbr.rel (%p145) target = $region16
        $region15: #{tpu_custom_call.1} parent=11 // pred_region
          %s149 = ssub.s32 5120, 5120
          %150 = vsyncadd [#allocation5], %s149
          %s151 = sshll.u32 [#allocation4], 4
          %s152 = int_to_ptr.vmem [resolvable:$true] %s151
          %157 = dma.hbm_to_vmem [thread:$0]  %s1, 5120, %s152, [#allocation5], 512, 512, 32
        $region16: #{tpu_custom_call.1} parent=11 // pred_fallthru
          _
        // Predicated region
        $region17: #{tpu_custom_call.1} parent=11 // pred_check
          %p158 = pneg %p83
        $region18: #{tpu_custom_call.1} parent=11 // pred_check_branch
          %160 = sbr.rel (%p158) target = $region20
        $region19: #{tpu_custom_call.1} parent=11 // pred_region
          %s162 = ssub.s32 96, 96
          %163 = vsyncadd [#allocation5], %s162
          %s165 = sshll.u32 [#allocation6], 4
          %s166 = int_to_ptr.vmem [resolvable:$true] %s165
          %168 = dma.hbm_to_vmem [thread:$0]  %s2, 96, %s166, [#allocation5]
        $region20: #{tpu_custom_call.1} parent=11 // pred_fallthru
          _
        // Predicated region
        $region21: #{tpu_custom_call.1} parent=11 // pred_check
          %p169 = pneg %p104
        $region22: #{tpu_custom_call.1} parent=11 // pred_check_branch
          %171 = sbr.rel (%p169) target = $region24
        $region23: #{tpu_custom_call.1} parent=11 // pred_region
          %s173 = ssub.s32 96, 96
          %174 = vsyncadd [#allocation8], %s173
          %s176 = sshll.u32 [#allocation7], 4
          %s177 = int_to_ptr.vmem [resolvable:$true] %s176
          %179 = dma.hbm_to_vmem [thread:$0]  %s3, 96, %s177, [#allocation8]
        $region24: #{tpu_custom_call.1} parent=11 // pred_fallthru
          _
      $region12: #{tpu_custom_call.1} parent=5 // pred_fallthru
        _
      %p180 = scmp.lt.s32.totalorder %s15, 2
      // Predicated region
      $region25: #{tpu_custom_call.1} parent=5 // pred_check
        %p181 = pneg %p180
      $region26: #{tpu_custom_call.1} parent=5 // pred_check_branch
        %183 = sbr.rel (%p181) target = $region28
      $region27: #{tpu_custom_call.1} parent=5 // pred_region
        // Predicated region
        $region29: #{tpu_custom_call.1} parent=27 // pred_check
          %p184 = pneg %p35
        $region30: #{tpu_custom_call.1} parent=27 // pred_check_branch
          %186 = sbr.rel (%p184) target = $region32
        $region31: #{tpu_custom_call.1} parent=27 // pred_region
          %s187 = sand.u32 %s25, 1
          %s188 = scalar_lea.sflag [#allocation3], %s187
          %s189 = sand.u32 %s25, 1
          %s190 = smul.addr %s189, 3072
          %s191 = scalar_lea.vmem [#allocation2], %s190
          %s193 = ssub.s32 49152, 49152
          %194 = vsyncadd %s188, %s193
          %s195 = smul.addr %s15, 768
          %s196 = smul.addr %s195, 64
          %s197 = scalar_lea.hbm %s0, %s196
          %s198 = sshll.u32 %s191, 4
          %s199 = int_to_ptr.vmem [resolvable:$true] %s198
          %204 = dma.hbm_to_vmem [thread:$0]  %s197, 49152, %s199, %s188, 384, 384, 24
        $region32: #{tpu_custom_call.1} parent=27 // pred_fallthru
          _
      $region28: #{tpu_custom_call.1} parent=5 // pred_fallthru
        _
      %p205 = scmp.le.s32.totalorder 1, %s15
      %p206 = scmp.lt.s32.totalorder %s15, 3
      %p207 = pnand %p205, %p206
      %p208 = pneg %p207
      // Predicated region
      $region33: #{tpu_custom_call.1} parent=5 // pred_check
        _
      $region34: #{tpu_custom_call.1} parent=5 // pred_check_branch
        %210 = sbr.rel (%p207) target = $region36
      $region35: #{tpu_custom_call.1} parent=5 // pred_region
        %s211 = ssub.s32 %s15, 1
        %s212 = sand.u32 %s28, 1
        %s213 = scalar_lea.sflag [#allocation3], %s212
        %s214 = sand.u32 %s28, 1
        %s215 = smul.addr %s214, 3072
        %s216 = scalar_lea.vmem [#allocation2], %s215
        // Predicated region
        $region37: #{tpu_custom_call.1} parent=35 // pred_check
          %p217 = pneg %p41
        $region38: #{tpu_custom_call.1} parent=35 // pred_check_branch
          %219 = sbr.rel (%p217) target = $region40
        $region39: #{tpu_custom_call.1} parent=35 // pred_region
          %220 = dma.done %s213, 49152
        $region40: #{tpu_custom_call.1} parent=35 // pred_fallthru
          _
        // Predicated region
        $region41: #{tpu_custom_call.1} parent=35 // pred_check
          %p221 = pneg %p62
        $region42: #{tpu_custom_call.1} parent=35 // pred_check_branch
          %223 = sbr.rel (%p221) target = $region44
        $region43: #{tpu_custom_call.1} parent=35 // pred_region
          %224 = dma.done [#allocation5], 5120
        $region44: #{tpu_custom_call.1} parent=35 // pred_fallthru
          _
        // Predicated region
        $region45: #{tpu_custom_call.1} parent=35 // pred_check
          %p225 = pneg %p83
        $region46: #{tpu_custom_call.1} parent=35 // pred_check_branch
          %227 = sbr.rel (%p225) target = $region48
        $region47: #{tpu_custom_call.1} parent=35 // pred_region
          %228 = dma.done [#allocation5], 96
        $region48: #{tpu_custom_call.1} parent=35 // pred_fallthru
          _
        // Predicated region
        $region49: #{tpu_custom_call.1} parent=35 // pred_check
          %p229 = pneg %p104
        $region50: #{tpu_custom_call.1} parent=35 // pred_check_branch
          %231 = sbr.rel (%p229) target = $region52
        $region51: #{tpu_custom_call.1} parent=35 // pred_region
          %232 = dma.done [#allocation8], 96
        $region52: #{tpu_custom_call.1} parent=35 // pred_fallthru
          _
        %s233 = sand.u32 %s28, 1
        %s234 = scalar_lea.sflag [#allocation3], %s233
        %s235 = sand.u32 %s28, 1
        %s236 = smul.addr %s235, 3072
        %s237 = scalar_lea.vmem [#allocation2], %s236
        %p238 = pneg %p41
        %p239 = pneg %p38
        %p240 = pneg %p62
        %p241 = pneg %p59
        %p242 = pneg %p83
        %p243 = pneg %p80
        %p244 = pneg %p104
        %p245 = pneg %p101
        %p246 = pneg %p130
        %p247 = pneg %p127
        %p248 = scmp.lt.s32.totalorder %s20, 1
        %s249 = scalar_select %p248, %s20, 1
        %s250 = smul.addr %s249, 60
        %s251 = smul.addr %s250, 8
        %s252 = scalar_lea.vmem %s4, %s251
        %p253 = scmp.lt.s32.totalorder %s20, 1
        %s254 = scalar_select %p253, %s20, 1
        %s255 = smul.addr %s254, 60
        %s256 = smul.addr %s255, 8
        %s257 = scalar_lea.vmem %s4, %s256
        %v258 = vld [vmem:[#allocation4] sm:$0xff]
        %v259 = vld [vmem:[#allocation4 + $0x8] sm:$0xff]
        %v260 = vld [vmem:[#allocation4 + $0x10] sm:$0xff]
        %v261 = vld [vmem:[#allocation4 + $0x18] sm:$0xff]
        %v262 = vld [vmem:[#allocation4 + $0x20] sm:$0xff]
        %v263 = vld [vmem:[#allocation4 + $0x28] sm:$0xff]
        %v264 = vld [vmem:[#allocation4 + $0x30] sm:$0xff]
        %v265 = vld [vmem:[#allocation4 + $0x38] sm:$0xff]
        %v266 = vld [vmem:[#allocation4 + $0x40] sm:$0xff]
        %v267 = vld [vmem:[#allocation4 + $0x48] sm:$0xff]
        %v268 = vld [vmem:[#allocation4 + $0x50] sm:$0xff]
        %v269 = vld [vmem:[#allocation4 + $0x58] sm:$0xff]
        %v270 = vld [vmem:[#allocation4 + $0x60] sm:$0xff]
        %v271 = vld [vmem:[#allocation4 + $0x68] sm:$0xff]
        %v272 = vld [vmem:[#allocation4 + $0x70] sm:$0xff]
        %v273 = vld [vmem:[#allocation4 + $0x78] sm:$0xff]
        %v274 = vld [vmem:[#allocation4 + $0x80] sm:$0xff]
        %v275 = vld [vmem:[#allocation4 + $0x88] sm:$0xff]
        %v276 = vld [vmem:[#allocation4 + $0x90] sm:$0xff]
        %v277 = vld [vmem:[#allocation4 + $0x98] sm:$0xff]
        %v278 = vld [vmem:[#allocation4 + $0xa0] sm:$0xff]
        %v279 = vld [vmem:[#allocation4 + $0xa8] sm:$0xff]
        %v280 = vld [vmem:[#allocation4 + $0xb0] sm:$0xff]
        %v281 = vld [vmem:[#allocation4 + $0xb8] sm:$0xff]
        %v282 = vld [vmem:[#allocation4 + $0xc0] sm:$0xff]
        %v283 = vld [vmem:[#allocation4 + $0xc8] sm:$0xff]
        %v284 = vld [vmem:[#allocation4 + $0xd0] sm:$0xff]
        %v285 = vld [vmem:[#allocation4 + $0xd8] sm:$0xff]
        %v286 = vld [vmem:[#allocation4 + $0xe0] sm:$0xff]
        %v287 = vld [vmem:[#allocation4 + $0xe8] sm:$0xff]
        %v288 = vld [vmem:[#allocation4 + $0xf0] sm:$0xff]
        %v289 = vld [vmem:[#allocation4 + $0xf8] sm:$0xff]
        %v290 = vld [vmem:[#allocation4 + $0x100] sm:$0xff]
        %v291 = vld [vmem:[#allocation4 + $0x108] sm:$0xff]
        %v292 = vld [vmem:[#allocation4 + $0x110] sm:$0xff]
        %v293 = vld [vmem:[#allocation4 + $0x118] sm:$0xff]
        %v294 = vld [vmem:[#allocation4 + $0x120] sm:$0x77]
        %v295 = vld [vmem:[#allocation4 + $0x128] sm:$0x77]
        %v296 = vld [vmem:[#allocation4 + $0x130] sm:$0x77]
        %v297 = vld [vmem:[#allocation4 + $0x138] sm:$0x77]
        %v298 = vld [vmem:[%s216] sm:$0xff]
        %v299 = vld [vmem:[%s216 + $0x8] sm:$0xff]
        %v300 = vld [vmem:[%s216 + $0x10] sm:$0xff]
        %v301 = vld [vmem:[%s216 + $0x18] sm:$0xff]
        %v302 = vld [vmem:[%s216 + $0x20] sm:$0xff]
        %v303 = vld [vmem:[%s216 + $0x28] sm:$0xff]
        %v304 = vld [vmem:[%s216 + $0x30] sm:$0xff]
        %v305 = vld [vmem:[%s216 + $0x38] sm:$0xff]
        %v306 = vld [vmem:[%s216 + $0x40] sm:$0xff]
        %v307 = vld [vmem:[%s216 + $0x48] sm:$0xff]
        %v308 = vld [vmem:[%s216 + $0x50] sm:$0xff]
        %v309 = vld [vmem:[%s216 + $0x58] sm:$0xff]
        %v310 = vld [vmem:[%s216 + $0x60] sm:$0xff]
        %v311 = vld [vmem:[%s216 + $0x68] sm:$0xff]
        %v312 = vld [vmem:[%s216 + $0x70] sm:$0xff]
        %v313 = vld [vmem:[%s216 + $0x78] sm:$0xff]
        %v314 = vld [vmem:[%s216 + $0x80] sm:$0xff]
        %v315 = vld [vmem:[%s216 + $0x88] sm:$0xff]
        %v316 = vld [vmem:[%s216 + $0x90] sm:$0xff]
        %v317 = vld [vmem:[%s216 + $0x98] sm:$0xff]
        %v318 = vld [vmem:[%s216 + $0xa0] sm:$0xff]
        %v319 = vld [vmem:[%s216 + $0xa8] sm:$0xff]
        %v320 = vld [vmem:[%s216 + $0xb0] sm:$0xff]
        %v321 = vld [vmem:[%s216 + $0xb8] sm:$0xff]
        %v322 = vld [vmem:[%s216 + $0xc0] sm:$0xff]
        %v323 = vld [vmem:[%s216 + $0xc8] sm:$0xff]
        %v324 = vld [vmem:[%s216 + $0xd0] sm:$0xff]
        %v325 = vld [vmem:[%s216 + $0xd8] sm:$0xff]
        %v326 = vld [vmem:[%s216 + $0xe0] sm:$0xff]
        %v327 = vld [vmem:[%s216 + $0xe8] sm:$0xff]
        %v328 = vld [vmem:[%s216 + $0xf0] sm:$0xff]
        %v329 = vld [vmem:[%s216 + $0xf8] sm:$0xff]
        %v330 = vld [vmem:[%s216 + $0x100] sm:$0xff]
        %v331 = vld [vmem:[%s216 + $0x108] sm:$0xff]
        %v332 = vld [vmem:[%s216 + $0x110] sm:$0xff]
        %v333 = vld [vmem:[%s216 + $0x118] sm:$0xff]
        %v334 = vld [vmem:[%s216 + $0x120] sm:$0xff]
        %v335 = vld [vmem:[%s216 + $0x128] sm:$0xff]
        %v336 = vld [vmem:[%s216 + $0x130] sm:$0xff]
        %v337 = vld [vmem:[%s216 + $0x138] sm:$0xff]
        %v338 = vld [vmem:[%s216 + $0x140] sm:$0xff]
        %v339 = vld [vmem:[%s216 + $0x148] sm:$0xff]
        %v340 = vld [vmem:[%s216 + $0x150] sm:$0xff]
        %v341 = vld [vmem:[%s216 + $0x158] sm:$0xff]
        %v342 = vld [vmem:[%s216 + $0x160] sm:$0xff]
        %v343 = vld [vmem:[%s216 + $0x168] sm:$0xff]
        %v344 = vld [vmem:[%s216 + $0x170] sm:$0xff]
        %v345 = vld [vmem:[%s216 + $0x178] sm:$0xff]
        %v346 = vld [vmem:[%s216 + $0x180] sm:$0xff]
        %v347 = vld [vmem:[%s216 + $0x188] sm:$0xff]
        %v348 = vld [vmem:[%s216 + $0x190] sm:$0xff]
        %v349 = vld [vmem:[%s216 + $0x198] sm:$0xff]
        %v350 = vld [vmem:[%s216 + $0x1a0] sm:$0xff]
        %v351 = vld [vmem:[%s216 + $0x1a8] sm:$0xff]
        %v352 = vld [vmem:[%s216 + $0x1b0] sm:$0xff]
        %v353 = vld [vmem:[%s216 + $0x1b8] sm:$0xff]
        %v354 = vld [vmem:[%s216 + $0x1c0] sm:$0xff]
        %v355 = vld [vmem:[%s216 + $0x1c8] sm:$0xff]
        %v356 = vld [vmem:[%s216 + $0x1d0] sm:$0xff]
        %v357 = vld [vmem:[%s216 + $0x1d8] sm:$0xff]
        %v358 = vld [vmem:[%s216 + $0x1e0] sm:$0xff]
        %v359 = vld [vmem:[%s216 + $0x1e8] sm:$0xff]
        %v360 = vld [vmem:[%s216 + $0x1f0] sm:$0xff]
        %v361 = vld [vmem:[%s216 + $0x1f8] sm:$0xff]
        %v362 = vld [vmem:[%s216 + $0x200] sm:$0xff]
        %v363 = vld [vmem:[%s216 + $0x208] sm:$0xff]
        %v364 = vld [vmem:[%s216 + $0x210] sm:$0xff]
        %v365 = vld [vmem:[%s216 + $0x218] sm:$0xff]
        %v366 = vld [vmem:[%s216 + $0x220] sm:$0xff]
        %v367 = vld [vmem:[%s216 + $0x228] sm:$0xff]
        %v368 = vld [vmem:[%s216 + $0x230] sm:$0xff]
        %v369 = vld [vmem:[%s216 + $0x238] sm:$0xff]
        %v370 = vld [vmem:[%s216 + $0x240] sm:$0xff]
        %v371 = vld [vmem:[%s216 + $0x248] sm:$0xff]
        %v372 = vld [vmem:[%s216 + $0x250] sm:$0xff]
        %v373 = vld [vmem:[%s216 + $0x258] sm:$0xff]
        %v374 = vld [vmem:[%s216 + $0x260] sm:$0xff]
        %v375 = vld [vmem:[%s216 + $0x268] sm:$0xff]
        %v376 = vld [vmem:[%s216 + $0x270] sm:$0xff]
        %v377 = vld [vmem:[%s216 + $0x278] sm:$0xff]
        %v378 = vld [vmem:[%s216 + $0x280] sm:$0xff]
        %v379 = vld [vmem:[%s216 + $0x288] sm:$0xff]
        %v380 = vld [vmem:[%s216 + $0x290] sm:$0xff]
        %v381 = vld [vmem:[%s216 + $0x298] sm:$0xff]
        %v382 = vld [vmem:[%s216 + $0x2a0] sm:$0xff]
        %v383 = vld [vmem:[%s216 + $0x2a8] sm:$0xff]
        %v384 = vld [vmem:[%s216 + $0x2b0] sm:$0xff]
        %v385 = vld [vmem:[%s216 + $0x2b8] sm:$0xff]
        %v386 = vld [vmem:[%s216 + $0x2c0] sm:$0xff]
        %v387 = vld [vmem:[%s216 + $0x2c8] sm:$0xff]
        %v388 = vld [vmem:[%s216 + $0x2d0] sm:$0xff]
        %v389 = vld [vmem:[%s216 + $0x2d8] sm:$0xff]
        %v390 = vld [vmem:[%s216 + $0x2e0] sm:$0xff]
        %v391 = vld [vmem:[%s216 + $0x2e8] sm:$0xff]
        %v392 = vld [vmem:[%s216 + $0x2f0] sm:$0xff]
        %v393 = vld [vmem:[%s216 + $0x2f8] sm:$0xff]
        %v394 = vld [vmem:[%s216 + $0x300] sm:$0xff]
        %v395 = vld [vmem:[%s216 + $0x308] sm:$0xff]
        %v396 = vld [vmem:[%s216 + $0x310] sm:$0xff]
        %v397 = vld [vmem:[%s216 + $0x318] sm:$0xff]
        %v398 = vld [vmem:[%s216 + $0x320] sm:$0xff]
        %v399 = vld [vmem:[%s216 + $0x328] sm:$0xff]
        %v400 = vld [vmem:[%s216 + $0x330] sm:$0xff]
        %v401 = vld [vmem:[%s216 + $0x338] sm:$0xff]
        %v402 = vld [vmem:[%s216 + $0x340] sm:$0xff]
        %v403 = vld [vmem:[%s216 + $0x348] sm:$0xff]
        %v404 = vld [vmem:[%s216 + $0x350] sm:$0xff]
        %v405 = vld [vmem:[%s216 + $0x358] sm:$0xff]
        %v406 = vld [vmem:[%s216 + $0x360] sm:$0xff]
        %v407 = vld [vmem:[%s216 + $0x368] sm:$0xff]
        %v408 = vld [vmem:[%s216 + $0x370] sm:$0xff]
        %v409 = vld [vmem:[%s216 + $0x378] sm:$0xff]
        %v410 = vld [vmem:[%s216 + $0x380] sm:$0xff]
        %v411 = vld [vmem:[%s216 + $0x388] sm:$0xff]
        %v412 = vld [vmem:[%s216 + $0x390] sm:$0xff]
        %v413 = vld [vmem:[%s216 + $0x398] sm:$0xff]
        %v414 = vld [vmem:[%s216 + $0x3a0] sm:$0xff]
        %v415 = vld [vmem:[%s216 + $0x3a8] sm:$0xff]
        %v416 = vld [vmem:[%s216 + $0x3b0] sm:$0xff]
        %v417 = vld [vmem:[%s216 + $0x3b8] sm:$0xff]
        %v418 = vld [vmem:[%s216 + $0x3c0] sm:$0xff]
        %v419 = vld [vmem:[%s216 + $0x3c8] sm:$0xff]
        %v420 = vld [vmem:[%s216 + $0x3d0] sm:$0xff]
        %v421 = vld [vmem:[%s216 + $0x3d8] sm:$0xff]
        %v422 = vld [vmem:[%s216 + $0x3e0] sm:$0xff]
        %v423 = vld [vmem:[%s216 + $0x3e8] sm:$0xff]
        %v424 = vld [vmem:[%s216 + $0x3f0] sm:$0xff]
        %v425 = vld [vmem:[%s216 + $0x3f8] sm:$0xff]
        %v426 = vld [vmem:[%s216 + $0x400] sm:$0xff]
        %v427 = vld [vmem:[%s216 + $0x408] sm:$0xff]
        %v428 = vld [vmem:[%s216 + $0x410] sm:$0xff]
        %v429 = vld [vmem:[%s216 + $0x418] sm:$0xff]
        %v430 = vld [vmem:[%s216 + $0x420] sm:$0xff]
        %v431 = vld [vmem:[%s216 + $0x428] sm:$0xff]
        %v432 = vld [vmem:[%s216 + $0x430] sm:$0xff]
        %v433 = vld [vmem:[%s216 + $0x438] sm:$0xff]
        %v434 = vld [vmem:[%s216 + $0x440] sm:$0xff]
        %v435 = vld [vmem:[%s216 + $0x448] sm:$0xff]
        %v436 = vld [vmem:[%s216 + $0x450] sm:$0xff]
        %v437 = vld [vmem:[%s216 + $0x458] sm:$0xff]
        %v438 = vld [vmem:[%s216 + $0x460] sm:$0xff]
        %v439 = vld [vmem:[%s216 + $0x468] sm:$0xff]
        %v440 = vld [vmem:[%s216 + $0x470] sm:$0xff]
        %v441 = vld [vmem:[%s216 + $0x478] sm:$0xff]
        %v442 = vld [vmem:[%s216 + $0x480] sm:$0xff]
        %v443 = vld [vmem:[%s216 + $0x488] sm:$0xff]
        %v444 = vld [vmem:[%s216 + $0x490] sm:$0xff]
        %v445 = vld [vmem:[%s216 + $0x498] sm:$0xff]
        %v446 = vld [vmem:[%s216 + $0x4a0] sm:$0xff]
        %v447 = vld [vmem:[%s216 + $0x4a8] sm:$0xff]
        %v448 = vld [vmem:[%s216 + $0x4b0] sm:$0xff]
        %v449 = vld [vmem:[%s216 + $0x4b8] sm:$0xff]
        %v450 = vld [vmem:[%s216 + $0x4c0] sm:$0xff]
        %v451 = vld [vmem:[%s216 + $0x4c8] sm:$0xff]
        %v452 = vld [vmem:[%s216 + $0x4d0] sm:$0xff]
        %v453 = vld [vmem:[%s216 + $0x4d8] sm:$0xff]
        %v454 = vld [vmem:[%s216 + $0x4e0] sm:$0xff]
        %v455 = vld [vmem:[%s216 + $0x4e8] sm:$0xff]
        %v456 = vld [vmem:[%s216 + $0x4f0] sm:$0xff]
        %v457 = vld [vmem:[%s216 + $0x4f8] sm:$0xff]
        %v458 = vld [vmem:[%s216 + $0x500] sm:$0xff]
        %v459 = vld [vmem:[%s216 + $0x508] sm:$0xff]
        %v460 = vld [vmem:[%s216 + $0x510] sm:$0xff]
        %v461 = vld [vmem:[%s216 + $0x518] sm:$0xff]
        %v462 = vld [vmem:[%s216 + $0x520] sm:$0xff]
        %v463 = vld [vmem:[%s216 + $0x528] sm:$0xff]
        %v464 = vld [vmem:[%s216 + $0x530] sm:$0xff]
        %v465 = vld [vmem:[%s216 + $0x538] sm:$0xff]
        %v466 = vld [vmem:[%s216 + $0x540] sm:$0xff]
        %v467 = vld [vmem:[%s216 + $0x548] sm:$0xff]
        %v468 = vld [vmem:[%s216 + $0x550] sm:$0xff]
        %v469 = vld [vmem:[%s216 + $0x558] sm:$0xff]
        %v470 = vld [vmem:[%s216 + $0x560] sm:$0xff]
        %v471 = vld [vmem:[%s216 + $0x568] sm:$0xff]
        %v472 = vld [vmem:[%s216 + $0x570] sm:$0xff]
        %v473 = vld [vmem:[%s216 + $0x578] sm:$0xff]
        %v474 = vld [vmem:[%s216 + $0x580] sm:$0xff]
        %v475 = vld [vmem:[%s216 + $0x588] sm:$0xff]
        %v476 = vld [vmem:[%s216 + $0x590] sm:$0xff]
        %v477 = vld [vmem:[%s216 + $0x598] sm:$0xff]
        %v478 = vld [vmem:[%s216 + $0x5a0] sm:$0xff]
        %v479 = vld [vmem:[%s216 + $0x5a8] sm:$0xff]
        %v480 = vld [vmem:[%s216 + $0x5b0] sm:$0xff]
        %v481 = vld [vmem:[%s216 + $0x5b8] sm:$0xff]
        %v482 = vld [vmem:[%s216 + $0x5c0] sm:$0xff]
        %v483 = vld [vmem:[%s216 + $0x5c8] sm:$0xff]
        %v484 = vld [vmem:[%s216 + $0x5d0] sm:$0xff]
        %v485 = vld [vmem:[%s216 + $0x5d8] sm:$0xff]
        %v486 = vld [vmem:[%s216 + $0x5e0] sm:$0xff]
        %v487 = vld [vmem:[%s216 + $0x5e8] sm:$0xff]
        %v488 = vld [vmem:[%s216 + $0x5f0] sm:$0xff]
        %v489 = vld [vmem:[%s216 + $0x5f8] sm:$0xff]
        %v490 = vld [vmem:[%s216 + $0x600] sm:$0xff]
        %v491 = vld [vmem:[%s216 + $0x608] sm:$0xff]
        %v492 = vld [vmem:[%s216 + $0x610] sm:$0xff]
        %v493 = vld [vmem:[%s216 + $0x618] sm:$0xff]
        %v494 = vld [vmem:[%s216 + $0x620] sm:$0xff]
        %v495 = vld [vmem:[%s216 + $0x628] sm:$0xff]
        %v496 = vld [vmem:[%s216 + $0x630] sm:$0xff]
        %v497 = vld [vmem:[%s216 + $0x638] sm:$0xff]
        %v498 = vld [vmem:[%s216 + $0x640] sm:$0xff]
        %v499 = vld [vmem:[%s216 + $0x648] sm:$0xff]
        %v500 = vld [vmem:[%s216 + $0x650] sm:$0xff]
        %v501 = vld [vmem:[%s216 + $0x658] sm:$0xff]
        %v502 = vld [vmem:[%s216 + $0x660] sm:$0xff]
        %v503 = vld [vmem:[%s216 + $0x668] sm:$0xff]
        %v504 = vld [vmem:[%s216 + $0x670] sm:$0xff]
        %v505 = vld [vmem:[%s216 + $0x678] sm:$0xff]
        %v506 = vld [vmem:[%s216 + $0x680] sm:$0xff]
        %v507 = vld [vmem:[%s216 + $0x688] sm:$0xff]
        %v508 = vld [vmem:[%s216 + $0x690] sm:$0xff]
        %v509 = vld [vmem:[%s216 + $0x698] sm:$0xff]
        %v510 = vld [vmem:[%s216 + $0x6a0] sm:$0xff]
        %v511 = vld [vmem:[%s216 + $0x6a8] sm:$0xff]
        %v512 = vld [vmem:[%s216 + $0x6b0] sm:$0xff]
        %v513 = vld [vmem:[%s216 + $0x6b8] sm:$0xff]
        %v514 = vld [vmem:[%s216 + $0x6c0] sm:$0xff]
        %v515 = vld [vmem:[%s216 + $0x6c8] sm:$0xff]
        %v516 = vld [vmem:[%s216 + $0x6d0] sm:$0xff]
        %v517 = vld [vmem:[%s216 + $0x6d8] sm:$0xff]
        %v518 = vld [vmem:[%s216 + $0x6e0] sm:$0xff]
        %v519 = vld [vmem:[%s216 + $0x6e8] sm:$0xff]
        %v520 = vld [vmem:[%s216 + $0x6f0] sm:$0xff]
        %v521 = vld [vmem:[%s216 + $0x6f8] sm:$0xff]
        %v522 = vld [vmem:[%s216 + $0x700] sm:$0xff]
        %v523 = vld [vmem:[%s216 + $0x708] sm:$0xff]
        %v524 = vld [vmem:[%s216 + $0x710] sm:$0xff]
        %v525 = vld [vmem:[%s216 + $0x718] sm:$0xff]
        %v526 = vld [vmem:[%s216 + $0x720] sm:$0xff]
        %v527 = vld [vmem:[%s216 + $0x728] sm:$0xff]
        %v528 = vld [vmem:[%s216 + $0x730] sm:$0xff]
        %v529 = vld [vmem:[%s216 + $0x738] sm:$0xff]
        %v530 = vld [vmem:[%s216 + $0x740] sm:$0xff]
        %v531 = vld [vmem:[%s216 + $0x748] sm:$0xff]
        %v532 = vld [vmem:[%s216 + $0x750] sm:$0xff]
        %v533 = vld [vmem:[%s216 + $0x758] sm:$0xff]
        %v534 = vld [vmem:[%s216 + $0x760] sm:$0xff]
        %v535 = vld [vmem:[%s216 + $0x768] sm:$0xff]
        %v536 = vld [vmem:[%s216 + $0x770] sm:$0xff]
        %v537 = vld [vmem:[%s216 + $0x778] sm:$0xff]
        %v538 = vld [vmem:[%s216 + $0x780] sm:$0xff]
        %v539 = vld [vmem:[%s216 + $0x788] sm:$0xff]
        %v540 = vld [vmem:[%s216 + $0x790] sm:$0xff]
        %v541 = vld [vmem:[%s216 + $0x798] sm:$0xff]
        %v542 = vld [vmem:[%s216 + $0x7a0] sm:$0xff]
        %v543 = vld [vmem:[%s216 + $0x7a8] sm:$0xff]
        %v544 = vld [vmem:[%s216 + $0x7b0] sm:$0xff]
        %v545 = vld [vmem:[%s216 + $0x7b8] sm:$0xff]
        %v546 = vld [vmem:[%s216 + $0x7c0] sm:$0xff]
        %v547 = vld [vmem:[%s216 + $0x7c8] sm:$0xff]
        %v548 = vld [vmem:[%s216 + $0x7d0] sm:$0xff]
        %v549 = vld [vmem:[%s216 + $0x7d8] sm:$0xff]
        %v550 = vld [vmem:[%s216 + $0x7e0] sm:$0xff]
        %v551 = vld [vmem:[%s216 + $0x7e8] sm:$0xff]
        %v552 = vld [vmem:[%s216 + $0x7f0] sm:$0xff]
        %v553 = vld [vmem:[%s216 + $0x7f8] sm:$0xff]
        %v554 = vld [vmem:[%s216 + $0x800] sm:$0xff]
        %v555 = vld [vmem:[%s216 + $0x808] sm:$0xff]
        %v556 = vld [vmem:[%s216 + $0x810] sm:$0xff]
        %v557 = vld [vmem:[%s216 + $0x818] sm:$0xff]
        %v558 = vld [vmem:[%s216 + $0x820] sm:$0xff]
        %v559 = vld [vmem:[%s216 + $0x828] sm:$0xff]
        %v560 = vld [vmem:[%s216 + $0x830] sm:$0xff]
        %v561 = vld [vmem:[%s216 + $0x838] sm:$0xff]
        %v562 = vld [vmem:[%s216 + $0x840] sm:$0xff]
        %v563 = vld [vmem:[%s216 + $0x848] sm:$0xff]
        %v564 = vld [vmem:[%s216 + $0x850] sm:$0xff]
        %v565 = vld [vmem:[%s216 + $0x858] sm:$0xff]
        %v566 = vld [vmem:[%s216 + $0x860] sm:$0xff]
        %v567 = vld [vmem:[%s216 + $0x868] sm:$0xff]
        %v568 = vld [vmem:[%s216 + $0x870] sm:$0xff]
        %v569 = vld [vmem:[%s216 + $0x878] sm:$0xff]
        %v570 = vld [vmem:[%s216 + $0x880] sm:$0xff]
        %v571 = vld [vmem:[%s216 + $0x888] sm:$0xff]
        %v572 = vld [vmem:[%s216 + $0x890] sm:$0xff]
        %v573 = vld [vmem:[%s216 + $0x898] sm:$0xff]
        %v574 = vld [vmem:[%s216 + $0x8a0] sm:$0xff]
        %v575 = vld [vmem:[%s216 + $0x8a8] sm:$0xff]
        %v576 = vld [vmem:[%s216 + $0x8b0] sm:$0xff]
        %v577 = vld [vmem:[%s216 + $0x8b8] sm:$0xff]
        %v578 = vld [vmem:[%s216 + $0x8c0] sm:$0xff]
        %v579 = vld [vmem:[%s216 + $0x8c8] sm:$0xff]
        %v580 = vld [vmem:[%s216 + $0x8d0] sm:$0xff]
        %v581 = vld [vmem:[%s216 + $0x8d8] sm:$0xff]
        %v582 = vld [vmem:[%s216 + $0x8e0] sm:$0xff]
        %v583 = vld [vmem:[%s216 + $0x8e8] sm:$0xff]
        %v584 = vld [vmem:[%s216 + $0x8f0] sm:$0xff]
        %v585 = vld [vmem:[%s216 + $0x8f8] sm:$0xff]
        %v586 = vld [vmem:[%s216 + $0x900] sm:$0xff]
        %v587 = vld [vmem:[%s216 + $0x908] sm:$0xff]
        %v588 = vld [vmem:[%s216 + $0x910] sm:$0xff]
        %v589 = vld [vmem:[%s216 + $0x918] sm:$0xff]
        %v590 = vld [vmem:[%s216 + $0x920] sm:$0xff]
        %v591 = vld [vmem:[%s216 + $0x928] sm:$0xff]
        %v592 = vld [vmem:[%s216 + $0x930] sm:$0xff]
        %v593 = vld [vmem:[%s216 + $0x938] sm:$0xff]
        %v594 = vld [vmem:[%s216 + $0x940] sm:$0xff]
        %v595 = vld [vmem:[%s216 + $0x948] sm:$0xff]
        %v596 = vld [vmem:[%s216 + $0x950] sm:$0xff]
        %v597 = vld [vmem:[%s216 + $0x958] sm:$0xff]
        %v598 = vld [vmem:[%s216 + $0x960] sm:$0xff]
        %v599 = vld [vmem:[%s216 + $0x968] sm:$0xff]
        %v600 = vld [vmem:[%s216 + $0x970] sm:$0xff]
        %v601 = vld [vmem:[%s216 + $0x978] sm:$0xff]
        %v602 = vld [vmem:[%s216 + $0x980] sm:$0xff]
        %v603 = vld [vmem:[%s216 + $0x988] sm:$0xff]
        %v604 = vld [vmem:[%s216 + $0x990] sm:$0xff]
        %v605 = vld [vmem:[%s216 + $0x998] sm:$0xff]
        %v606 = vld [vmem:[%s216 + $0x9a0] sm:$0xff]
        %v607 = vld [vmem:[%s216 + $0x9a8] sm:$0xff]
        %v608 = vld [vmem:[%s216 + $0x9b0] sm:$0xff]
        %v609 = vld [vmem:[%s216 + $0x9b8] sm:$0xff]
        %v610 = vld [vmem:[%s216 + $0x9c0] sm:$0xff]
        %v611 = vld [vmem:[%s216 + $0x9c8] sm:$0xff]
        %v612 = vld [vmem:[%s216 + $0x9d0] sm:$0xff]
        %v613 = vld [vmem:[%s216 + $0x9d8] sm:$0xff]
        %v614 = vld [vmem:[%s216 + $0x9e0] sm:$0xff]
        %v615 = vld [vmem:[%s216 + $0x9e8] sm:$0xff]
        %v616 = vld [vmem:[%s216 + $0x9f0] sm:$0xff]
        %v617 = vld [vmem:[%s216 + $0x9f8] sm:$0xff]
        %v618 = vld [vmem:[%s216 + $0xa00] sm:$0xff]
        %v619 = vld [vmem:[%s216 + $0xa08] sm:$0xff]
        %v620 = vld [vmem:[%s216 + $0xa10] sm:$0xff]
        %v621 = vld [vmem:[%s216 + $0xa18] sm:$0xff]
        %v622 = vld [vmem:[%s216 + $0xa20] sm:$0xff]
        %v623 = vld [vmem:[%s216 + $0xa28] sm:$0xff]
        %v624 = vld [vmem:[%s216 + $0xa30] sm:$0xff]
        %v625 = vld [vmem:[%s216 + $0xa38] sm:$0xff]
        %v626 = vld [vmem:[%s216 + $0xa40] sm:$0xff]
        %v627 = vld [vmem:[%s216 + $0xa48] sm:$0xff]
        %v628 = vld [vmem:[%s216 + $0xa50] sm:$0xff]
        %v629 = vld [vmem:[%s216 + $0xa58] sm:$0xff]
        %v630 = vld [vmem:[%s216 + $0xa60] sm:$0xff]
        %v631 = vld [vmem:[%s216 + $0xa68] sm:$0xff]
        %v632 = vld [vmem:[%s216 + $0xa70] sm:$0xff]
        %v633 = vld [vmem:[%s216 + $0xa78] sm:$0xff]
        %v634 = vld [vmem:[%s216 + $0xa80] sm:$0xff]
        %v635 = vld [vmem:[%s216 + $0xa88] sm:$0xff]
        %v636 = vld [vmem:[%s216 + $0xa90] sm:$0xff]
        %v637 = vld [vmem:[%s216 + $0xa98] sm:$0xff]
        %v638 = vld [vmem:[%s216 + $0xaa0] sm:$0xff]
        %v639 = vld [vmem:[%s216 + $0xaa8] sm:$0xff]
        %v640 = vld [vmem:[%s216 + $0xab0] sm:$0xff]
        %v641 = vld [vmem:[%s216 + $0xab8] sm:$0xff]
        %v642 = vld [vmem:[%s216 + $0xac0] sm:$0xff]
        %v643 = vld [vmem:[%s216 + $0xac8] sm:$0xff]
        %v644 = vld [vmem:[%s216 + $0xad0] sm:$0xff]
        %v645 = vld [vmem:[%s216 + $0xad8] sm:$0xff]
        %v646 = vld [vmem:[%s216 + $0xae0] sm:$0xff]
        %v647 = vld [vmem:[%s216 + $0xae8] sm:$0xff]
        %v648 = vld [vmem:[%s216 + $0xaf0] sm:$0xff]
        %v649 = vld [vmem:[%s216 + $0xaf8] sm:$0xff]
        %v650 = vld [vmem:[%s216 + $0xb00] sm:$0xff]
        %v651 = vld [vmem:[%s216 + $0xb08] sm:$0xff]
        %v652 = vld [vmem:[%s216 + $0xb10] sm:$0xff]
        %v653 = vld [vmem:[%s216 + $0xb18] sm:$0xff]
        %v654 = vld [vmem:[%s216 + $0xb20] sm:$0xff]
        %v655 = vld [vmem:[%s216 + $0xb28] sm:$0xff]
        %v656 = vld [vmem:[%s216 + $0xb30] sm:$0xff]
        %v657 = vld [vmem:[%s216 + $0xb38] sm:$0xff]
        %v658 = vld [vmem:[%s216 + $0xb40] sm:$0xff]
        %v659 = vld [vmem:[%s216 + $0xb48] sm:$0xff]
        %v660 = vld [vmem:[%s216 + $0xb50] sm:$0xff]
        %v661 = vld [vmem:[%s216 + $0xb58] sm:$0xff]
        %v662 = vld [vmem:[%s216 + $0xb60] sm:$0xff]
        %v663 = vld [vmem:[%s216 + $0xb68] sm:$0xff]
        %v664 = vld [vmem:[%s216 + $0xb70] sm:$0xff]
        %v665 = vld [vmem:[%s216 + $0xb78] sm:$0xff]
        %v666 = vld [vmem:[%s216 + $0xb80] sm:$0xff]
        %v667 = vld [vmem:[%s216 + $0xb88] sm:$0xff]
        %v668 = vld [vmem:[%s216 + $0xb90] sm:$0xff]
        %v669 = vld [vmem:[%s216 + $0xb98] sm:$0xff]
        %v670 = vld [vmem:[%s216 + $0xba0] sm:$0xff]
        %v671 = vld [vmem:[%s216 + $0xba8] sm:$0xff]
        %v672 = vld [vmem:[%s216 + $0xbb0] sm:$0xff]
        %v673 = vld [vmem:[%s216 + $0xbb8] sm:$0xff]
        %v674 = vld [vmem:[%s216 + $0xbc0] sm:$0xff]
        %v675 = vld [vmem:[%s216 + $0xbc8] sm:$0xff]
        %v676 = vld [vmem:[%s216 + $0xbd0] sm:$0xff]
        %v677 = vld [vmem:[%s216 + $0xbd8] sm:$0xff]
        %v678 = vld [vmem:[%s216 + $0xbe0] sm:$0xff]
        %v679 = vld [vmem:[%s216 + $0xbe8] sm:$0xff]
        %v680 = vld [vmem:[%s216 + $0xbf0] sm:$0xff]
        %v681 = vld [vmem:[%s216 + $0xbf8] sm:$0xff]
        %v722 = vunpack.c.l.b16 %v258
        %v723 = vunpack.c.h.b16 %v258
        %v724 = vunpack.c.l.b16 %v259
        %v725 = vunpack.c.h.b16 %v259
        %v726 = vunpack.c.l.b16 %v260
        %v727 = vunpack.c.h.b16 %v260
        %v728 = vunpack.c.l.b16 %v261
        %v729 = vunpack.c.h.b16 %v261
        %v730 = vunpack.c.l.b16 %v262
        %v731 = vunpack.c.h.b16 %v262
        %v732 = vunpack.c.l.b16 %v263
        %v733 = vunpack.c.h.b16 %v263
        %v734 = vunpack.c.l.b16 %v264
        %v735 = vunpack.c.h.b16 %v264
        %v736 = vunpack.c.l.b16 %v265
        %v737 = vunpack.c.h.b16 %v265
        %v738 = vunpack.c.l.b16 %v266
        %v739 = vunpack.c.h.b16 %v266
        %v740 = vunpack.c.l.b16 %v267
        %v741 = vunpack.c.h.b16 %v267
        %v742 = vunpack.c.l.b16 %v268
        %v743 = vunpack.c.h.b16 %v268
        %v744 = vunpack.c.l.b16 %v269
        %v745 = vunpack.c.h.b16 %v269
        %v746 = vunpack.c.l.b16 %v270
        %v747 = vunpack.c.h.b16 %v270
        %v748 = vunpack.c.l.b16 %v271
        %v749 = vunpack.c.h.b16 %v271
        %v750 = vunpack.c.l.b16 %v272
        %v751 = vunpack.c.h.b16 %v272
        %v752 = vunpack.c.l.b16 %v273
        %v753 = vunpack.c.h.b16 %v273
        %v754 = vunpack.c.l.b16 %v274
        %v755 = vunpack.c.h.b16 %v274
        %v756 = vunpack.c.l.b16 %v275
        %v757 = vunpack.c.h.b16 %v275
        %v758 = vunpack.c.l.b16 %v276
        %v759 = vunpack.c.h.b16 %v276
        %v760 = vunpack.c.l.b16 %v277
        %v761 = vunpack.c.h.b16 %v277
        %v762 = vunpack.c.l.b16 %v278
        %v763 = vunpack.c.h.b16 %v278
        %v764 = vunpack.c.l.b16 %v279
        %v765 = vunpack.c.h.b16 %v279
        %v766 = vunpack.c.l.b16 %v280
        %v767 = vunpack.c.h.b16 %v280
        %v768 = vunpack.c.l.b16 %v281
        %v769 = vunpack.c.h.b16 %v281
        %v770 = vunpack.c.l.b16 %v282
        %v771 = vunpack.c.h.b16 %v282
        %v772 = vunpack.c.l.b16 %v283
        %v773 = vunpack.c.h.b16 %v283
        %v774 = vunpack.c.l.b16 %v284
        %v775 = vunpack.c.h.b16 %v284
        %v776 = vunpack.c.l.b16 %v285
        %v777 = vunpack.c.h.b16 %v285
        %v778 = vunpack.c.l.b16 %v286
        %v779 = vunpack.c.h.b16 %v286
        %v780 = vunpack.c.l.b16 %v287
        %v781 = vunpack.c.h.b16 %v287
        %v782 = vunpack.c.l.b16 %v288
        %v783 = vunpack.c.h.b16 %v288
        %v784 = vunpack.c.l.b16 %v289
        %v785 = vunpack.c.h.b16 %v289
        %v786 = vunpack.c.l.b16 %v290
        %v787 = vunpack.c.h.b16 %v290
        %v788 = vunpack.c.l.b16 %v291
        %v789 = vunpack.c.h.b16 %v291
        %v790 = vunpack.c.l.b16 %v292
        %v791 = vunpack.c.h.b16 %v292
        %v792 = vunpack.c.l.b16 %v293
        %v793 = vunpack.c.h.b16 %v293
        %v794 = vunpack.c.l.b16 %v294
        %v795 = vunpack.c.h.b16 %v294
        %v796 = vunpack.c.l.b16 %v295
        %v797 = vunpack.c.h.b16 %v295
        %v798 = vunpack.c.l.b16 %v296
        %v799 = vunpack.c.h.b16 %v296
        %v800 = vunpack.c.l.b16 %v297
        %v801 = vunpack.c.h.b16 %v297
        %v802 = vpack.c.b16 %v730, %v722
        %v803 = vpack.c.b16 %v731, %v723
        %v804 = vpack.c.b16 %v732, %v724
        %v805 = vpack.c.b16 %v733, %v725
        %v806 = vpack.c.b16 %v734, %v726
        %v807 = vpack.c.b16 %v735, %v727
        %v808 = vpack.c.b16 %v736, %v728
        %v809 = vpack.c.b16 %v737, %v729
        %v810 = vpack.c.b16 %v746, %v738
        %v811 = vpack.c.b16 %v747, %v739
        %v812 = vpack.c.b16 %v748, %v740
        %v813 = vpack.c.b16 %v749, %v741
        %v814 = vpack.c.b16 %v750, %v742
        %v815 = vpack.c.b16 %v751, %v743
        %v816 = vpack.c.b16 %v752, %v744
        %v817 = vpack.c.b16 %v753, %v745
        %v818 = vpack.c.b16 %v762, %v754
        %v819 = vpack.c.b16 %v763, %v755
        %v820 = vpack.c.b16 %v764, %v756
        %v821 = vpack.c.b16 %v765, %v757
        %v822 = vpack.c.b16 %v766, %v758
        %v823 = vpack.c.b16 %v767, %v759
        %v824 = vpack.c.b16 %v768, %v760
        %v825 = vpack.c.b16 %v769, %v761
        %v826 = vpack.c.b16 %v778, %v770
        %v827 = vpack.c.b16 %v779, %v771
        %v828 = vpack.c.b16 %v780, %v772
        %v829 = vpack.c.b16 %v781, %v773
        %v830 = vpack.c.b16 %v782, %v774
        %v831 = vpack.c.b16 %v783, %v775
        %v832 = vpack.c.b16 %v784, %v776
        %v833 = vpack.c.b16 %v785, %v777
        %v834 = vpack.c.b16 %v794, %v786
        %v835 = vpack.c.b16 %v795, %v787
        %v836 = vpack.c.b16 %v796, %v788
        %v837 = vpack.c.b16 %v797, %v789
        %v838 = vpack.c.b16 %v798, %v790
        %v839 = vpack.c.b16 %v799, %v791
        %v840 = vpack.c.b16 %v800, %v792
        %v841 = vpack.c.b16 %v801, %v793
        %v1266 = vunpack.c.l.b16 %v298
        %v1267 = vunpack.c.h.b16 %v298
        %v1268 = vunpack.c.l.b16 %v299
        %v1269 = vunpack.c.h.b16 %v299
        %v1270 = vunpack.c.l.b16 %v300
        %v1271 = vunpack.c.h.b16 %v300
        %v1272 = vunpack.c.l.b16 %v301
        %v1273 = vunpack.c.h.b16 %v301
        %v1274 = vunpack.c.l.b16 %v302
        %v1275 = vunpack.c.h.b16 %v302
        %v1276 = vunpack.c.l.b16 %v303
        %v1277 = vunpack.c.h.b16 %v303
        %v1278 = vunpack.c.l.b16 %v304
        %v1279 = vunpack.c.h.b16 %v304
        %v1280 = vunpack.c.l.b16 %v305
        %v1281 = vunpack.c.h.b16 %v305
        %v1282 = vunpack.c.l.b16 %v306
        %v1283 = vunpack.c.h.b16 %v306
        %v1284 = vunpack.c.l.b16 %v307
        %v1285 = vunpack.c.h.b16 %v307
        %v1286 = vunpack.c.l.b16 %v308
        %v1287 = vunpack.c.h.b16 %v308
        %v1288 = vunpack.c.l.b16 %v309
        %v1289 = vunpack.c.h.b16 %v309
        %v1290 = vunpack.c.l.b16 %v310
        %v1291 = vunpack.c.h.b16 %v310
        %v1292 = vunpack.c.l.b16 %v311
        %v1293 = vunpack.c.h.b16 %v311
        %v1294 = vunpack.c.l.b16 %v312
        %v1295 = vunpack.c.h.b16 %v312
        %v1296 = vunpack.c.l.b16 %v313
        %v1297 = vunpack.c.h.b16 %v313
        %v1298 = vunpack.c.l.b16 %v314
        %v1299 = vunpack.c.h.b16 %v314
        %v1300 = vunpack.c.l.b16 %v315
        %v1301 = vunpack.c.h.b16 %v315
        %v1302 = vunpack.c.l.b16 %v316
        %v1303 = vunpack.c.h.b16 %v316
        %v1304 = vunpack.c.l.b16 %v317
        %v1305 = vunpack.c.h.b16 %v317
        %v1306 = vunpack.c.l.b16 %v318
        %v1307 = vunpack.c.h.b16 %v318
        %v1308 = vunpack.c.l.b16 %v319
        %v1309 = vunpack.c.h.b16 %v319
        %v1310 = vunpack.c.l.b16 %v320
        %v1311 = vunpack.c.h.b16 %v320
        %v1312 = vunpack.c.l.b16 %v321
        %v1313 = vunpack.c.h.b16 %v321
        %v1314 = vunpack.c.l.b16 %v322
        %v1315 = vunpack.c.h.b16 %v322
        %v1316 = vunpack.c.l.b16 %v323
        %v1317 = vunpack.c.h.b16 %v323
        %v1318 = vunpack.c.l.b16 %v324
        %v1319 = vunpack.c.h.b16 %v324
        %v1320 = vunpack.c.l.b16 %v325
        %v1321 = vunpack.c.h.b16 %v325
        %v1322 = vunpack.c.l.b16 %v326
        %v1323 = vunpack.c.h.b16 %v326
        %v1324 = vunpack.c.l.b16 %v327
        %v1325 = vunpack.c.h.b16 %v327
        %v1326 = vunpack.c.l.b16 %v328
        %v1327 = vunpack.c.h.b16 %v328
        %v1328 = vunpack.c.l.b16 %v329
        %v1329 = vunpack.c.h.b16 %v329
        %v1330 = vunpack.c.l.b16 %v330
        %v1331 = vunpack.c.h.b16 %v330
        %v1332 = vunpack.c.l.b16 %v331
        %v1333 = vunpack.c.h.b16 %v331
        %v1334 = vunpack.c.l.b16 %v332
        %v1335 = vunpack.c.h.b16 %v332
        %v1336 = vunpack.c.l.b16 %v333
        %v1337 = vunpack.c.h.b16 %v333
        %v1338 = vunpack.c.l.b16 %v334
        %v1339 = vunpack.c.h.b16 %v334
        %v1340 = vunpack.c.l.b16 %v335
        %v1341 = vunpack.c.h.b16 %v335
        %v1342 = vunpack.c.l.b16 %v336
        %v1343 = vunpack.c.h.b16 %v336
        %v1344 = vunpack.c.l.b16 %v337
        %v1345 = vunpack.c.h.b16 %v337
        %v1346 = vunpack.c.l.b16 %v338
        %v1347 = vunpack.c.h.b16 %v338
        %v1348 = vunpack.c.l.b16 %v339
        %v1349 = vunpack.c.h.b16 %v339
        %v1350 = vunpack.c.l.b16 %v340
        %v1351 = vunpack.c.h.b16 %v340
        %v1352 = vunpack.c.l.b16 %v341
        %v1353 = vunpack.c.h.b16 %v341
        %v1354 = vunpack.c.l.b16 %v342
        %v1355 = vunpack.c.h.b16 %v342
        %v1356 = vunpack.c.l.b16 %v343
        %v1357 = vunpack.c.h.b16 %v343
        %v1358 = vunpack.c.l.b16 %v344
        %v1359 = vunpack.c.h.b16 %v344
        %v1360 = vunpack.c.l.b16 %v345
        %v1361 = vunpack.c.h.b16 %v345
        %v1362 = vunpack.c.l.b16 %v346
        %v1363 = vunpack.c.h.b16 %v346
        %v1364 = vunpack.c.l.b16 %v347
        %v1365 = vunpack.c.h.b16 %v347
        %v1366 = vunpack.c.l.b16 %v348
        %v1367 = vunpack.c.h.b16 %v348
        %v1368 = vunpack.c.l.b16 %v349
        %v1369 = vunpack.c.h.b16 %v349
        %v1370 = vunpack.c.l.b16 %v350
        %v1371 = vunpack.c.h.b16 %v350
        %v1372 = vunpack.c.l.b16 %v351
        %v1373 = vunpack.c.h.b16 %v351
        %v1374 = vunpack.c.l.b16 %v352
        %v1375 = vunpack.c.h.b16 %v352
        %v1376 = vunpack.c.l.b16 %v353
        %v1377 = vunpack.c.h.b16 %v353
        %v1378 = vunpack.c.l.b16 %v354
        %v1379 = vunpack.c.h.b16 %v354
        %v1380 = vunpack.c.l.b16 %v355
        %v1381 = vunpack.c.h.b16 %v355
        %v1382 = vunpack.c.l.b16 %v356
        %v1383 = vunpack.c.h.b16 %v356
        %v1384 = vunpack.c.l.b16 %v357
        %v1385 = vunpack.c.h.b16 %v357
        %v1386 = vunpack.c.l.b16 %v358
        %v1387 = vunpack.c.h.b16 %v358
        %v1388 = vunpack.c.l.b16 %v359
        %v1389 = vunpack.c.h.b16 %v359
        %v1390 = vunpack.c.l.b16 %v360
        %v1391 = vunpack.c.h.b16 %v360
        %v1392 = vunpack.c.l.b16 %v361
        %v1393 = vunpack.c.h.b16 %v361
        %v1394 = vunpack.c.l.b16 %v362
        %v1395 = vunpack.c.h.b16 %v362
        %v1396 = vunpack.c.l.b16 %v363
        %v1397 = vunpack.c.h.b16 %v363
        %v1398 = vunpack.c.l.b16 %v364
        %v1399 = vunpack.c.h.b16 %v364
        %v1400 = vunpack.c.l.b16 %v365
        %v1401 = vunpack.c.h.b16 %v365
        %v1402 = vunpack.c.l.b16 %v366
        %v1403 = vunpack.c.h.b16 %v366
        %v1404 = vunpack.c.l.b16 %v367
        %v1405 = vunpack.c.h.b16 %v367
        %v1406 = vunpack.c.l.b16 %v368
        %v1407 = vunpack.c.h.b16 %v368
        %v1408 = vunpack.c.l.b16 %v369
        %v1409 = vunpack.c.h.b16 %v369
        %v1410 = vunpack.c.l.b16 %v370
        %v1411 = vunpack.c.h.b16 %v370
        %v1412 = vunpack.c.l.b16 %v371
        %v1413 = vunpack.c.h.b16 %v371
        %v1414 = vunpack.c.l.b16 %v372
        %v1415 = vunpack.c.h.b16 %v372
        %v1416 = vunpack.c.l.b16 %v373
        %v1417 = vunpack.c.h.b16 %v373
        %v1418 = vunpack.c.l.b16 %v374
        %v1419 = vunpack.c.h.b16 %v374
        %v1420 = vunpack.c.l.b16 %v375
        %v1421 = vunpack.c.h.b16 %v375
        %v1422 = vunpack.c.l.b16 %v376
        %v1423 = vunpack.c.h.b16 %v376
        %v1424 = vunpack.c.l.b16 %v377
        %v1425 = vunpack.c.h.b16 %v377
        %v1426 = vunpack.c.l.b16 %v378
        %v1427 = vunpack.c.h.b16 %v378
        %v1428 = vunpack.c.l.b16 %v379
        %v1429 = vunpack.c.h.b16 %v379
        %v1430 = vunpack.c.l.b16 %v380
        %v1431 = vunpack.c.h.b16 %v380
        %v1432 = vunpack.c.l.b16 %v381
        %v1433 = vunpack.c.h.b16 %v381
        %v1434 = vunpack.c.l.b16 %v382
        %v1435 = vunpack.c.h.b16 %v382
        %v1436 = vunpack.c.l.b16 %v383
        %v1437 = vunpack.c.h.b16 %v383
        %v1438 = vunpack.c.l.b16 %v384
        %v1439 = vunpack.c.h.b16 %v384
        %v1440 = vunpack.c.l.b16 %v385
        %v1441 = vunpack.c.h.b16 %v385
        %v1442 = vunpack.c.l.b16 %v386
        %v1443 = vunpack.c.h.b16 %v386
        %v1444 = vunpack.c.l.b16 %v387
        %v1445 = vunpack.c.h.b16 %v387
        %v1446 = vunpack.c.l.b16 %v388
        %v1447 = vunpack.c.h.b16 %v388
        %v1448 = vunpack.c.l.b16 %v389
        %v1449 = vunpack.c.h.b16 %v389
        %v1450 = vunpack.c.l.b16 %v390
        %v1451 = vunpack.c.h.b16 %v390
        %v1452 = vunpack.c.l.b16 %v391
        %v1453 = vunpack.c.h.b16 %v391
        %v1454 = vunpack.c.l.b16 %v392
        %v1455 = vunpack.c.h.b16 %v392
        %v1456 = vunpack.c.l.b16 %v393
        %v1457 = vunpack.c.h.b16 %v393
        %v1458 = vunpack.c.l.b16 %v394
        %v1459 = vunpack.c.h.b16 %v394
        %v1460 = vunpack.c.l.b16 %v395
        %v1461 = vunpack.c.h.b16 %v395
        %v1462 = vunpack.c.l.b16 %v396
        %v1463 = vunpack.c.h.b16 %v396
        %v1464 = vunpack.c.l.b16 %v397
        %v1465 = vunpack.c.h.b16 %v397
        %v1466 = vunpack.c.l.b16 %v398
        %v1467 = vunpack.c.h.b16 %v398
        %v1468 = vunpack.c.l.b16 %v399
        %v1469 = vunpack.c.h.b16 %v399
        %v1470 = vunpack.c.l.b16 %v400
        %v1471 = vunpack.c.h.b16 %v400
        %v1472 = vunpack.c.l.b16 %v401
        %v1473 = vunpack.c.h.b16 %v401
        %v1474 = vunpack.c.l.b16 %v402
        %v1475 = vunpack.c.h.b16 %v402
        %v1476 = vunpack.c.l.b16 %v403
        %v1477 = vunpack.c.h.b16 %v403
        %v1478 = vunpack.c.l.b16 %v404
        %v1479 = vunpack.c.h.b16 %v404
        %v1480 = vunpack.c.l.b16 %v405
        %v1481 = vunpack.c.h.b16 %v405
        %v1482 = vunpack.c.l.b16 %v406
        %v1483 = vunpack.c.h.b16 %v406
        %v1484 = vunpack.c.l.b16 %v407
        %v1485 = vunpack.c.h.b16 %v407
        %v1486 = vunpack.c.l.b16 %v408
        %v1487 = vunpack.c.h.b16 %v408
        %v1488 = vunpack.c.l.b16 %v409
        %v1489 = vunpack.c.h.b16 %v409
        %v1490 = vunpack.c.l.b16 %v410
        %v1491 = vunpack.c.h.b16 %v410
        %v1492 = vunpack.c.l.b16 %v411
        %v1493 = vunpack.c.h.b16 %v411
        %v1494 = vunpack.c.l.b16 %v412
        %v1495 = vunpack.c.h.b16 %v412
        %v1496 = vunpack.c.l.b16 %v413
        %v1497 = vunpack.c.h.b16 %v413
        %v1498 = vunpack.c.l.b16 %v414
        %v1499 = vunpack.c.h.b16 %v414
        %v1500 = vunpack.c.l.b16 %v415
        %v1501 = vunpack.c.h.b16 %v415
        %v1502 = vunpack.c.l.b16 %v416
        %v1503 = vunpack.c.h.b16 %v416
        %v1504 = vunpack.c.l.b16 %v417
        %v1505 = vunpack.c.h.b16 %v417
        %v1506 = vunpack.c.l.b16 %v418
        %v1507 = vunpack.c.h.b16 %v418
        %v1508 = vunpack.c.l.b16 %v419
        %v1509 = vunpack.c.h.b16 %v419
        %v1510 = vunpack.c.l.b16 %v420
        %v1511 = vunpack.c.h.b16 %v420
        %v1512 = vunpack.c.l.b16 %v421
        %v1513 = vunpack.c.h.b16 %v421
        %v1514 = vunpack.c.l.b16 %v422
        %v1515 = vunpack.c.h.b16 %v422
        %v1516 = vunpack.c.l.b16 %v423
        %v1517 = vunpack.c.h.b16 %v423
        %v1518 = vunpack.c.l.b16 %v424
        %v1519 = vunpack.c.h.b16 %v424
        %v1520 = vunpack.c.l.b16 %v425
        %v1521 = vunpack.c.h.b16 %v425
        %v1522 = vunpack.c.l.b16 %v426
        %v1523 = vunpack.c.h.b16 %v426
        %v1524 = vunpack.c.l.b16 %v427
        %v1525 = vunpack.c.h.b16 %v427
        %v1526 = vunpack.c.l.b16 %v428
        %v1527 = vunpack.c.h.b16 %v428
        %v1528 = vunpack.c.l.b16 %v429
        %v1529 = vunpack.c.h.b16 %v429
        %v1530 = vunpack.c.l.b16 %v430
        %v1531 = vunpack.c.h.b16 %v430
        %v1532 = vunpack.c.l.b16 %v431
        %v1533 = vunpack.c.h.b16 %v431
        %v1534 = vunpack.c.l.b16 %v432
        %v1535 = vunpack.c.h.b16 %v432
        %v1536 = vunpack.c.l.b16 %v433
        %v1537 = vunpack.c.h.b16 %v433
        %v1538 = vunpack.c.l.b16 %v434
        %v1539 = vunpack.c.h.b16 %v434
        %v1540 = vunpack.c.l.b16 %v435
        %v1541 = vunpack.c.h.b16 %v435
        %v1542 = vunpack.c.l.b16 %v436
        %v1543 = vunpack.c.h.b16 %v436
        %v1544 = vunpack.c.l.b16 %v437
        %v1545 = vunpack.c.h.b16 %v437
        %v1546 = vunpack.c.l.b16 %v438
        %v1547 = vunpack.c.h.b16 %v438
        %v1548 = vunpack.c.l.b16 %v439
        %v1549 = vunpack.c.h.b16 %v439
        %v1550 = vunpack.c.l.b16 %v440
        %v1551 = vunpack.c.h.b16 %v440
        %v1552 = vunpack.c.l.b16 %v441
        %v1553 = vunpack.c.h.b16 %v441
        %v1554 = vunpack.c.l.b16 %v442
        %v1555 = vunpack.c.h.b16 %v442
        %v1556 = vunpack.c.l.b16 %v443
        %v1557 = vunpack.c.h.b16 %v443
        %v1558 = vunpack.c.l.b16 %v444
        %v1559 = vunpack.c.h.b16 %v444
        %v1560 = vunpack.c.l.b16 %v445
        %v1561 = vunpack.c.h.b16 %v445
        %v1562 = vunpack.c.l.b16 %v446
        %v1563 = vunpack.c.h.b16 %v446
        %v1564 = vunpack.c.l.b16 %v447
        %v1565 = vunpack.c.h.b16 %v447
        %v1566 = vunpack.c.l.b16 %v448
        %v1567 = vunpack.c.h.b16 %v448
        %v1568 = vunpack.c.l.b16 %v449
        %v1569 = vunpack.c.h.b16 %v449
        %v1570 = vunpack.c.l.b16 %v450
        %v1571 = vunpack.c.h.b16 %v450
        %v1572 = vunpack.c.l.b16 %v451
        %v1573 = vunpack.c.h.b16 %v451
        %v1574 = vunpack.c.l.b16 %v452
        %v1575 = vunpack.c.h.b16 %v452
        %v1576 = vunpack.c.l.b16 %v453
        %v1577 = vunpack.c.h.b16 %v453
        %v1578 = vunpack.c.l.b16 %v454
        %v1579 = vunpack.c.h.b16 %v454
        %v1580 = vunpack.c.l.b16 %v455
        %v1581 = vunpack.c.h.b16 %v455
        %v1582 = vunpack.c.l.b16 %v456
        %v1583 = vunpack.c.h.b16 %v456
        %v1584 = vunpack.c.l.b16 %v457
        %v1585 = vunpack.c.h.b16 %v457
        %v1586 = vunpack.c.l.b16 %v458
        %v1587 = vunpack.c.h.b16 %v458
        %v1588 = vunpack.c.l.b16 %v459
        %v1589 = vunpack.c.h.b16 %v459
        %v1590 = vunpack.c.l.b16 %v460
        %v1591 = vunpack.c.h.b16 %v460
        %v1592 = vunpack.c.l.b16 %v461
        %v1593 = vunpack.c.h.b16 %v461
        %v1594 = vunpack.c.l.b16 %v462
        %v1595 = vunpack.c.h.b16 %v462
        %v1596 = vunpack.c.l.b16 %v463
        %v1597 = vunpack.c.h.b16 %v463
        %v1598 = vunpack.c.l.b16 %v464
        %v1599 = vunpack.c.h.b16 %v464
        %v1600 = vunpack.c.l.b16 %v465
        %v1601 = vunpack.c.h.b16 %v465
        %v1602 = vunpack.c.l.b16 %v466
        %v1603 = vunpack.c.h.b16 %v466
        %v1604 = vunpack.c.l.b16 %v467
        %v1605 = vunpack.c.h.b16 %v467
        %v1606 = vunpack.c.l.b16 %v468
        %v1607 = vunpack.c.h.b16 %v468
        %v1608 = vunpack.c.l.b16 %v469
        %v1609 = vunpack.c.h.b16 %v469
        %v1610 = vunpack.c.l.b16 %v470
        %v1611 = vunpack.c.h.b16 %v470
        %v1612 = vunpack.c.l.b16 %v471
        %v1613 = vunpack.c.h.b16 %v471
        %v1614 = vunpack.c.l.b16 %v472
        %v1615 = vunpack.c.h.b16 %v472
        %v1616 = vunpack.c.l.b16 %v473
        %v1617 = vunpack.c.h.b16 %v473
        %v1618 = vunpack.c.l.b16 %v474
        %v1619 = vunpack.c.h.b16 %v474
        %v1620 = vunpack.c.l.b16 %v475
        %v1621 = vunpack.c.h.b16 %v475
        %v1622 = vunpack.c.l.b16 %v476
        %v1623 = vunpack.c.h.b16 %v476
        %v1624 = vunpack.c.l.b16 %v477
        %v1625 = vunpack.c.h.b16 %v477
        %v1626 = vunpack.c.l.b16 %v478
        %v1627 = vunpack.c.h.b16 %v478
        %v1628 = vunpack.c.l.b16 %v479
        %v1629 = vunpack.c.h.b16 %v479
        %v1630 = vunpack.c.l.b16 %v480
        %v1631 = vunpack.c.h.b16 %v480
        %v1632 = vunpack.c.l.b16 %v481
        %v1633 = vunpack.c.h.b16 %v481
        %v1634 = vunpack.c.l.b16 %v482
        %v1635 = vunpack.c.h.b16 %v482
        %v1636 = vunpack.c.l.b16 %v483
        %v1637 = vunpack.c.h.b16 %v483
        %v1638 = vunpack.c.l.b16 %v484
        %v1639 = vunpack.c.h.b16 %v484
        %v1640 = vunpack.c.l.b16 %v485
        %v1641 = vunpack.c.h.b16 %v485
        %v1642 = vunpack.c.l.b16 %v486
        %v1643 = vunpack.c.h.b16 %v486
        %v1644 = vunpack.c.l.b16 %v487
        %v1645 = vunpack.c.h.b16 %v487
        %v1646 = vunpack.c.l.b16 %v488
        %v1647 = vunpack.c.h.b16 %v488
        %v1648 = vunpack.c.l.b16 %v489
        %v1649 = vunpack.c.h.b16 %v489
        %v1650 = vunpack.c.l.b16 %v490
        %v1651 = vunpack.c.h.b16 %v490
        %v1652 = vunpack.c.l.b16 %v491
        %v1653 = vunpack.c.h.b16 %v491
        %v1654 = vunpack.c.l.b16 %v492
        %v1655 = vunpack.c.h.b16 %v492
        %v1656 = vunpack.c.l.b16 %v493
        %v1657 = vunpack.c.h.b16 %v493
        %v1658 = vunpack.c.l.b16 %v494
        %v1659 = vunpack.c.h.b16 %v494
        %v1660 = vunpack.c.l.b16 %v495
        %v1661 = vunpack.c.h.b16 %v495
        %v1662 = vunpack.c.l.b16 %v496
        %v1663 = vunpack.c.h.b16 %v496
        %v1664 = vunpack.c.l.b16 %v497
        %v1665 = vunpack.c.h.b16 %v497
        %v1666 = vunpack.c.l.b16 %v498
        %v1667 = vunpack.c.h.b16 %v498
        %v1668 = vunpack.c.l.b16 %v499
        %v1669 = vunpack.c.h.b16 %v499
        %v1670 = vunpack.c.l.b16 %v500
        %v1671 = vunpack.c.h.b16 %v500
        %v1672 = vunpack.c.l.b16 %v501
        %v1673 = vunpack.c.h.b16 %v501
        %v1674 = vunpack.c.l.b16 %v502
        %v1675 = vunpack.c.h.b16 %v502
        %v1676 = vunpack.c.l.b16 %v503
        %v1677 = vunpack.c.h.b16 %v503
        %v1678 = vunpack.c.l.b16 %v504
        %v1679 = vunpack.c.h.b16 %v504
        %v1680 = vunpack.c.l.b16 %v505
        %v1681 = vunpack.c.h.b16 %v505
        %v1682 = vunpack.c.l.b16 %v506
        %v1683 = vunpack.c.h.b16 %v506
        %v1684 = vunpack.c.l.b16 %v507
        %v1685 = vunpack.c.h.b16 %v507
        %v1686 = vunpack.c.l.b16 %v508
        %v1687 = vunpack.c.h.b16 %v508
        %v1688 = vunpack.c.l.b16 %v509
        %v1689 = vunpack.c.h.b16 %v509
        %v1690 = vunpack.c.l.b16 %v510
        %v1691 = vunpack.c.h.b16 %v510
        %v1692 = vunpack.c.l.b16 %v511
        %v1693 = vunpack.c.h.b16 %v511
        %v1694 = vunpack.c.l.b16 %v512
        %v1695 = vunpack.c.h.b16 %v512
        %v1696 = vunpack.c.l.b16 %v513
        %v1697 = vunpack.c.h.b16 %v513
        %v1698 = vunpack.c.l.b16 %v514
        %v1699 = vunpack.c.h.b16 %v514
        %v1700 = vunpack.c.l.b16 %v515
        %v1701 = vunpack.c.h.b16 %v515
        %v1702 = vunpack.c.l.b16 %v516
        %v1703 = vunpack.c.h.b16 %v516
        %v1704 = vunpack.c.l.b16 %v517
        %v1705 = vunpack.c.h.b16 %v517
        %v1706 = vunpack.c.l.b16 %v518
        %v1707 = vunpack.c.h.b16 %v518
        %v1708 = vunpack.c.l.b16 %v519
        %v1709 = vunpack.c.h.b16 %v519
        %v1710 = vunpack.c.l.b16 %v520
        %v1711 = vunpack.c.h.b16 %v520
        %v1712 = vunpack.c.l.b16 %v521
        %v1713 = vunpack.c.h.b16 %v521
        %v1714 = vunpack.c.l.b16 %v522
        %v1715 = vunpack.c.h.b16 %v522
        %v1716 = vunpack.c.l.b16 %v523
        %v1717 = vunpack.c.h.b16 %v523
        %v1718 = vunpack.c.l.b16 %v524
        %v1719 = vunpack.c.h.b16 %v524
        %v1720 = vunpack.c.l.b16 %v525
        %v1721 = vunpack.c.h.b16 %v525
        %v1722 = vunpack.c.l.b16 %v526
        %v1723 = vunpack.c.h.b16 %v526
        %v1724 = vunpack.c.l.b16 %v527
        %v1725 = vunpack.c.h.b16 %v527
        %v1726 = vunpack.c.l.b16 %v528
        %v1727 = vunpack.c.h.b16 %v528
        %v1728 = vunpack.c.l.b16 %v529
        %v1729 = vunpack.c.h.b16 %v529
        %v1730 = vunpack.c.l.b16 %v530
        %v1731 = vunpack.c.h.b16 %v530
        %v1732 = vunpack.c.l.b16 %v531
        %v1733 = vunpack.c.h.b16 %v531
        %v1734 = vunpack.c.l.b16 %v532
        %v1735 = vunpack.c.h.b16 %v532
        %v1736 = vunpack.c.l.b16 %v533
        %v1737 = vunpack.c.h.b16 %v533
        %v1738 = vunpack.c.l.b16 %v534
        %v1739 = vunpack.c.h.b16 %v534
        %v1740 = vunpack.c.l.b16 %v535
        %v1741 = vunpack.c.h.b16 %v535
        %v1742 = vunpack.c.l.b16 %v536
        %v1743 = vunpack.c.h.b16 %v536
        %v1744 = vunpack.c.l.b16 %v537
        %v1745 = vunpack.c.h.b16 %v537
        %v1746 = vunpack.c.l.b16 %v538
        %v1747 = vunpack.c.h.b16 %v538
        %v1748 = vunpack.c.l.b16 %v539
        %v1749 = vunpack.c.h.b16 %v539
        %v1750 = vunpack.c.l.b16 %v540
        %v1751 = vunpack.c.h.b16 %v540
        %v1752 = vunpack.c.l.b16 %v541
        %v1753 = vunpack.c.h.b16 %v541
        %v1754 = vunpack.c.l.b16 %v542
        %v1755 = vunpack.c.h.b16 %v542
        %v1756 = vunpack.c.l.b16 %v543
        %v1757 = vunpack.c.h.b16 %v543
        %v1758 = vunpack.c.l.b16 %v544
        %v1759 = vunpack.c.h.b16 %v544
        %v1760 = vunpack.c.l.b16 %v545
        %v1761 = vunpack.c.h.b16 %v545
        %v1762 = vunpack.c.l.b16 %v546
        %v1763 = vunpack.c.h.b16 %v546
        %v1764 = vunpack.c.l.b16 %v547
        %v1765 = vunpack.c.h.b16 %v547
        %v1766 = vunpack.c.l.b16 %v548
        %v1767 = vunpack.c.h.b16 %v548
        %v1768 = vunpack.c.l.b16 %v549
        %v1769 = vunpack.c.h.b16 %v549
        %v1770 = vunpack.c.l.b16 %v550
        %v1771 = vunpack.c.h.b16 %v550
        %v1772 = vunpack.c.l.b16 %v551
        %v1773 = vunpack.c.h.b16 %v551
        %v1774 = vunpack.c.l.b16 %v552
        %v1775 = vunpack.c.h.b16 %v552
        %v1776 = vunpack.c.l.b16 %v553
        %v1777 = vunpack.c.h.b16 %v553
        %v1778 = vunpack.c.l.b16 %v554
        %v1779 = vunpack.c.h.b16 %v554
        %v1780 = vunpack.c.l.b16 %v555
        %v1781 = vunpack.c.h.b16 %v555
        %v1782 = vunpack.c.l.b16 %v556
        %v1783 = vunpack.c.h.b16 %v556
        %v1784 = vunpack.c.l.b16 %v557
        %v1785 = vunpack.c.h.b16 %v557
        %v1786 = vunpack.c.l.b16 %v558
        %v1787 = vunpack.c.h.b16 %v558
        %v1788 = vunpack.c.l.b16 %v559
        %v1789 = vunpack.c.h.b16 %v559
        %v1790 = vunpack.c.l.b16 %v560
        %v1791 = vunpack.c.h.b16 %v560
        %v1792 = vunpack.c.l.b16 %v561
        %v1793 = vunpack.c.h.b16 %v561
        %v1794 = vunpack.c.l.b16 %v562
        %v1795 = vunpack.c.h.b16 %v562
        %v1796 = vunpack.c.l.b16 %v563
        %v1797 = vunpack.c.h.b16 %v563
        %v1798 = vunpack.c.l.b16 %v564
        %v1799 = vunpack.c.h.b16 %v564
        %v1800 = vunpack.c.l.b16 %v565
        %v1801 = vunpack.c.h.b16 %v565
        %v1802 = vunpack.c.l.b16 %v566
        %v1803 = vunpack.c.h.b16 %v566
        %v1804 = vunpack.c.l.b16 %v567
        %v1805 = vunpack.c.h.b16 %v567
        %v1806 = vunpack.c.l.b16 %v568
        %v1807 = vunpack.c.h.b16 %v568
        %v1808 = vunpack.c.l.b16 %v569
        %v1809 = vunpack.c.h.b16 %v569
        %v1810 = vunpack.c.l.b16 %v570
        %v1811 = vunpack.c.h.b16 %v570
        %v1812 = vunpack.c.l.b16 %v571
        %v1813 = vunpack.c.h.b16 %v571
        %v1814 = vunpack.c.l.b16 %v572
        %v1815 = vunpack.c.h.b16 %v572
        %v1816 = vunpack.c.l.b16 %v573
        %v1817 = vunpack.c.h.b16 %v573
        %v1818 = vunpack.c.l.b16 %v574
        %v1819 = vunpack.c.h.b16 %v574
        %v1820 = vunpack.c.l.b16 %v575
        %v1821 = vunpack.c.h.b16 %v575
        %v1822 = vunpack.c.l.b16 %v576
        %v1823 = vunpack.c.h.b16 %v576
        %v1824 = vunpack.c.l.b16 %v577
        %v1825 = vunpack.c.h.b16 %v577
        %v1826 = vunpack.c.l.b16 %v578
        %v1827 = vunpack.c.h.b16 %v578
        %v1828 = vunpack.c.l.b16 %v579
        %v1829 = vunpack.c.h.b16 %v579
        %v1830 = vunpack.c.l.b16 %v580
        %v1831 = vunpack.c.h.b16 %v580
        %v1832 = vunpack.c.l.b16 %v581
        %v1833 = vunpack.c.h.b16 %v581
        %v1834 = vunpack.c.l.b16 %v582
        %v1835 = vunpack.c.h.b16 %v582
        %v1836 = vunpack.c.l.b16 %v583
        %v1837 = vunpack.c.h.b16 %v583
        %v1838 = vunpack.c.l.b16 %v584
        %v1839 = vunpack.c.h.b16 %v584
        %v1840 = vunpack.c.l.b16 %v585
        %v1841 = vunpack.c.h.b16 %v585
        %v1842 = vunpack.c.l.b16 %v586
        %v1843 = vunpack.c.h.b16 %v586
        %v1844 = vunpack.c.l.b16 %v587
        %v1845 = vunpack.c.h.b16 %v587
        %v1846 = vunpack.c.l.b16 %v588
        %v1847 = vunpack.c.h.b16 %v588
        %v1848 = vunpack.c.l.b16 %v589
        %v1849 = vunpack.c.h.b16 %v589
        %v1850 = vunpack.c.l.b16 %v590
        %v1851 = vunpack.c.h.b16 %v590
        %v1852 = vunpack.c.l.b16 %v591
        %v1853 = vunpack.c.h.b16 %v591
        %v1854 = vunpack.c.l.b16 %v592
        %v1855 = vunpack.c.h.b16 %v592
        %v1856 = vunpack.c.l.b16 %v593
        %v1857 = vunpack.c.h.b16 %v593
        %v1858 = vunpack.c.l.b16 %v594
        %v1859 = vunpack.c.h.b16 %v594
        %v1860 = vunpack.c.l.b16 %v595
        %v1861 = vunpack.c.h.b16 %v595
        %v1862 = vunpack.c.l.b16 %v596
        %v1863 = vunpack.c.h.b16 %v596
        %v1864 = vunpack.c.l.b16 %v597
        %v1865 = vunpack.c.h.b16 %v597
        %v1866 = vunpack.c.l.b16 %v598
        %v1867 = vunpack.c.h.b16 %v598
        %v1868 = vunpack.c.l.b16 %v599
        %v1869 = vunpack.c.h.b16 %v599
        %v1870 = vunpack.c.l.b16 %v600
        %v1871 = vunpack.c.h.b16 %v600
        %v1872 = vunpack.c.l.b16 %v601
        %v1873 = vunpack.c.h.b16 %v601
        %v1874 = vunpack.c.l.b16 %v602
        %v1875 = vunpack.c.h.b16 %v602
        %v1876 = vunpack.c.l.b16 %v603
        %v1877 = vunpack.c.h.b16 %v603
        %v1878 = vunpack.c.l.b16 %v604
        %v1879 = vunpack.c.h.b16 %v604
        %v1880 = vunpack.c.l.b16 %v605
        %v1881 = vunpack.c.h.b16 %v605
        %v1882 = vunpack.c.l.b16 %v606
        %v1883 = vunpack.c.h.b16 %v606
        %v1884 = vunpack.c.l.b16 %v607
        %v1885 = vunpack.c.h.b16 %v607
        %v1886 = vunpack.c.l.b16 %v608
        %v1887 = vunpack.c.h.b16 %v608
        %v1888 = vunpack.c.l.b16 %v609
        %v1889 = vunpack.c.h.b16 %v609
        %v1890 = vunpack.c.l.b16 %v610
        %v1891 = vunpack.c.h.b16 %v610
        %v1892 = vunpack.c.l.b16 %v611
        %v1893 = vunpack.c.h.b16 %v611
        %v1894 = vunpack.c.l.b16 %v612
        %v1895 = vunpack.c.h.b16 %v612
        %v1896 = vunpack.c.l.b16 %v613
        %v1897 = vunpack.c.h.b16 %v613
        %v1898 = vunpack.c.l.b16 %v614
        %v1899 = vunpack.c.h.b16 %v614
        %v1900 = vunpack.c.l.b16 %v615
        %v1901 = vunpack.c.h.b16 %v615
        %v1902 = vunpack.c.l.b16 %v616
        %v1903 = vunpack.c.h.b16 %v616
        %v1904 = vunpack.c.l.b16 %v617
        %v1905 = vunpack.c.h.b16 %v617
        %v1906 = vunpack.c.l.b16 %v618
        %v1907 = vunpack.c.h.b16 %v618
        %v1908 = vunpack.c.l.b16 %v619
        %v1909 = vunpack.c.h.b16 %v619
        %v1910 = vunpack.c.l.b16 %v620
        %v1911 = vunpack.c.h.b16 %v620
        %v1912 = vunpack.c.l.b16 %v621
        %v1913 = vunpack.c.h.b16 %v621
        %v1914 = vunpack.c.l.b16 %v622
        %v1915 = vunpack.c.h.b16 %v622
        %v1916 = vunpack.c.l.b16 %v623
        %v1917 = vunpack.c.h.b16 %v623
        %v1918 = vunpack.c.l.b16 %v624
        %v1919 = vunpack.c.h.b16 %v624
        %v1920 = vunpack.c.l.b16 %v625
        %v1921 = vunpack.c.h.b16 %v625
        %v1922 = vunpack.c.l.b16 %v626
        %v1923 = vunpack.c.h.b16 %v626
        %v1924 = vunpack.c.l.b16 %v627
        %v1925 = vunpack.c.h.b16 %v627
        %v1926 = vunpack.c.l.b16 %v628
        %v1927 = vunpack.c.h.b16 %v628
        %v1928 = vunpack.c.l.b16 %v629
        %v1929 = vunpack.c.h.b16 %v629
        %v1930 = vunpack.c.l.b16 %v630
        %v1931 = vunpack.c.h.b16 %v630
        %v1932 = vunpack.c.l.b16 %v631
        %v1933 = vunpack.c.h.b16 %v631
        %v1934 = vunpack.c.l.b16 %v632
        %v1935 = vunpack.c.h.b16 %v632
        %v1936 = vunpack.c.l.b16 %v633
        %v1937 = vunpack.c.h.b16 %v633
        %v1938 = vunpack.c.l.b16 %v634
        %v1939 = vunpack.c.h.b16 %v634
        %v1940 = vunpack.c.l.b16 %v635
        %v1941 = vunpack.c.h.b16 %v635
        %v1942 = vunpack.c.l.b16 %v636
        %v1943 = vunpack.c.h.b16 %v636
        %v1944 = vunpack.c.l.b16 %v637
        %v1945 = vunpack.c.h.b16 %v637
        %v1946 = vunpack.c.l.b16 %v638
        %v1947 = vunpack.c.h.b16 %v638
        %v1948 = vunpack.c.l.b16 %v639
        %v1949 = vunpack.c.h.b16 %v639
        %v1950 = vunpack.c.l.b16 %v640
        %v1951 = vunpack.c.h.b16 %v640
        %v1952 = vunpack.c.l.b16 %v641
        %v1953 = vunpack.c.h.b16 %v641
        %v1954 = vunpack.c.l.b16 %v642
        %v1955 = vunpack.c.h.b16 %v642
        %v1956 = vunpack.c.l.b16 %v643
        %v1957 = vunpack.c.h.b16 %v643
        %v1958 = vunpack.c.l.b16 %v644
        %v1959 = vunpack.c.h.b16 %v644
        %v1960 = vunpack.c.l.b16 %v645
        %v1961 = vunpack.c.h.b16 %v645
        %v1962 = vunpack.c.l.b16 %v646
        %v1963 = vunpack.c.h.b16 %v646
        %v1964 = vunpack.c.l.b16 %v647
        %v1965 = vunpack.c.h.b16 %v647
        %v1966 = vunpack.c.l.b16 %v648
        %v1967 = vunpack.c.h.b16 %v648
        %v1968 = vunpack.c.l.b16 %v649
        %v1969 = vunpack.c.h.b16 %v649
        %v1970 = vunpack.c.l.b16 %v650
        %v1971 = vunpack.c.h.b16 %v650
        %v1972 = vunpack.c.l.b16 %v651
        %v1973 = vunpack.c.h.b16 %v651
        %v1974 = vunpack.c.l.b16 %v652
        %v1975 = vunpack.c.h.b16 %v652
        %v1976 = vunpack.c.l.b16 %v653
        %v1977 = vunpack.c.h.b16 %v653
        %v1978 = vunpack.c.l.b16 %v654
        %v1979 = vunpack.c.h.b16 %v654
        %v1980 = vunpack.c.l.b16 %v655
        %v1981 = vunpack.c.h.b16 %v655
        %v1982 = vunpack.c.l.b16 %v656
        %v1983 = vunpack.c.h.b16 %v656
        %v1984 = vunpack.c.l.b16 %v657
        %v1985 = vunpack.c.h.b16 %v657
        %v1986 = vunpack.c.l.b16 %v658
        %v1987 = vunpack.c.h.b16 %v658
        %v1988 = vunpack.c.l.b16 %v659
        %v1989 = vunpack.c.h.b16 %v659
        %v1990 = vunpack.c.l.b16 %v660
        %v1991 = vunpack.c.h.b16 %v660
        %v1992 = vunpack.c.l.b16 %v661
        %v1993 = vunpack.c.h.b16 %v661
        %v1994 = vunpack.c.l.b16 %v662
        %v1995 = vunpack.c.h.b16 %v662
        %v1996 = vunpack.c.l.b16 %v663
        %v1997 = vunpack.c.h.b16 %v663
        %v1998 = vunpack.c.l.b16 %v664
        %v1999 = vunpack.c.h.b16 %v664
        %v2000 = vunpack.c.l.b16 %v665
        %v2001 = vunpack.c.h.b16 %v665
        %v2002 = vunpack.c.l.b16 %v666
        %v2003 = vunpack.c.h.b16 %v666
        %v2004 = vunpack.c.l.b16 %v667
        %v2005 = vunpack.c.h.b16 %v667
        %v2006 = vunpack.c.l.b16 %v668
        %v2007 = vunpack.c.h.b16 %v668
        %v2008 = vunpack.c.l.b16 %v669
        %v2009 = vunpack.c.h.b16 %v669
        %v2010 = vunpack.c.l.b16 %v670
        %v2011 = vunpack.c.h.b16 %v670
        %v2012 = vunpack.c.l.b16 %v671
        %v2013 = vunpack.c.h.b16 %v671
        %v2014 = vunpack.c.l.b16 %v672
        %v2015 = vunpack.c.h.b16 %v672
        %v2016 = vunpack.c.l.b16 %v673
        %v2017 = vunpack.c.h.b16 %v673
        %v2018 = vunpack.c.l.b16 %v674
        %v2019 = vunpack.c.h.b16 %v674
        %v2020 = vunpack.c.l.b16 %v675
        %v2021 = vunpack.c.h.b16 %v675
        %v2022 = vunpack.c.l.b16 %v676
        %v2023 = vunpack.c.h.b16 %v676
        %v2024 = vunpack.c.l.b16 %v677
        %v2025 = vunpack.c.h.b16 %v677
        %v2026 = vunpack.c.l.b16 %v678
        %v2027 = vunpack.c.h.b16 %v678
        %v2028 = vunpack.c.l.b16 %v679
        %v2029 = vunpack.c.h.b16 %v679
        %v2030 = vunpack.c.l.b16 %v680
        %v2031 = vunpack.c.h.b16 %v680
        %v2032 = vunpack.c.l.b16 %v681
        %v2033 = vunpack.c.h.b16 %v681
        %v2034 = vpack.c.b16 %v1272, %v1266
        %v2035 = vpack.c.b16 %v1273, %v1267
        %v2036 = vpack.c.b16 %v1274, %v1268
        %v2037 = vpack.c.b16 %v1275, %v1269
        %v2038 = vpack.c.b16 %v1276, %v1270
        %v2039 = vpack.c.b16 %v1277, %v1271
        %v2040 = vpack.c.b16 %v1284, %v1278
        %v2041 = vpack.c.b16 %v1285, %v1279
        %v2042 = vpack.c.b16 %v1286, %v1280
        %v2043 = vpack.c.b16 %v1287, %v1281
        %v2044 = vpack.c.b16 %v1288, %v1282
        %v2045 = vpack.c.b16 %v1289, %v1283
        %v2046 = vpack.c.b16 %v1296, %v1290
        %v2047 = vpack.c.b16 %v1297, %v1291
        %v2048 = vpack.c.b16 %v1298, %v1292
        %v2049 = vpack.c.b16 %v1299, %v1293
        %v2050 = vpack.c.b16 %v1300, %v1294
        %v2051 = vpack.c.b16 %v1301, %v1295
        %v2052 = vpack.c.b16 %v1308, %v1302
        %v2053 = vpack.c.b16 %v1309, %v1303
        %v2054 = vpack.c.b16 %v1310, %v1304
        %v2055 = vpack.c.b16 %v1311, %v1305
        %v2056 = vpack.c.b16 %v1312, %v1306
        %v2057 = vpack.c.b16 %v1313, %v1307
        %v2058 = vpack.c.b16 %v1320, %v1314
        %v2059 = vpack.c.b16 %v1321, %v1315
        %v2060 = vpack.c.b16 %v1322, %v1316
        %v2061 = vpack.c.b16 %v1323, %v1317
        %v2062 = vpack.c.b16 %v1324, %v1318
        %v2063 = vpack.c.b16 %v1325, %v1319
        %v2064 = vpack.c.b16 %v1332, %v1326
        %v2065 = vpack.c.b16 %v1333, %v1327
        %v2066 = vpack.c.b16 %v1334, %v1328
        %v2067 = vpack.c.b16 %v1335, %v1329
        %v2068 = vpack.c.b16 %v1336, %v1330
        %v2069 = vpack.c.b16 %v1337, %v1331
        %v2070 = vpack.c.b16 %v1344, %v1338
        %v2071 = vpack.c.b16 %v1345, %v1339
        %v2072 = vpack.c.b16 %v1346, %v1340
        %v2073 = vpack.c.b16 %v1347, %v1341
        %v2074 = vpack.c.b16 %v1348, %v1342
        %v2075 = vpack.c.b16 %v1349, %v1343
        %v2076 = vpack.c.b16 %v1356, %v1350
        %v2077 = vpack.c.b16 %v1357, %v1351
        %v2078 = vpack.c.b16 %v1358, %v1352
        %v2079 = vpack.c.b16 %v1359, %v1353
        %v2080 = vpack.c.b16 %v1360, %v1354
        %v2081 = vpack.c.b16 %v1361, %v1355
        %v2082 = vpack.c.b16 %v1368, %v1362
        %v2083 = vpack.c.b16 %v1369, %v1363
        %v2084 = vpack.c.b16 %v1370, %v1364
        %v2085 = vpack.c.b16 %v1371, %v1365
        %v2086 = vpack.c.b16 %v1372, %v1366
        %v2087 = vpack.c.b16 %v1373, %v1367
        %v2088 = vpack.c.b16 %v1380, %v1374
        %v2089 = vpack.c.b16 %v1381, %v1375
        %v2090 = vpack.c.b16 %v1382, %v1376
        %v2091 = vpack.c.b16 %v1383, %v1377
        %v2092 = vpack.c.b16 %v1384, %v1378
        %v2093 = vpack.c.b16 %v1385, %v1379
        %v2094 = vpack.c.b16 %v1392, %v1386
        %v2095 = vpack.c.b16 %v1393, %v1387
        %v2096 = vpack.c.b16 %v1394, %v1388
        %v2097 = vpack.c.b16 %v1395, %v1389
        %v2098 = vpack.c.b16 %v1396, %v1390
        %v2099 = vpack.c.b16 %v1397, %v1391
        %v2100 = vpack.c.b16 %v1404, %v1398
        %v2101 = vpack.c.b16 %v1405, %v1399
        %v2102 = vpack.c.b16 %v1406, %v1400
        %v2103 = vpack.c.b16 %v1407, %v1401
        %v2104 = vpack.c.b16 %v1408, %v1402
        %v2105 = vpack.c.b16 %v1409, %v1403
        %v2106 = vpack.c.b16 %v1416, %v1410
        %v2107 = vpack.c.b16 %v1417, %v1411
        %v2108 = vpack.c.b16 %v1418, %v1412
        %v2109 = vpack.c.b16 %v1419, %v1413
        %v2110 = vpack.c.b16 %v1420, %v1414
        %v2111 = vpack.c.b16 %v1421, %v1415
        %v2112 = vpack.c.b16 %v1428, %v1422
        %v2113 = vpack.c.b16 %v1429, %v1423
        %v2114 = vpack.c.b16 %v1430, %v1424
        %v2115 = vpack.c.b16 %v1431, %v1425
        %v2116 = vpack.c.b16 %v1432, %v1426
        %v2117 = vpack.c.b16 %v1433, %v1427
        %v2118 = vpack.c.b16 %v1440, %v1434
        %v2119 = vpack.c.b16 %v1441, %v1435
        %v2120 = vpack.c.b16 %v1442, %v1436
        %v2121 = vpack.c.b16 %v1443, %v1437
        %v2122 = vpack.c.b16 %v1444, %v1438
        %v2123 = vpack.c.b16 %v1445, %v1439
        %v2124 = vpack.c.b16 %v1452, %v1446
        %v2125 = vpack.c.b16 %v1453, %v1447
        %v2126 = vpack.c.b16 %v1454, %v1448
        %v2127 = vpack.c.b16 %v1455, %v1449
        %v2128 = vpack.c.b16 %v1456, %v1450
        %v2129 = vpack.c.b16 %v1457, %v1451
        %v2130 = vpack.c.b16 %v1464, %v1458
        %v2131 = vpack.c.b16 %v1465, %v1459
        %v2132 = vpack.c.b16 %v1466, %v1460
        %v2133 = vpack.c.b16 %v1467, %v1461
        %v2134 = vpack.c.b16 %v1468, %v1462
        %v2135 = vpack.c.b16 %v1469, %v1463
        %v2136 = vpack.c.b16 %v1476, %v1470
        %v2137 = vpack.c.b16 %v1477, %v1471
        %v2138 = vpack.c.b16 %v1478, %v1472
        %v2139 = vpack.c.b16 %v1479, %v1473
        %v2140 = vpack.c.b16 %v1480, %v1474
        %v2141 = vpack.c.b16 %v1481, %v1475
        %v2142 = vpack.c.b16 %v1488, %v1482
        %v2143 = vpack.c.b16 %v1489, %v1483
        %v2144 = vpack.c.b16 %v1490, %v1484
        %v2145 = vpack.c.b16 %v1491, %v1485
        %v2146 = vpack.c.b16 %v1492, %v1486
        %v2147 = vpack.c.b16 %v1493, %v1487
        %v2148 = vpack.c.b16 %v1500, %v1494
        %v2149 = vpack.c.b16 %v1501, %v1495
        %v2150 = vpack.c.b16 %v1502, %v1496
        %v2151 = vpack.c.b16 %v1503, %v1497
        %v2152 = vpack.c.b16 %v1504, %v1498
        %v2153 = vpack.c.b16 %v1505, %v1499
        %v2154 = vpack.c.b16 %v1512, %v1506
        %v2155 = vpack.c.b16 %v1513, %v1507
        %v2156 = vpack.c.b16 %v1514, %v1508
        %v2157 = vpack.c.b16 %v1515, %v1509
        %v2158 = vpack.c.b16 %v1516, %v1510
        %v2159 = vpack.c.b16 %v1517, %v1511
        %v2160 = vpack.c.b16 %v1524, %v1518
        %v2161 = vpack.c.b16 %v1525, %v1519
        %v2162 = vpack.c.b16 %v1526, %v1520
        %v2163 = vpack.c.b16 %v1527, %v1521
        %v2164 = vpack.c.b16 %v1528, %v1522
        %v2165 = vpack.c.b16 %v1529, %v1523
        %v2166 = vpack.c.b16 %v1536, %v1530
        %v2167 = vpack.c.b16 %v1537, %v1531
        %v2168 = vpack.c.b16 %v1538, %v1532
        %v2169 = vpack.c.b16 %v1539, %v1533
        %v2170 = vpack.c.b16 %v1540, %v1534
        %v2171 = vpack.c.b16 %v1541, %v1535
        %v2172 = vpack.c.b16 %v1548, %v1542
        %v2173 = vpack.c.b16 %v1549, %v1543
        %v2174 = vpack.c.b16 %v1550, %v1544
        %v2175 = vpack.c.b16 %v1551, %v1545
        %v2176 = vpack.c.b16 %v1552, %v1546
        %v2177 = vpack.c.b16 %v1553, %v1547
        %v2178 = vpack.c.b16 %v1560, %v1554
        %v2179 = vpack.c.b16 %v1561, %v1555
        %v2180 = vpack.c.b16 %v1562, %v1556
        %v2181 = vpack.c.b16 %v1563, %v1557
        %v2182 = vpack.c.b16 %v1564, %v1558
        %v2183 = vpack.c.b16 %v1565, %v1559
        %v2184 = vpack.c.b16 %v1572, %v1566
        %v2185 = vpack.c.b16 %v1573, %v1567
        %v2186 = vpack.c.b16 %v1574, %v1568
        %v2187 = vpack.c.b16 %v1575, %v1569
        %v2188 = vpack.c.b16 %v1576, %v1570
        %v2189 = vpack.c.b16 %v1577, %v1571
        %v2190 = vpack.c.b16 %v1584, %v1578
        %v2191 = vpack.c.b16 %v1585, %v1579
        %v2192 = vpack.c.b16 %v1586, %v1580
        %v2193 = vpack.c.b16 %v1587, %v1581
        %v2194 = vpack.c.b16 %v1588, %v1582
        %v2195 = vpack.c.b16 %v1589, %v1583
        %v2196 = vpack.c.b16 %v1596, %v1590
        %v2197 = vpack.c.b16 %v1597, %v1591
        %v2198 = vpack.c.b16 %v1598, %v1592
        %v2199 = vpack.c.b16 %v1599, %v1593
        %v2200 = vpack.c.b16 %v1600, %v1594
        %v2201 = vpack.c.b16 %v1601, %v1595
        %v2202 = vpack.c.b16 %v1608, %v1602
        %v2203 = vpack.c.b16 %v1609, %v1603
        %v2204 = vpack.c.b16 %v1610, %v1604
        %v2205 = vpack.c.b16 %v1611, %v1605
        %v2206 = vpack.c.b16 %v1612, %v1606
        %v2207 = vpack.c.b16 %v1613, %v1607
        %v2208 = vpack.c.b16 %v1620, %v1614
        %v2209 = vpack.c.b16 %v1621, %v1615
        %v2210 = vpack.c.b16 %v1622, %v1616
        %v2211 = vpack.c.b16 %v1623, %v1617
        %v2212 = vpack.c.b16 %v1624, %v1618
        %v2213 = vpack.c.b16 %v1625, %v1619
        %v2214 = vpack.c.b16 %v1632, %v1626
        %v2215 = vpack.c.b16 %v1633, %v1627
        %v2216 = vpack.c.b16 %v1634, %v1628
        %v2217 = vpack.c.b16 %v1635, %v1629
        %v2218 = vpack.c.b16 %v1636, %v1630
        %v2219 = vpack.c.b16 %v1637, %v1631
        %v2220 = vpack.c.b16 %v1644, %v1638
        %v2221 = vpack.c.b16 %v1645, %v1639
        %v2222 = vpack.c.b16 %v1646, %v1640
        %v2223 = vpack.c.b16 %v1647, %v1641
        %v2224 = vpack.c.b16 %v1648, %v1642
        %v2225 = vpack.c.b16 %v1649, %v1643
        %v2226 = vpack.c.b16 %v1656, %v1650
        %v2227 = vpack.c.b16 %v1657, %v1651
        %v2228 = vpack.c.b16 %v1658, %v1652
        %v2229 = vpack.c.b16 %v1659, %v1653
        %v2230 = vpack.c.b16 %v1660, %v1654
        %v2231 = vpack.c.b16 %v1661, %v1655
        %v2232 = vpack.c.b16 %v1668, %v1662
        %v2233 = vpack.c.b16 %v1669, %v1663
        %v2234 = vpack.c.b16 %v1670, %v1664
        %v2235 = vpack.c.b16 %v1671, %v1665
        %v2236 = vpack.c.b16 %v1672, %v1666
        %v2237 = vpack.c.b16 %v1673, %v1667
        %v2238 = vpack.c.b16 %v1680, %v1674
        %v2239 = vpack.c.b16 %v1681, %v1675
        %v2240 = vpack.c.b16 %v1682, %v1676
        %v2241 = vpack.c.b16 %v1683, %v1677
        %v2242 = vpack.c.b16 %v1684, %v1678
        %v2243 = vpack.c.b16 %v1685, %v1679
        %v2244 = vpack.c.b16 %v1692, %v1686
        %v2245 = vpack.c.b16 %v1693, %v1687
        %v2246 = vpack.c.b16 %v1694, %v1688
        %v2247 = vpack.c.b16 %v1695, %v1689
        %v2248 = vpack.c.b16 %v1696, %v1690
        %v2249 = vpack.c.b16 %v1697, %v1691
        %v2250 = vpack.c.b16 %v1704, %v1698
        %v2251 = vpack.c.b16 %v1705, %v1699
        %v2252 = vpack.c.b16 %v1706, %v1700
        %v2253 = vpack.c.b16 %v1707, %v1701
        %v2254 = vpack.c.b16 %v1708, %v1702
        %v2255 = vpack.c.b16 %v1709, %v1703
        %v2256 = vpack.c.b16 %v1716, %v1710
        %v2257 = vpack.c.b16 %v1717, %v1711
        %v2258 = vpack.c.b16 %v1718, %v1712
        %v2259 = vpack.c.b16 %v1719, %v1713
        %v2260 = vpack.c.b16 %v1720, %v1714
        %v2261 = vpack.c.b16 %v1721, %v1715
        %v2262 = vpack.c.b16 %v1728, %v1722
        %v2263 = vpack.c.b16 %v1729, %v1723
        %v2264 = vpack.c.b16 %v1730, %v1724
        %v2265 = vpack.c.b16 %v1731, %v1725
        %v2266 = vpack.c.b16 %v1732, %v1726
        %v2267 = vpack.c.b16 %v1733, %v1727
        %v2268 = vpack.c.b16 %v1740, %v1734
        %v2269 = vpack.c.b16 %v1741, %v1735
        %v2270 = vpack.c.b16 %v1742, %v1736
        %v2271 = vpack.c.b16 %v1743, %v1737
        %v2272 = vpack.c.b16 %v1744, %v1738
        %v2273 = vpack.c.b16 %v1745, %v1739
        %v2274 = vpack.c.b16 %v1752, %v1746
        %v2275 = vpack.c.b16 %v1753, %v1747
        %v2276 = vpack.c.b16 %v1754, %v1748
        %v2277 = vpack.c.b16 %v1755, %v1749
        %v2278 = vpack.c.b16 %v1756, %v1750
        %v2279 = vpack.c.b16 %v1757, %v1751
        %v2280 = vpack.c.b16 %v1764, %v1758
        %v2281 = vpack.c.b16 %v1765, %v1759
        %v2282 = vpack.c.b16 %v1766, %v1760
        %v2283 = vpack.c.b16 %v1767, %v1761
        %v2284 = vpack.c.b16 %v1768, %v1762
        %v2285 = vpack.c.b16 %v1769, %v1763
        %v2286 = vpack.c.b16 %v1776, %v1770
        %v2287 = vpack.c.b16 %v1777, %v1771
        %v2288 = vpack.c.b16 %v1778, %v1772
        %v2289 = vpack.c.b16 %v1779, %v1773
        %v2290 = vpack.c.b16 %v1780, %v1774
        %v2291 = vpack.c.b16 %v1781, %v1775
        %v2292 = vpack.c.b16 %v1788, %v1782
        %v2293 = vpack.c.b16 %v1789, %v1783
        %v2294 = vpack.c.b16 %v1790, %v1784
        %v2295 = vpack.c.b16 %v1791, %v1785
        %v2296 = vpack.c.b16 %v1792, %v1786
        %v2297 = vpack.c.b16 %v1793, %v1787
        %v2298 = vpack.c.b16 %v1800, %v1794
        %v2299 = vpack.c.b16 %v1801, %v1795
        %v2300 = vpack.c.b16 %v1802, %v1796
        %v2301 = vpack.c.b16 %v1803, %v1797
        %v2302 = vpack.c.b16 %v1804, %v1798
        %v2303 = vpack.c.b16 %v1805, %v1799
        %v2304 = vpack.c.b16 %v1812, %v1806
        %v2305 = vpack.c.b16 %v1813, %v1807
        %v2306 = vpack.c.b16 %v1814, %v1808
        %v2307 = vpack.c.b16 %v1815, %v1809
        %v2308 = vpack.c.b16 %v1816, %v1810
        %v2309 = vpack.c.b16 %v1817, %v1811
        %v2310 = vpack.c.b16 %v1824, %v1818
        %v2311 = vpack.c.b16 %v1825, %v1819
        %v2312 = vpack.c.b16 %v1826, %v1820
        %v2313 = vpack.c.b16 %v1827, %v1821
        %v2314 = vpack.c.b16 %v1828, %v1822
        %v2315 = vpack.c.b16 %v1829, %v1823
        %v2316 = vpack.c.b16 %v1836, %v1830
        %v2317 = vpack.c.b16 %v1837, %v1831
        %v2318 = vpack.c.b16 %v1838, %v1832
        %v2319 = vpack.c.b16 %v1839, %v1833
        %v2320 = vpack.c.b16 %v1840, %v1834
        %v2321 = vpack.c.b16 %v1841, %v1835
        %v2322 = vpack.c.b16 %v1848, %v1842
        %v2323 = vpack.c.b16 %v1849, %v1843
        %v2324 = vpack.c.b16 %v1850, %v1844
        %v2325 = vpack.c.b16 %v1851, %v1845
        %v2326 = vpack.c.b16 %v1852, %v1846
        %v2327 = vpack.c.b16 %v1853, %v1847
        %v2328 = vpack.c.b16 %v1860, %v1854
        %v2329 = vpack.c.b16 %v1861, %v1855
        %v2330 = vpack.c.b16 %v1862, %v1856
        %v2331 = vpack.c.b16 %v1863, %v1857
        %v2332 = vpack.c.b16 %v1864, %v1858
        %v2333 = vpack.c.b16 %v1865, %v1859
        %v2334 = vpack.c.b16 %v1872, %v1866
        %v2335 = vpack.c.b16 %v1873, %v1867
        %v2336 = vpack.c.b16 %v1874, %v1868
        %v2337 = vpack.c.b16 %v1875, %v1869
        %v2338 = vpack.c.b16 %v1876, %v1870
        %v2339 = vpack.c.b16 %v1877, %v1871
        %v2340 = vpack.c.b16 %v1884, %v1878
        %v2341 = vpack.c.b16 %v1885, %v1879
        %v2342 = vpack.c.b16 %v1886, %v1880
        %v2343 = vpack.c.b16 %v1887, %v1881
        %v2344 = vpack.c.b16 %v1888, %v1882
        %v2345 = vpack.c.b16 %v1889, %v1883
        %v2346 = vpack.c.b16 %v1896, %v1890
        %v2347 = vpack.c.b16 %v1897, %v1891
        %v2348 = vpack.c.b16 %v1898, %v1892
        %v2349 = vpack.c.b16 %v1899, %v1893
        %v2350 = vpack.c.b16 %v1900, %v1894
        %v2351 = vpack.c.b16 %v1901, %v1895
        %v2352 = vpack.c.b16 %v1908, %v1902
        %v2353 = vpack.c.b16 %v1909, %v1903
        %v2354 = vpack.c.b16 %v1910, %v1904
        %v2355 = vpack.c.b16 %v1911, %v1905
        %v2356 = vpack.c.b16 %v1912, %v1906
        %v2357 = vpack.c.b16 %v1913, %v1907
        %v2358 = vpack.c.b16 %v1920, %v1914
        %v2359 = vpack.c.b16 %v1921, %v1915
        %v2360 = vpack.c.b16 %v1922, %v1916
        %v2361 = vpack.c.b16 %v1923, %v1917
        %v2362 = vpack.c.b16 %v1924, %v1918
        %v2363 = vpack.c.b16 %v1925, %v1919
        %v2364 = vpack.c.b16 %v1932, %v1926
        %v2365 = vpack.c.b16 %v1933, %v1927
        %v2366 = vpack.c.b16 %v1934, %v1928
        %v2367 = vpack.c.b16 %v1935, %v1929
        %v2368 = vpack.c.b16 %v1936, %v1930
        %v2369 = vpack.c.b16 %v1937, %v1931
        %v2370 = vpack.c.b16 %v1944, %v1938
        %v2371 = vpack.c.b16 %v1945, %v1939
        %v2372 = vpack.c.b16 %v1946, %v1940
        %v2373 = vpack.c.b16 %v1947, %v1941
        %v2374 = vpack.c.b16 %v1948, %v1942
        %v2375 = vpack.c.b16 %v1949, %v1943
        %v2376 = vpack.c.b16 %v1956, %v1950
        %v2377 = vpack.c.b16 %v1957, %v1951
        %v2378 = vpack.c.b16 %v1958, %v1952
        %v2379 = vpack.c.b16 %v1959, %v1953
        %v2380 = vpack.c.b16 %v1960, %v1954
        %v2381 = vpack.c.b16 %v1961, %v1955
        %v2382 = vpack.c.b16 %v1968, %v1962
        %v2383 = vpack.c.b16 %v1969, %v1963
        %v2384 = vpack.c.b16 %v1970, %v1964
        %v2385 = vpack.c.b16 %v1971, %v1965
        %v2386 = vpack.c.b16 %v1972, %v1966
        %v2387 = vpack.c.b16 %v1973, %v1967
        %v2388 = vpack.c.b16 %v1980, %v1974
        %v2389 = vpack.c.b16 %v1981, %v1975
        %v2390 = vpack.c.b16 %v1982, %v1976
        %v2391 = vpack.c.b16 %v1983, %v1977
        %v2392 = vpack.c.b16 %v1984, %v1978
        %v2393 = vpack.c.b16 %v1985, %v1979
        %v2394 = vpack.c.b16 %v1992, %v1986
        %v2395 = vpack.c.b16 %v1993, %v1987
        %v2396 = vpack.c.b16 %v1994, %v1988
        %v2397 = vpack.c.b16 %v1995, %v1989
        %v2398 = vpack.c.b16 %v1996, %v1990
        %v2399 = vpack.c.b16 %v1997, %v1991
        %v2400 = vpack.c.b16 %v2004, %v1998
        %v2401 = vpack.c.b16 %v2005, %v1999
        %v2402 = vpack.c.b16 %v2006, %v2000
        %v2403 = vpack.c.b16 %v2007, %v2001
        %v2404 = vpack.c.b16 %v2008, %v2002
        %v2405 = vpack.c.b16 %v2009, %v2003
        %v2406 = vpack.c.b16 %v2016, %v2010
        %v2407 = vpack.c.b16 %v2017, %v2011
        %v2408 = vpack.c.b16 %v2018, %v2012
        %v2409 = vpack.c.b16 %v2019, %v2013
        %v2410 = vpack.c.b16 %v2020, %v2014
        %v2411 = vpack.c.b16 %v2021, %v2015
        %v2412 = vpack.c.b16 %v2028, %v2022
        %v2413 = vpack.c.b16 %v2029, %v2023
        %v2414 = vpack.c.b16 %v2030, %v2024
        %v2415 = vpack.c.b16 %v2031, %v2025
        %v2416 = vpack.c.b16 %v2032, %v2026
        %v2417 = vpack.c.b16 %v2033, %v2027
        %2802 = vmatprep.subr.bf16.mxu0 %v2077
        %2803 = vmatpush1.bf16.msra.mxu0 %v2076
        %2804 = vmatprep.subr.bf16.mxu0 %v2071
        %2805 = vmatpush1.bf16.msra.mxu0 %v2070
        %2806 = vmatprep.subr.bf16.mxu0 %v2065
        %2807 = vmatpush1.bf16.msra.mxu0 %v2064
        %2808 = vmatprep.subr.bf16.mxu0 %v2059
        %2809 = vmatpush1.bf16.msra.mxu0 %v2058
        %2810 = vmatprep.subr.bf16.mxu0 %v2053
        %2811 = vmatpush1.bf16.msra.mxu0 %v2052
        %2812 = vmatprep.subr.bf16.mxu0 %v2047
        %2813 = vmatpush1.bf16.msra.mxu0 %v2046
        %2814 = vmatprep.subr.bf16.mxu0 %v2041
        %2815 = vmatpush1.bf16.msra.mxu0 %v2040
        %2816 = vmatprep.subr.bf16.mxu0 %v2035
        %2817 = vmatpush1.bf16.msra.mxu0 %v2034
        %2818 = vmatprep.subr.bf16.mxu0 %v2125
        %2819 = vmatpush2.bf16.msra.mxu0 %v2124
        %2820 = vmatprep.subr.bf16.mxu0 %v2119
        %2821 = vmatpush2.bf16.msra.mxu0 %v2118
        %2822 = vmatprep.subr.bf16.mxu0 %v2113
        %2823 = vmatpush2.bf16.msra.mxu0 %v2112
        %2824 = vmatprep.subr.bf16.mxu0 %v2107
        %2825 = vmatpush2.bf16.msra.mxu0 %v2106
        %2826 = vmatprep.subr.bf16.mxu0 %v2101
        %2827 = vmatpush2.bf16.msra.mxu0 %v2100
        %2828 = vmatprep.subr.bf16.mxu0 %v2095
        %2829 = vmatpush2.bf16.msra.mxu0 %v2094
        %2830 = vmatprep.subr.bf16.mxu0 %v2089
        %2831 = vmatpush2.bf16.msra.mxu0 %v2088
        %2832 = vmatprep.subr.bf16.mxu0 %v2083
        %2833 = vmatpush2.bf16.msra.mxu0 %v2082
        %2834 = vmatprep.mubr.bf16.mxu0 %v803
        %2835 = vmatmul.mubr.bf16.gmra.mxu0 %v802
        %v2836 = vpop.f32.mrf.mxu0
        %v2837 = vadd.f32 0.0, %v2836
        %v2838 = vpop.f32.mrf.mxu0
        %v2839 = vadd.f32 0.0, %v2838
        %v2840 = vpop.f32.mrf.mxu0
        %v2841 = vadd.f32 0.0, %v2840
        %v2842 = vpop.f32.mrf.mxu0
        %v2843 = vadd.f32 0.0, %v2842
        %2844 = vmatprep.mubr.bf16.mxu0 %v811
        %2845 = vmatmul.mubr.bf16.gmra.mxu0 %v810
        %v2846 = vpop.f32.mrf.mxu0
        %v2847 = vadd.f32 0.0, %v2846
        %v2848 = vpop.f32.mrf.mxu0
        %v2849 = vadd.f32 0.0, %v2848
        %v2850 = vpop.f32.mrf.mxu0
        %v2851 = vadd.f32 0.0, %v2850
        %v2852 = vpop.f32.mrf.mxu0
        %v2853 = vadd.f32 0.0, %v2852
        %2854 = vmatprep.mubr.bf16.mxu0 %v819
        %2855 = vmatmul.mubr.bf16.gmra.mxu0 %v818
        %v2856 = vpop.f32.mrf.mxu0
        %v2857 = vadd.f32 0.0, %v2856
        %v2858 = vpop.f32.mrf.mxu0
        %v2859 = vadd.f32 0.0, %v2858
        %v2860 = vpop.f32.mrf.mxu0
        %v2861 = vadd.f32 0.0, %v2860
        %v2862 = vpop.f32.mrf.mxu0
        %v2863 = vadd.f32 0.0, %v2862
        %2864 = vmatprep.mubr.bf16.mxu0 %v827
        %2865 = vmatmul.mubr.bf16.gmra.mxu0 %v826
        %v2866 = vpop.f32.mrf.mxu0
        %v2867 = vadd.f32 0.0, %v2866
        %v2868 = vpop.f32.mrf.mxu0
        %v2869 = vadd.f32 0.0, %v2868
        %v2870 = vpop.f32.mrf.mxu0
        %v2871 = vadd.f32 0.0, %v2870
        %v2872 = vpop.f32.mrf.mxu0
        %v2873 = vadd.f32 0.0, %v2872
        %2874 = vmatprep.mubr.bf16.mxu0 %v835
        %2875 = vmatmul.mubr.bf16.gmra.mxu0 %v834
        %v2876 = vpop.f32.mrf.mxu0
        %v2877 = vadd.f32 0.0, %v2876
        %v2878 = vpop.f32.mrf.mxu0
        %v2879 = vadd.f32 0.0, %v2878
        %v2880 = vpop.f32.mrf.mxu0
        %v2881 = vadd.f32 0.0, %v2880
        %v2882 = vpop.f32.mrf.mxu0
        %v2883 = vadd.f32 0.0, %v2882
        %2884 = vdwg.mxu0
        %2885 = vmatprep.subr.bf16.mxu0 %v2173
        %2886 = vmatpush1.bf16.msra.mxu0 %v2172
        %2887 = vmatprep.subr.bf16.mxu0 %v2167
        %2888 = vmatpush1.bf16.msra.mxu0 %v2166
        %2889 = vmatprep.subr.bf16.mxu0 %v2161
        %2890 = vmatpush1.bf16.msra.mxu0 %v2160
        %2891 = vmatprep.subr.bf16.mxu0 %v2155
        %2892 = vmatpush1.bf16.msra.mxu0 %v2154
        %2893 = vmatprep.subr.bf16.mxu0 %v2149
        %2894 = vmatpush1.bf16.msra.mxu0 %v2148
        %2895 = vmatprep.subr.bf16.mxu0 %v2143
        %2896 = vmatpush1.bf16.msra.mxu0 %v2142
        %2897 = vmatprep.subr.bf16.mxu0 %v2137
        %2898 = vmatpush1.bf16.msra.mxu0 %v2136
        %2899 = vmatprep.subr.bf16.mxu0 %v2131
        %2900 = vmatpush1.bf16.msra.mxu0 %v2130
        %2901 = vmatprep.subr.bf16.mxu0 %v2221
        %2902 = vmatpush2.bf16.msra.mxu0 %v2220
        %2903 = vmatprep.subr.bf16.mxu0 %v2215
        %2904 = vmatpush2.bf16.msra.mxu0 %v2214
        %2905 = vmatprep.subr.bf16.mxu0 %v2209
        %2906 = vmatpush2.bf16.msra.mxu0 %v2208
        %2907 = vmatprep.subr.bf16.mxu0 %v2203
        %2908 = vmatpush2.bf16.msra.mxu0 %v2202
        %2909 = vmatprep.subr.bf16.mxu0 %v2197
        %2910 = vmatpush2.bf16.msra.mxu0 %v2196
        %2911 = vmatprep.subr.bf16.mxu0 %v2191
        %2912 = vmatpush2.bf16.msra.mxu0 %v2190
        %2913 = vmatprep.subr.bf16.mxu0 %v2185
        %2914 = vmatpush2.bf16.msra.mxu0 %v2184
        %2915 = vmatprep.subr.bf16.mxu0 %v2179
        %2916 = vmatpush2.bf16.msra.mxu0 %v2178
        %2917 = vmatprep.mubr.bf16.mxu0 %v805
        %2918 = vmatmul.mubr.bf16.gmra.mxu0 %v804
        %v2919 = vpop.f32.mrf.mxu0
        %v2920 = vadd.f32 %v2837, %v2919
        %v2921 = vpop.f32.mrf.mxu0
        %v2922 = vadd.f32 %v2839, %v2921
        %v2923 = vpop.f32.mrf.mxu0
        %v2924 = vadd.f32 %v2841, %v2923
        %v2925 = vpop.f32.mrf.mxu0
        %v2926 = vadd.f32 %v2843, %v2925
        %2927 = vmatprep.mubr.bf16.mxu0 %v813
        %2928 = vmatmul.mubr.bf16.gmra.mxu0 %v812
        %v2929 = vpop.f32.mrf.mxu0
        %v2930 = vadd.f32 %v2847, %v2929
        %v2931 = vpop.f32.mrf.mxu0
        %v2932 = vadd.f32 %v2849, %v2931
        %v2933 = vpop.f32.mrf.mxu0
        %v2934 = vadd.f32 %v2851, %v2933
        %v2935 = vpop.f32.mrf.mxu0
        %v2936 = vadd.f32 %v2853, %v2935
        %2937 = vmatprep.mubr.bf16.mxu0 %v821
        %2938 = vmatmul.mubr.bf16.gmra.mxu0 %v820
        %v2939 = vpop.f32.mrf.mxu0
        %v2940 = vadd.f32 %v2857, %v2939
        %v2941 = vpop.f32.mrf.mxu0
        %v2942 = vadd.f32 %v2859, %v2941
        %v2943 = vpop.f32.mrf.mxu0
        %v2944 = vadd.f32 %v2861, %v2943
        %v2945 = vpop.f32.mrf.mxu0
        %v2946 = vadd.f32 %v2863, %v2945
        %2947 = vmatprep.mubr.bf16.mxu0 %v829
        %2948 = vmatmul.mubr.bf16.gmra.mxu0 %v828
        %v2949 = vpop.f32.mrf.mxu0
        %v2950 = vadd.f32 %v2867, %v2949
        %v2951 = vpop.f32.mrf.mxu0
        %v2952 = vadd.f32 %v2869, %v2951
        %v2953 = vpop.f32.mrf.mxu0
        %v2954 = vadd.f32 %v2871, %v2953
        %v2955 = vpop.f32.mrf.mxu0
        %v2956 = vadd.f32 %v2873, %v2955
        %2957 = vmatprep.mubr.bf16.mxu0 %v837
        %2958 = vmatmul.mubr.bf16.gmra.mxu0 %v836
        %v2959 = vpop.f32.mrf.mxu0
        %v2960 = vadd.f32 %v2877, %v2959
        %v2961 = vpop.f32.mrf.mxu0
        %v2962 = vadd.f32 %v2879, %v2961
        %v2963 = vpop.f32.mrf.mxu0
        %v2964 = vadd.f32 %v2881, %v2963
        %v2965 = vpop.f32.mrf.mxu0
        %v2966 = vadd.f32 %v2883, %v2965
        %2967 = vdwg.mxu0
        %2968 = vmatprep.subr.bf16.mxu0 %v2269
        %2969 = vmatpush1.bf16.msra.mxu0 %v2268
        %2970 = vmatprep.subr.bf16.mxu0 %v2263
        %2971 = vmatpush1.bf16.msra.mxu0 %v2262
        %2972 = vmatprep.subr.bf16.mxu0 %v2257
        %2973 = vmatpush1.bf16.msra.mxu0 %v2256
        %2974 = vmatprep.subr.bf16.mxu0 %v2251
        %2975 = vmatpush1.bf16.msra.mxu0 %v2250
        %2976 = vmatprep.subr.bf16.mxu0 %v2245
        %2977 = vmatpush1.bf16.msra.mxu0 %v2244
        %2978 = vmatprep.subr.bf16.mxu0 %v2239
        %2979 = vmatpush1.bf16.msra.mxu0 %v2238
        %2980 = vmatprep.subr.bf16.mxu0 %v2233
        %2981 = vmatpush1.bf16.msra.mxu0 %v2232
        %2982 = vmatprep.subr.bf16.mxu0 %v2227
        %2983 = vmatpush1.bf16.msra.mxu0 %v2226
        %2984 = vmatprep.subr.bf16.mxu0 %v2317
        %2985 = vmatpush2.bf16.msra.mxu0 %v2316
        %2986 = vmatprep.subr.bf16.mxu0 %v2311
        %2987 = vmatpush2.bf16.msra.mxu0 %v2310
        %2988 = vmatprep.subr.bf16.mxu0 %v2305
        %2989 = vmatpush2.bf16.msra.mxu0 %v2304
        %2990 = vmatprep.subr.bf16.mxu0 %v2299
        %2991 = vmatpush2.bf16.msra.mxu0 %v2298
        %2992 = vmatprep.subr.bf16.mxu0 %v2293
        %2993 = vmatpush2.bf16.msra.mxu0 %v2292
        %2994 = vmatprep.subr.bf16.mxu0 %v2287
        %2995 = vmatpush2.bf16.msra.mxu0 %v2286
        %2996 = vmatprep.subr.bf16.mxu0 %v2281
        %2997 = vmatpush2.bf16.msra.mxu0 %v2280
        %2998 = vmatprep.subr.bf16.mxu0 %v2275
        %2999 = vmatpush2.bf16.msra.mxu0 %v2274
        %3000 = vmatprep.mubr.bf16.mxu0 %v807
        %3001 = vmatmul.mubr.bf16.gmra.mxu0 %v806
        %v3002 = vpop.f32.mrf.mxu0
        %v3003 = vadd.f32 %v2920, %v3002
        %v3004 = vpop.f32.mrf.mxu0
        %v3005 = vadd.f32 %v2922, %v3004
        %v3006 = vpop.f32.mrf.mxu0
        %v3007 = vadd.f32 %v2924, %v3006
        %v3008 = vpop.f32.mrf.mxu0
        %v3009 = vadd.f32 %v2926, %v3008
        %3010 = vmatprep.mubr.bf16.mxu0 %v815
        %3011 = vmatmul.mubr.bf16.gmra.mxu0 %v814
        %v3012 = vpop.f32.mrf.mxu0
        %v3013 = vadd.f32 %v2930, %v3012
        %v3014 = vpop.f32.mrf.mxu0
        %v3015 = vadd.f32 %v2932, %v3014
        %v3016 = vpop.f32.mrf.mxu0
        %v3017 = vadd.f32 %v2934, %v3016
        %v3018 = vpop.f32.mrf.mxu0
        %v3019 = vadd.f32 %v2936, %v3018
        %3020 = vmatprep.mubr.bf16.mxu0 %v823
        %3021 = vmatmul.mubr.bf16.gmra.mxu0 %v822
        %v3022 = vpop.f32.mrf.mxu0
        %v3023 = vadd.f32 %v2940, %v3022
        %v3024 = vpop.f32.mrf.mxu0
        %v3025 = vadd.f32 %v2942, %v3024
        %v3026 = vpop.f32.mrf.mxu0
        %v3027 = vadd.f32 %v2944, %v3026
        %v3028 = vpop.f32.mrf.mxu0
        %v3029 = vadd.f32 %v2946, %v3028
        %3030 = vmatprep.mubr.bf16.mxu0 %v831
        %3031 = vmatmul.mubr.bf16.gmra.mxu0 %v830
        %v3032 = vpop.f32.mrf.mxu0
        %v3033 = vadd.f32 %v2950, %v3032
        %v3034 = vpop.f32.mrf.mxu0
        %v3035 = vadd.f32 %v2952, %v3034
        %v3036 = vpop.f32.mrf.mxu0
        %v3037 = vadd.f32 %v2954, %v3036
        %v3038 = vpop.f32.mrf.mxu0
        %v3039 = vadd.f32 %v2956, %v3038
        %3040 = vmatprep.mubr.bf16.mxu0 %v839
        %3041 = vmatmul.mubr.bf16.gmra.mxu0 %v838
        %v3042 = vpop.f32.mrf.mxu0
        %v3043 = vadd.f32 %v2960, %v3042
        %v3044 = vpop.f32.mrf.mxu0
        %v3045 = vadd.f32 %v2962, %v3044
        %v3046 = vpop.f32.mrf.mxu0
        %v3047 = vadd.f32 %v2964, %v3046
        %v3048 = vpop.f32.mrf.mxu0
        %v3049 = vadd.f32 %v2966, %v3048
        %3050 = vdwg.mxu0
        %3051 = vmatprep.subr.bf16.mxu0 %v2365
        %3052 = vmatpush1.bf16.msra.mxu0 %v2364
        %3053 = vmatprep.subr.bf16.mxu0 %v2359
        %3054 = vmatpush1.bf16.msra.mxu0 %v2358
        %3055 = vmatprep.subr.bf16.mxu0 %v2353
        %3056 = vmatpush1.bf16.msra.mxu0 %v2352
        %3057 = vmatprep.subr.bf16.mxu0 %v2347
        %3058 = vmatpush1.bf16.msra.mxu0 %v2346
        %3059 = vmatprep.subr.bf16.mxu0 %v2341
        %3060 = vmatpush1.bf16.msra.mxu0 %v2340
        %3061 = vmatprep.subr.bf16.mxu0 %v2335
        %3062 = vmatpush1.bf16.msra.mxu0 %v2334
        %3063 = vmatprep.subr.bf16.mxu0 %v2329
        %3064 = vmatpush1.bf16.msra.mxu0 %v2328
        %3065 = vmatprep.subr.bf16.mxu0 %v2323
        %3066 = vmatpush1.bf16.msra.mxu0 %v2322
        %3067 = vmatprep.subr.bf16.mxu0 %v2413
        %3068 = vmatpush2.bf16.msra.mxu0 %v2412
        %3069 = vmatprep.subr.bf16.mxu0 %v2407
        %3070 = vmatpush2.bf16.msra.mxu0 %v2406
        %3071 = vmatprep.subr.bf16.mxu0 %v2401
        %3072 = vmatpush2.bf16.msra.mxu0 %v2400
        %3073 = vmatprep.subr.bf16.mxu0 %v2395
        %3074 = vmatpush2.bf16.msra.mxu0 %v2394
        %3075 = vmatprep.subr.bf16.mxu0 %v2389
        %3076 = vmatpush2.bf16.msra.mxu0 %v2388
        %3077 = vmatprep.subr.bf16.mxu0 %v2383
        %3078 = vmatpush2.bf16.msra.mxu0 %v2382
        %3079 = vmatprep.subr.bf16.mxu0 %v2377
        %3080 = vmatpush2.bf16.msra.mxu0 %v2376
        %3081 = vmatprep.subr.bf16.mxu0 %v2371
        %3082 = vmatpush2.bf16.msra.mxu0 %v2370
        %3083 = vmatprep.mubr.bf16.mxu0 %v809
        %3084 = vmatmul.mubr.bf16.gmra.mxu0 %v808
        %v3085 = vpop.f32.mrf.mxu0
        %v3086 = vadd.f32 %v3003, %v3085
        %v3087 = vpop.f32.mrf.mxu0
        %v3088 = vadd.f32 %v3005, %v3087
        %v3089 = vpop.f32.mrf.mxu0
        %v3090 = vadd.f32 %v3007, %v3089
        %v3091 = vpop.f32.mrf.mxu0
        %v3092 = vadd.f32 %v3009, %v3091
        %3093 = vmatprep.mubr.bf16.mxu0 %v817
        %3094 = vmatmul.mubr.bf16.gmra.mxu0 %v816
        %v3095 = vpop.f32.mrf.mxu0
        %v3096 = vadd.f32 %v3013, %v3095
        %v3097 = vpop.f32.mrf.mxu0
        %v3098 = vadd.f32 %v3015, %v3097
        %v3099 = vpop.f32.mrf.mxu0
        %v3100 = vadd.f32 %v3017, %v3099
        %v3101 = vpop.f32.mrf.mxu0
        %v3102 = vadd.f32 %v3019, %v3101
        %3103 = vmatprep.mubr.bf16.mxu0 %v825
        %3104 = vmatmul.mubr.bf16.gmra.mxu0 %v824
        %v3105 = vpop.f32.mrf.mxu0
        %v3106 = vadd.f32 %v3023, %v3105
        %v3107 = vpop.f32.mrf.mxu0
        %v3108 = vadd.f32 %v3025, %v3107
        %v3109 = vpop.f32.mrf.mxu0
        %v3110 = vadd.f32 %v3027, %v3109
        %v3111 = vpop.f32.mrf.mxu0
        %v3112 = vadd.f32 %v3029, %v3111
        %3113 = vmatprep.mubr.bf16.mxu0 %v833
        %3114 = vmatmul.mubr.bf16.gmra.mxu0 %v832
        %v3115 = vpop.f32.mrf.mxu0
        %v3116 = vadd.f32 %v3033, %v3115
        %v3117 = vpop.f32.mrf.mxu0
        %v3118 = vadd.f32 %v3035, %v3117
        %v3119 = vpop.f32.mrf.mxu0
        %v3120 = vadd.f32 %v3037, %v3119
        %v3121 = vpop.f32.mrf.mxu0
        %v3122 = vadd.f32 %v3039, %v3121
        %3123 = vmatprep.mubr.bf16.mxu0 %v841
        %3124 = vmatmul.mubr.bf16.gmra.mxu0 %v840
        %v3125 = vpop.f32.mrf.mxu0
        %v3126 = vadd.f32 %v3043, %v3125
        %v3127 = vpop.f32.mrf.mxu0
        %v3128 = vadd.f32 %v3045, %v3127
        %v3129 = vpop.f32.mrf.mxu0
        %v3130 = vadd.f32 %v3047, %v3129
        %v3131 = vpop.f32.mrf.mxu0
        %v3132 = vadd.f32 %v3049, %v3131
        %3133 = vdwg.mxu0
        %3134 = vmatprep.subr.bf16.mxu0 %v2079
        %3135 = vmatpush1.bf16.msra.mxu0 %v2078
        %3136 = vmatprep.subr.bf16.mxu0 %v2073
        %3137 = vmatpush1.bf16.msra.mxu0 %v2072
        %3138 = vmatprep.subr.bf16.mxu0 %v2067
        %3139 = vmatpush1.bf16.msra.mxu0 %v2066
        %3140 = vmatprep.subr.bf16.mxu0 %v2061
        %3141 = vmatpush1.bf16.msra.mxu0 %v2060
        %3142 = vmatprep.subr.bf16.mxu0 %v2055
        %3143 = vmatpush1.bf16.msra.mxu0 %v2054
        %3144 = vmatprep.subr.bf16.mxu0 %v2049
        %3145 = vmatpush1.bf16.msra.mxu0 %v2048
        %3146 = vmatprep.subr.bf16.mxu0 %v2043
        %3147 = vmatpush1.bf16.msra.mxu0 %v2042
        %3148 = vmatprep.subr.bf16.mxu0 %v2037
        %3149 = vmatpush1.bf16.msra.mxu0 %v2036
        %3150 = vmatprep.subr.bf16.mxu0 %v2127
        %3151 = vmatpush2.bf16.msra.mxu0 %v2126
        %3152 = vmatprep.subr.bf16.mxu0 %v2121
        %3153 = vmatpush2.bf16.msra.mxu0 %v2120
        %3154 = vmatprep.subr.bf16.mxu0 %v2115
        %3155 = vmatpush2.bf16.msra.mxu0 %v2114
        %3156 = vmatprep.subr.bf16.mxu0 %v2109
        %3157 = vmatpush2.bf16.msra.mxu0 %v2108
        %3158 = vmatprep.subr.bf16.mxu0 %v2103
        %3159 = vmatpush2.bf16.msra.mxu0 %v2102
        %3160 = vmatprep.subr.bf16.mxu0 %v2097
        %3161 = vmatpush2.bf16.msra.mxu0 %v2096
        %3162 = vmatprep.subr.bf16.mxu0 %v2091
        %3163 = vmatpush2.bf16.msra.mxu0 %v2090
        %3164 = vmatprep.subr.bf16.mxu0 %v2085
        %3165 = vmatpush2.bf16.msra.mxu0 %v2084
        %3166 = vmatprep.mubr.bf16.mxu0 %v803
        %3167 = vmatmul.mubr.bf16.gmra.mxu0 %v802
        %v3168 = vpop.f32.mrf.mxu0
        %v3169 = vadd.f32 0.0, %v3168
        %v3170 = vpop.f32.mrf.mxu0
        %v3171 = vadd.f32 0.0, %v3170
        %v3172 = vpop.f32.mrf.mxu0
        %v3173 = vadd.f32 0.0, %v3172
        %v3174 = vpop.f32.mrf.mxu0
        %v3175 = vadd.f32 0.0, %v3174
        %3176 = vmatprep.mubr.bf16.mxu0 %v811
        %3177 = vmatmul.mubr.bf16.gmra.mxu0 %v810
        %v3178 = vpop.f32.mrf.mxu0
        %v3179 = vadd.f32 0.0, %v3178
        %v3180 = vpop.f32.mrf.mxu0
        %v3181 = vadd.f32 0.0, %v3180
        %v3182 = vpop.f32.mrf.mxu0
        %v3183 = vadd.f32 0.0, %v3182
        %v3184 = vpop.f32.mrf.mxu0
        %v3185 = vadd.f32 0.0, %v3184
        %3186 = vmatprep.mubr.bf16.mxu0 %v819
        %3187 = vmatmul.mubr.bf16.gmra.mxu0 %v818
        %v3188 = vpop.f32.mrf.mxu0
        %v3189 = vadd.f32 0.0, %v3188
        %v3190 = vpop.f32.mrf.mxu0
        %v3191 = vadd.f32 0.0, %v3190
        %v3192 = vpop.f32.mrf.mxu0
        %v3193 = vadd.f32 0.0, %v3192
        %v3194 = vpop.f32.mrf.mxu0
        %v3195 = vadd.f32 0.0, %v3194
        %3196 = vmatprep.mubr.bf16.mxu0 %v827
        %3197 = vmatmul.mubr.bf16.gmra.mxu0 %v826
        %v3198 = vpop.f32.mrf.mxu0
        %v3199 = vadd.f32 0.0, %v3198
        %v3200 = vpop.f32.mrf.mxu0
        %v3201 = vadd.f32 0.0, %v3200
        %v3202 = vpop.f32.mrf.mxu0
        %v3203 = vadd.f32 0.0, %v3202
        %v3204 = vpop.f32.mrf.mxu0
        %v3205 = vadd.f32 0.0, %v3204
        %3206 = vmatprep.mubr.bf16.mxu0 %v835
        %3207 = vmatmul.mubr.bf16.gmra.mxu0 %v834
        %v3208 = vpop.f32.mrf.mxu0
        %v3209 = vadd.f32 0.0, %v3208
        %v3210 = vpop.f32.mrf.mxu0
        %v3211 = vadd.f32 0.0, %v3210
        %v3212 = vpop.f32.mrf.mxu0
        %v3213 = vadd.f32 0.0, %v3212
        %v3214 = vpop.f32.mrf.mxu0
        %v3215 = vadd.f32 0.0, %v3214
        %3216 = vdwg.mxu0
        %3217 = vmatprep.subr.bf16.mxu0 %v2175
        %3218 = vmatpush1.bf16.msra.mxu0 %v2174
        %3219 = vmatprep.subr.bf16.mxu0 %v2169
        %3220 = vmatpush1.bf16.msra.mxu0 %v2168
        %3221 = vmatprep.subr.bf16.mxu0 %v2163
        %3222 = vmatpush1.bf16.msra.mxu0 %v2162
        %3223 = vmatprep.subr.bf16.mxu0 %v2157
        %3224 = vmatpush1.bf16.msra.mxu0 %v2156
        %3225 = vmatprep.subr.bf16.mxu0 %v2151
        %3226 = vmatpush1.bf16.msra.mxu0 %v2150
        %3227 = vmatprep.subr.bf16.mxu0 %v2145
        %3228 = vmatpush1.bf16.msra.mxu0 %v2144
        %3229 = vmatprep.subr.bf16.mxu0 %v2139
        %3230 = vmatpush1.bf16.msra.mxu0 %v2138
        %3231 = vmatprep.subr.bf16.mxu0 %v2133
        %3232 = vmatpush1.bf16.msra.mxu0 %v2132
        %3233 = vmatprep.subr.bf16.mxu0 %v2223
        %3234 = vmatpush2.bf16.msra.mxu0 %v2222
        %3235 = vmatprep.subr.bf16.mxu0 %v2217
        %3236 = vmatpush2.bf16.msra.mxu0 %v2216
        %3237 = vmatprep.subr.bf16.mxu0 %v2211
        %3238 = vmatpush2.bf16.msra.mxu0 %v2210
        %3239 = vmatprep.subr.bf16.mxu0 %v2205
        %3240 = vmatpush2.bf16.msra.mxu0 %v2204
        %3241 = vmatprep.subr.bf16.mxu0 %v2199
        %3242 = vmatpush2.bf16.msra.mxu0 %v2198
        %3243 = vmatprep.subr.bf16.mxu0 %v2193
        %3244 = vmatpush2.bf16.msra.mxu0 %v2192
        %3245 = vmatprep.subr.bf16.mxu0 %v2187
        %3246 = vmatpush2.bf16.msra.mxu0 %v2186
        %3247 = vmatprep.subr.bf16.mxu0 %v2181
        %3248 = vmatpush2.bf16.msra.mxu0 %v2180
        %3249 = vmatprep.mubr.bf16.mxu0 %v805
        %3250 = vmatmul.mubr.bf16.gmra.mxu0 %v804
        %v3251 = vpop.f32.mrf.mxu0
        %v3252 = vadd.f32 %v3169, %v3251
        %v3253 = vpop.f32.mrf.mxu0
        %v3254 = vadd.f32 %v3171, %v3253
        %v3255 = vpop.f32.mrf.mxu0
        %v3256 = vadd.f32 %v3173, %v3255
        %v3257 = vpop.f32.mrf.mxu0
        %v3258 = vadd.f32 %v3175, %v3257
        %3259 = vmatprep.mubr.bf16.mxu0 %v813
        %3260 = vmatmul.mubr.bf16.gmra.mxu0 %v812
        %v3261 = vpop.f32.mrf.mxu0
        %v3262 = vadd.f32 %v3179, %v3261
        %v3263 = vpop.f32.mrf.mxu0
        %v3264 = vadd.f32 %v3181, %v3263
        %v3265 = vpop.f32.mrf.mxu0
        %v3266 = vadd.f32 %v3183, %v3265
        %v3267 = vpop.f32.mrf.mxu0
        %v3268 = vadd.f32 %v3185, %v3267
        %3269 = vmatprep.mubr.bf16.mxu0 %v821
        %3270 = vmatmul.mubr.bf16.gmra.mxu0 %v820
        %v3271 = vpop.f32.mrf.mxu0
        %v3272 = vadd.f32 %v3189, %v3271
        %v3273 = vpop.f32.mrf.mxu0
        %v3274 = vadd.f32 %v3191, %v3273
        %v3275 = vpop.f32.mrf.mxu0
        %v3276 = vadd.f32 %v3193, %v3275
        %v3277 = vpop.f32.mrf.mxu0
        %v3278 = vadd.f32 %v3195, %v3277
        %3279 = vmatprep.mubr.bf16.mxu0 %v829
        %3280 = vmatmul.mubr.bf16.gmra.mxu0 %v828
        %v3281 = vpop.f32.mrf.mxu0
        %v3282 = vadd.f32 %v3199, %v3281
        %v3283 = vpop.f32.mrf.mxu0
        %v3284 = vadd.f32 %v3201, %v3283
        %v3285 = vpop.f32.mrf.mxu0
        %v3286 = vadd.f32 %v3203, %v3285
        %v3287 = vpop.f32.mrf.mxu0
        %v3288 = vadd.f32 %v3205, %v3287
        %3289 = vmatprep.mubr.bf16.mxu0 %v837
        %3290 = vmatmul.mubr.bf16.gmra.mxu0 %v836
        %v3291 = vpop.f32.mrf.mxu0
        %v3292 = vadd.f32 %v3209, %v3291
        %v3293 = vpop.f32.mrf.mxu0
        %v3294 = vadd.f32 %v3211, %v3293
        %v3295 = vpop.f32.mrf.mxu0
        %v3296 = vadd.f32 %v3213, %v3295
        %v3297 = vpop.f32.mrf.mxu0
        %v3298 = vadd.f32 %v3215, %v3297
        %3299 = vdwg.mxu0
        %3300 = vmatprep.subr.bf16.mxu0 %v2271
        %3301 = vmatpush1.bf16.msra.mxu0 %v2270
        %3302 = vmatprep.subr.bf16.mxu0 %v2265
        %3303 = vmatpush1.bf16.msra.mxu0 %v2264
        %3304 = vmatprep.subr.bf16.mxu0 %v2259
        %3305 = vmatpush1.bf16.msra.mxu0 %v2258
        %3306 = vmatprep.subr.bf16.mxu0 %v2253
        %3307 = vmatpush1.bf16.msra.mxu0 %v2252
        %3308 = vmatprep.subr.bf16.mxu0 %v2247
        %3309 = vmatpush1.bf16.msra.mxu0 %v2246
        %3310 = vmatprep.subr.bf16.mxu0 %v2241
        %3311 = vmatpush1.bf16.msra.mxu0 %v2240
        %3312 = vmatprep.subr.bf16.mxu0 %v2235
        %3313 = vmatpush1.bf16.msra.mxu0 %v2234
        %3314 = vmatprep.subr.bf16.mxu0 %v2229
        %3315 = vmatpush1.bf16.msra.mxu0 %v2228
        %3316 = vmatprep.subr.bf16.mxu0 %v2319
        %3317 = vmatpush2.bf16.msra.mxu0 %v2318
        %3318 = vmatprep.subr.bf16.mxu0 %v2313
        %3319 = vmatpush2.bf16.msra.mxu0 %v2312
        %3320 = vmatprep.subr.bf16.mxu0 %v2307
        %3321 = vmatpush2.bf16.msra.mxu0 %v2306
        %3322 = vmatprep.subr.bf16.mxu0 %v2301
        %3323 = vmatpush2.bf16.msra.mxu0 %v2300
        %3324 = vmatprep.subr.bf16.mxu0 %v2295
        %3325 = vmatpush2.bf16.msra.mxu0 %v2294
        %3326 = vmatprep.subr.bf16.mxu0 %v2289
        %3327 = vmatpush2.bf16.msra.mxu0 %v2288
        %3328 = vmatprep.subr.bf16.mxu0 %v2283
        %3329 = vmatpush2.bf16.msra.mxu0 %v2282
        %3330 = vmatprep.subr.bf16.mxu0 %v2277
        %3331 = vmatpush2.bf16.msra.mxu0 %v2276
        %3332 = vmatprep.mubr.bf16.mxu0 %v807
        %3333 = vmatmul.mubr.bf16.gmra.mxu0 %v806
        %v3334 = vpop.f32.mrf.mxu0
        %v3335 = vadd.f32 %v3252, %v3334
        %v3336 = vpop.f32.mrf.mxu0
        %v3337 = vadd.f32 %v3254, %v3336
        %v3338 = vpop.f32.mrf.mxu0
        %v3339 = vadd.f32 %v3256, %v3338
        %v3340 = vpop.f32.mrf.mxu0
        %v3341 = vadd.f32 %v3258, %v3340
        %3342 = vmatprep.mubr.bf16.mxu0 %v815
        %3343 = vmatmul.mubr.bf16.gmra.mxu0 %v814
        %v3344 = vpop.f32.mrf.mxu0
        %v3345 = vadd.f32 %v3262, %v3344
        %v3346 = vpop.f32.mrf.mxu0
        %v3347 = vadd.f32 %v3264, %v3346
        %v3348 = vpop.f32.mrf.mxu0
        %v3349 = vadd.f32 %v3266, %v3348
        %v3350 = vpop.f32.mrf.mxu0
        %v3351 = vadd.f32 %v3268, %v3350
        %3352 = vmatprep.mubr.bf16.mxu0 %v823
        %3353 = vmatmul.mubr.bf16.gmra.mxu0 %v822
        %v3354 = vpop.f32.mrf.mxu0
        %v3355 = vadd.f32 %v3272, %v3354
        %v3356 = vpop.f32.mrf.mxu0
        %v3357 = vadd.f32 %v3274, %v3356
        %v3358 = vpop.f32.mrf.mxu0
        %v3359 = vadd.f32 %v3276, %v3358
        %v3360 = vpop.f32.mrf.mxu0
        %v3361 = vadd.f32 %v3278, %v3360
        %3362 = vmatprep.mubr.bf16.mxu0 %v831
        %3363 = vmatmul.mubr.bf16.gmra.mxu0 %v830
        %v3364 = vpop.f32.mrf.mxu0
        %v3365 = vadd.f32 %v3282, %v3364
        %v3366 = vpop.f32.mrf.mxu0
        %v3367 = vadd.f32 %v3284, %v3366
        %v3368 = vpop.f32.mrf.mxu0
        %v3369 = vadd.f32 %v3286, %v3368
        %v3370 = vpop.f32.mrf.mxu0
        %v3371 = vadd.f32 %v3288, %v3370
        %3372 = vmatprep.mubr.bf16.mxu0 %v839
        %3373 = vmatmul.mubr.bf16.gmra.mxu0 %v838
        %v3374 = vpop.f32.mrf.mxu0
        %v3375 = vadd.f32 %v3292, %v3374
        %v3376 = vpop.f32.mrf.mxu0
        %v3377 = vadd.f32 %v3294, %v3376
        %v3378 = vpop.f32.mrf.mxu0
        %v3379 = vadd.f32 %v3296, %v3378
        %v3380 = vpop.f32.mrf.mxu0
        %v3381 = vadd.f32 %v3298, %v3380
        %3382 = vdwg.mxu0
        %3383 = vmatprep.subr.bf16.mxu0 %v2367
        %3384 = vmatpush1.bf16.msra.mxu0 %v2366
        %3385 = vmatprep.subr.bf16.mxu0 %v2361
        %3386 = vmatpush1.bf16.msra.mxu0 %v2360
        %3387 = vmatprep.subr.bf16.mxu0 %v2355
        %3388 = vmatpush1.bf16.msra.mxu0 %v2354
        %3389 = vmatprep.subr.bf16.mxu0 %v2349
        %3390 = vmatpush1.bf16.msra.mxu0 %v2348
        %3391 = vmatprep.subr.bf16.mxu0 %v2343
        %3392 = vmatpush1.bf16.msra.mxu0 %v2342
        %3393 = vmatprep.subr.bf16.mxu0 %v2337
        %3394 = vmatpush1.bf16.msra.mxu0 %v2336
        %3395 = vmatprep.subr.bf16.mxu0 %v2331
        %3396 = vmatpush1.bf16.msra.mxu0 %v2330
        %3397 = vmatprep.subr.bf16.mxu0 %v2325
        %3398 = vmatpush1.bf16.msra.mxu0 %v2324
        %3399 = vmatprep.subr.bf16.mxu0 %v2415
        %3400 = vmatpush2.bf16.msra.mxu0 %v2414
        %3401 = vmatprep.subr.bf16.mxu0 %v2409
        %3402 = vmatpush2.bf16.msra.mxu0 %v2408
        %3403 = vmatprep.subr.bf16.mxu0 %v2403
        %3404 = vmatpush2.bf16.msra.mxu0 %v2402
        %3405 = vmatprep.subr.bf16.mxu0 %v2397
        %3406 = vmatpush2.bf16.msra.mxu0 %v2396
        %3407 = vmatprep.subr.bf16.mxu0 %v2391
        %3408 = vmatpush2.bf16.msra.mxu0 %v2390
        %3409 = vmatprep.subr.bf16.mxu0 %v2385
        %3410 = vmatpush2.bf16.msra.mxu0 %v2384
        %3411 = vmatprep.subr.bf16.mxu0 %v2379
        %3412 = vmatpush2.bf16.msra.mxu0 %v2378
        %3413 = vmatprep.subr.bf16.mxu0 %v2373
        %3414 = vmatpush2.bf16.msra.mxu0 %v2372
        %3415 = vmatprep.mubr.bf16.mxu0 %v809
        %3416 = vmatmul.mubr.bf16.gmra.mxu0 %v808
        %v3417 = vpop.f32.mrf.mxu0
        %v3418 = vadd.f32 %v3335, %v3417
        %v3419 = vpop.f32.mrf.mxu0
        %v3420 = vadd.f32 %v3337, %v3419
        %v3421 = vpop.f32.mrf.mxu0
        %v3422 = vadd.f32 %v3339, %v3421
        %v3423 = vpop.f32.mrf.mxu0
        %v3424 = vadd.f32 %v3341, %v3423
        %3425 = vmatprep.mubr.bf16.mxu0 %v817
        %3426 = vmatmul.mubr.bf16.gmra.mxu0 %v816
        %v3427 = vpop.f32.mrf.mxu0
        %v3428 = vadd.f32 %v3345, %v3427
        %v3429 = vpop.f32.mrf.mxu0
        %v3430 = vadd.f32 %v3347, %v3429
        %v3431 = vpop.f32.mrf.mxu0
        %v3432 = vadd.f32 %v3349, %v3431
        %v3433 = vpop.f32.mrf.mxu0
        %v3434 = vadd.f32 %v3351, %v3433
        %3435 = vmatprep.mubr.bf16.mxu0 %v825
        %3436 = vmatmul.mubr.bf16.gmra.mxu0 %v824
        %v3437 = vpop.f32.mrf.mxu0
        %v3438 = vadd.f32 %v3355, %v3437
        %v3439 = vpop.f32.mrf.mxu0
        %v3440 = vadd.f32 %v3357, %v3439
        %v3441 = vpop.f32.mrf.mxu0
        %v3442 = vadd.f32 %v3359, %v3441
        %v3443 = vpop.f32.mrf.mxu0
        %v3444 = vadd.f32 %v3361, %v3443
        %3445 = vmatprep.mubr.bf16.mxu0 %v833
        %3446 = vmatmul.mubr.bf16.gmra.mxu0 %v832
        %v3447 = vpop.f32.mrf.mxu0
        %v3448 = vadd.f32 %v3365, %v3447
        %v3449 = vpop.f32.mrf.mxu0
        %v3450 = vadd.f32 %v3367, %v3449
        %v3451 = vpop.f32.mrf.mxu0
        %v3452 = vadd.f32 %v3369, %v3451
        %v3453 = vpop.f32.mrf.mxu0
        %v3454 = vadd.f32 %v3371, %v3453
        %3455 = vmatprep.mubr.bf16.mxu0 %v841
        %3456 = vmatmul.mubr.bf16.gmra.mxu0 %v840
        %v3457 = vpop.f32.mrf.mxu0
        %v3458 = vadd.f32 %v3375, %v3457
        %v3459 = vpop.f32.mrf.mxu0
        %v3460 = vadd.f32 %v3377, %v3459
        %v3461 = vpop.f32.mrf.mxu0
        %v3462 = vadd.f32 %v3379, %v3461
        %v3463 = vpop.f32.mrf.mxu0
        %v3464 = vadd.f32 %v3381, %v3463
        %3465 = vdwg.mxu0
        %3466 = vmatprep.subr.bf16.mxu0 %v2081
        %3467 = vmatpush1.bf16.msra.mxu0 %v2080
        %3468 = vmatprep.subr.bf16.mxu0 %v2075
        %3469 = vmatpush1.bf16.msra.mxu0 %v2074
        %3470 = vmatprep.subr.bf16.mxu0 %v2069
        %3471 = vmatpush1.bf16.msra.mxu0 %v2068
        %3472 = vmatprep.subr.bf16.mxu0 %v2063
        %3473 = vmatpush1.bf16.msra.mxu0 %v2062
        %3474 = vmatprep.subr.bf16.mxu0 %v2057
        %3475 = vmatpush1.bf16.msra.mxu0 %v2056
        %3476 = vmatprep.subr.bf16.mxu0 %v2051
        %3477 = vmatpush1.bf16.msra.mxu0 %v2050
        %3478 = vmatprep.subr.bf16.mxu0 %v2045
        %3479 = vmatpush1.bf16.msra.mxu0 %v2044
        %3480 = vmatprep.subr.bf16.mxu0 %v2039
        %3481 = vmatpush1.bf16.msra.mxu0 %v2038
        %3482 = vmatprep.subr.bf16.mxu0 %v2129
        %3483 = vmatpush2.bf16.msra.mxu0 %v2128
        %3484 = vmatprep.subr.bf16.mxu0 %v2123
        %3485 = vmatpush2.bf16.msra.mxu0 %v2122
        %3486 = vmatprep.subr.bf16.mxu0 %v2117
        %3487 = vmatpush2.bf16.msra.mxu0 %v2116
        %3488 = vmatprep.subr.bf16.mxu0 %v2111
        %3489 = vmatpush2.bf16.msra.mxu0 %v2110
        %3490 = vmatprep.subr.bf16.mxu0 %v2105
        %3491 = vmatpush2.bf16.msra.mxu0 %v2104
        %3492 = vmatprep.subr.bf16.mxu0 %v2099
        %3493 = vmatpush2.bf16.msra.mxu0 %v2098
        %3494 = vmatprep.subr.bf16.mxu0 %v2093
        %3495 = vmatpush2.bf16.msra.mxu0 %v2092
        %3496 = vmatprep.subr.bf16.mxu0 %v2087
        %3497 = vmatpush2.bf16.msra.mxu0 %v2086
        %3498 = vmatprep.mubr.bf16.mxu0 %v803
        %3499 = vmatmul.mubr.bf16.gmra.mxu0 %v802
        %v3500 = vpop.f32.mrf.mxu0
        %v3501 = vadd.f32 0.0, %v3500
        %v3502 = vpop.f32.mrf.mxu0
        %v3503 = vadd.f32 0.0, %v3502
        %v3504 = vpop.f32.mrf.mxu0
        %v3505 = vadd.f32 0.0, %v3504
        %v3506 = vpop.f32.mrf.mxu0
        %v3507 = vadd.f32 0.0, %v3506
        %3508 = vmatprep.mubr.bf16.mxu0 %v811
        %3509 = vmatmul.mubr.bf16.gmra.mxu0 %v810
        %v3510 = vpop.f32.mrf.mxu0
        %v3511 = vadd.f32 0.0, %v3510
        %v3512 = vpop.f32.mrf.mxu0
        %v3513 = vadd.f32 0.0, %v3512
        %v3514 = vpop.f32.mrf.mxu0
        %v3515 = vadd.f32 0.0, %v3514
        %v3516 = vpop.f32.mrf.mxu0
        %v3517 = vadd.f32 0.0, %v3516
        %3518 = vmatprep.mubr.bf16.mxu0 %v819
        %3519 = vmatmul.mubr.bf16.gmra.mxu0 %v818
        %v3520 = vpop.f32.mrf.mxu0
        %v3521 = vadd.f32 0.0, %v3520
        %v3522 = vpop.f32.mrf.mxu0
        %v3523 = vadd.f32 0.0, %v3522
        %v3524 = vpop.f32.mrf.mxu0
        %v3525 = vadd.f32 0.0, %v3524
        %v3526 = vpop.f32.mrf.mxu0
        %v3527 = vadd.f32 0.0, %v3526
        %3528 = vmatprep.mubr.bf16.mxu0 %v827
        %3529 = vmatmul.mubr.bf16.gmra.mxu0 %v826
        %v3530 = vpop.f32.mrf.mxu0
        %v3531 = vadd.f32 0.0, %v3530
        %v3532 = vpop.f32.mrf.mxu0
        %v3533 = vadd.f32 0.0, %v3532
        %v3534 = vpop.f32.mrf.mxu0
        %v3535 = vadd.f32 0.0, %v3534
        %v3536 = vpop.f32.mrf.mxu0
        %v3537 = vadd.f32 0.0, %v3536
        %3538 = vmatprep.mubr.bf16.mxu0 %v835
        %3539 = vmatmul.mubr.bf16.gmra.mxu0 %v834
        %v3540 = vpop.f32.mrf.mxu0
        %v3541 = vadd.f32 0.0, %v3540
        %v3542 = vpop.f32.mrf.mxu0
        %v3543 = vadd.f32 0.0, %v3542
        %v3544 = vpop.f32.mrf.mxu0
        %v3545 = vadd.f32 0.0, %v3544
        %v3546 = vpop.f32.mrf.mxu0
        %v3547 = vadd.f32 0.0, %v3546
        %3548 = vdwg.mxu0
        %3549 = vmatprep.subr.bf16.mxu0 %v2177
        %3550 = vmatpush1.bf16.msra.mxu0 %v2176
        %3551 = vmatprep.subr.bf16.mxu0 %v2171
        %3552 = vmatpush1.bf16.msra.mxu0 %v2170
        %3553 = vmatprep.subr.bf16.mxu0 %v2165
        %3554 = vmatpush1.bf16.msra.mxu0 %v2164
        %3555 = vmatprep.subr.bf16.mxu0 %v2159
        %3556 = vmatpush1.bf16.msra.mxu0 %v2158
        %3557 = vmatprep.subr.bf16.mxu0 %v2153
        %3558 = vmatpush1.bf16.msra.mxu0 %v2152
        %3559 = vmatprep.subr.bf16.mxu0 %v2147
        %3560 = vmatpush1.bf16.msra.mxu0 %v2146
        %3561 = vmatprep.subr.bf16.mxu0 %v2141
        %3562 = vmatpush1.bf16.msra.mxu0 %v2140
        %3563 = vmatprep.subr.bf16.mxu0 %v2135
        %3564 = vmatpush1.bf16.msra.mxu0 %v2134
        %3565 = vmatprep.subr.bf16.mxu0 %v2225
        %3566 = vmatpush2.bf16.msra.mxu0 %v2224
        %3567 = vmatprep.subr.bf16.mxu0 %v2219
        %3568 = vmatpush2.bf16.msra.mxu0 %v2218
        %3569 = vmatprep.subr.bf16.mxu0 %v2213
        %3570 = vmatpush2.bf16.msra.mxu0 %v2212
        %3571 = vmatprep.subr.bf16.mxu0 %v2207
        %3572 = vmatpush2.bf16.msra.mxu0 %v2206
        %3573 = vmatprep.subr.bf16.mxu0 %v2201
        %3574 = vmatpush2.bf16.msra.mxu0 %v2200
        %3575 = vmatprep.subr.bf16.mxu0 %v2195
        %3576 = vmatpush2.bf16.msra.mxu0 %v2194
        %3577 = vmatprep.subr.bf16.mxu0 %v2189
        %3578 = vmatpush2.bf16.msra.mxu0 %v2188
        %3579 = vmatprep.subr.bf16.mxu0 %v2183
        %3580 = vmatpush2.bf16.msra.mxu0 %v2182
        %3581 = vmatprep.mubr.bf16.mxu0 %v805
        %3582 = vmatmul.mubr.bf16.gmra.mxu0 %v804
        %v3583 = vpop.f32.mrf.mxu0
        %v3584 = vadd.f32 %v3501, %v3583
        %v3585 = vpop.f32.mrf.mxu0
        %v3586 = vadd.f32 %v3503, %v3585
        %v3587 = vpop.f32.mrf.mxu0
        %v3588 = vadd.f32 %v3505, %v3587
        %v3589 = vpop.f32.mrf.mxu0
        %v3590 = vadd.f32 %v3507, %v3589
        %3591 = vmatprep.mubr.bf16.mxu0 %v813
        %3592 = vmatmul.mubr.bf16.gmra.mxu0 %v812
        %v3593 = vpop.f32.mrf.mxu0
        %v3594 = vadd.f32 %v3511, %v3593
        %v3595 = vpop.f32.mrf.mxu0
        %v3596 = vadd.f32 %v3513, %v3595
        %v3597 = vpop.f32.mrf.mxu0
        %v3598 = vadd.f32 %v3515, %v3597
        %v3599 = vpop.f32.mrf.mxu0
        %v3600 = vadd.f32 %v3517, %v3599
        %3601 = vmatprep.mubr.bf16.mxu0 %v821
        %3602 = vmatmul.mubr.bf16.gmra.mxu0 %v820
        %v3603 = vpop.f32.mrf.mxu0
        %v3604 = vadd.f32 %v3521, %v3603
        %v3605 = vpop.f32.mrf.mxu0
        %v3606 = vadd.f32 %v3523, %v3605
        %v3607 = vpop.f32.mrf.mxu0
        %v3608 = vadd.f32 %v3525, %v3607
        %v3609 = vpop.f32.mrf.mxu0
        %v3610 = vadd.f32 %v3527, %v3609
        %3611 = vmatprep.mubr.bf16.mxu0 %v829
        %3612 = vmatmul.mubr.bf16.gmra.mxu0 %v828
        %v3613 = vpop.f32.mrf.mxu0
        %v3614 = vadd.f32 %v3531, %v3613
        %v3615 = vpop.f32.mrf.mxu0
        %v3616 = vadd.f32 %v3533, %v3615
        %v3617 = vpop.f32.mrf.mxu0
        %v3618 = vadd.f32 %v3535, %v3617
        %v3619 = vpop.f32.mrf.mxu0
        %v3620 = vadd.f32 %v3537, %v3619
        %3621 = vmatprep.mubr.bf16.mxu0 %v837
        %3622 = vmatmul.mubr.bf16.gmra.mxu0 %v836
        %v3623 = vpop.f32.mrf.mxu0
        %v3624 = vadd.f32 %v3541, %v3623
        %v3625 = vpop.f32.mrf.mxu0
        %v3626 = vadd.f32 %v3543, %v3625
        %v3627 = vpop.f32.mrf.mxu0
        %v3628 = vadd.f32 %v3545, %v3627
        %v3629 = vpop.f32.mrf.mxu0
        %v3630 = vadd.f32 %v3547, %v3629
        %3631 = vdwg.mxu0
        %3632 = vmatprep.subr.bf16.mxu0 %v2273
        %3633 = vmatpush1.bf16.msra.mxu0 %v2272
        %3634 = vmatprep.subr.bf16.mxu0 %v2267
        %3635 = vmatpush1.bf16.msra.mxu0 %v2266
        %3636 = vmatprep.subr.bf16.mxu0 %v2261
        %3637 = vmatpush1.bf16.msra.mxu0 %v2260
        %3638 = vmatprep.subr.bf16.mxu0 %v2255
        %3639 = vmatpush1.bf16.msra.mxu0 %v2254
        %3640 = vmatprep.subr.bf16.mxu0 %v2249
        %3641 = vmatpush1.bf16.msra.mxu0 %v2248
        %3642 = vmatprep.subr.bf16.mxu0 %v2243
        %3643 = vmatpush1.bf16.msra.mxu0 %v2242
        %3644 = vmatprep.subr.bf16.mxu0 %v2237
        %3645 = vmatpush1.bf16.msra.mxu0 %v2236
        %3646 = vmatprep.subr.bf16.mxu0 %v2231
        %3647 = vmatpush1.bf16.msra.mxu0 %v2230
        %3648 = vmatprep.subr.bf16.mxu0 %v2321
        %3649 = vmatpush2.bf16.msra.mxu0 %v2320
        %3650 = vmatprep.subr.bf16.mxu0 %v2315
        %3651 = vmatpush2.bf16.msra.mxu0 %v2314
        %3652 = vmatprep.subr.bf16.mxu0 %v2309
        %3653 = vmatpush2.bf16.msra.mxu0 %v2308
        %3654 = vmatprep.subr.bf16.mxu0 %v2303
        %3655 = vmatpush2.bf16.msra.mxu0 %v2302
        %3656 = vmatprep.subr.bf16.mxu0 %v2297
        %3657 = vmatpush2.bf16.msra.mxu0 %v2296
        %3658 = vmatprep.subr.bf16.mxu0 %v2291
        %3659 = vmatpush2.bf16.msra.mxu0 %v2290
        %3660 = vmatprep.subr.bf16.mxu0 %v2285
        %3661 = vmatpush2.bf16.msra.mxu0 %v2284
        %3662 = vmatprep.subr.bf16.mxu0 %v2279
        %3663 = vmatpush2.bf16.msra.mxu0 %v2278
        %3664 = vmatprep.mubr.bf16.mxu0 %v807
        %3665 = vmatmul.mubr.bf16.gmra.mxu0 %v806
        %v3666 = vpop.f32.mrf.mxu0
        %v3667 = vadd.f32 %v3584, %v3666
        %v3668 = vpop.f32.mrf.mxu0
        %v3669 = vadd.f32 %v3586, %v3668
        %v3670 = vpop.f32.mrf.mxu0
        %v3671 = vadd.f32 %v3588, %v3670
        %v3672 = vpop.f32.mrf.mxu0
        %v3673 = vadd.f32 %v3590, %v3672
        %3674 = vmatprep.mubr.bf16.mxu0 %v815
        %3675 = vmatmul.mubr.bf16.gmra.mxu0 %v814
        %v3676 = vpop.f32.mrf.mxu0
        %v3677 = vadd.f32 %v3594, %v3676
        %v3678 = vpop.f32.mrf.mxu0
        %v3679 = vadd.f32 %v3596, %v3678
        %v3680 = vpop.f32.mrf.mxu0
        %v3681 = vadd.f32 %v3598, %v3680
        %v3682 = vpop.f32.mrf.mxu0
        %v3683 = vadd.f32 %v3600, %v3682
        %3684 = vmatprep.mubr.bf16.mxu0 %v823
        %3685 = vmatmul.mubr.bf16.gmra.mxu0 %v822
        %v3686 = vpop.f32.mrf.mxu0
        %v3687 = vadd.f32 %v3604, %v3686
        %v3688 = vpop.f32.mrf.mxu0
        %v3689 = vadd.f32 %v3606, %v3688
        %v3690 = vpop.f32.mrf.mxu0
        %v3691 = vadd.f32 %v3608, %v3690
        %v3692 = vpop.f32.mrf.mxu0
        %v3693 = vadd.f32 %v3610, %v3692
        %3694 = vmatprep.mubr.bf16.mxu0 %v831
        %3695 = vmatmul.mubr.bf16.gmra.mxu0 %v830
        %v3696 = vpop.f32.mrf.mxu0
        %v3697 = vadd.f32 %v3614, %v3696
        %v3698 = vpop.f32.mrf.mxu0
        %v3699 = vadd.f32 %v3616, %v3698
        %v3700 = vpop.f32.mrf.mxu0
        %v3701 = vadd.f32 %v3618, %v3700
        %v3702 = vpop.f32.mrf.mxu0
        %v3703 = vadd.f32 %v3620, %v3702
        %3704 = vmatprep.mubr.bf16.mxu0 %v839
        %3705 = vmatmul.mubr.bf16.gmra.mxu0 %v838
        %v3706 = vpop.f32.mrf.mxu0
        %v3707 = vadd.f32 %v3624, %v3706
        %v3708 = vpop.f32.mrf.mxu0
        %v3709 = vadd.f32 %v3626, %v3708
        %v3710 = vpop.f32.mrf.mxu0
        %v3711 = vadd.f32 %v3628, %v3710
        %v3712 = vpop.f32.mrf.mxu0
        %v3713 = vadd.f32 %v3630, %v3712
        %3714 = vdwg.mxu0
        %3715 = vmatprep.subr.bf16.mxu0 %v2369
        %3716 = vmatpush1.bf16.msra.mxu0 %v2368
        %3717 = vmatprep.subr.bf16.mxu0 %v2363
        %3718 = vmatpush1.bf16.msra.mxu0 %v2362
        %3719 = vmatprep.subr.bf16.mxu0 %v2357
        %3720 = vmatpush1.bf16.msra.mxu0 %v2356
        %3721 = vmatprep.subr.bf16.mxu0 %v2351
        %3722 = vmatpush1.bf16.msra.mxu0 %v2350
        %3723 = vmatprep.subr.bf16.mxu0 %v2345
        %3724 = vmatpush1.bf16.msra.mxu0 %v2344
        %3725 = vmatprep.subr.bf16.mxu0 %v2339
        %3726 = vmatpush1.bf16.msra.mxu0 %v2338
        %3727 = vmatprep.subr.bf16.mxu0 %v2333
        %3728 = vmatpush1.bf16.msra.mxu0 %v2332
        %3729 = vmatprep.subr.bf16.mxu0 %v2327
        %3730 = vmatpush1.bf16.msra.mxu0 %v2326
        %3731 = vmatprep.subr.bf16.mxu0 %v2417
        %3732 = vmatpush2.bf16.msra.mxu0 %v2416
        %3733 = vmatprep.subr.bf16.mxu0 %v2411
        %3734 = vmatpush2.bf16.msra.mxu0 %v2410
        %3735 = vmatprep.subr.bf16.mxu0 %v2405
        %3736 = vmatpush2.bf16.msra.mxu0 %v2404
        %3737 = vmatprep.subr.bf16.mxu0 %v2399
        %3738 = vmatpush2.bf16.msra.mxu0 %v2398
        %3739 = vmatprep.subr.bf16.mxu0 %v2393
        %3740 = vmatpush2.bf16.msra.mxu0 %v2392
        %3741 = vmatprep.subr.bf16.mxu0 %v2387
        %3742 = vmatpush2.bf16.msra.mxu0 %v2386
        %3743 = vmatprep.subr.bf16.mxu0 %v2381
        %3744 = vmatpush2.bf16.msra.mxu0 %v2380
        %3745 = vmatprep.subr.bf16.mxu0 %v2375
        %3746 = vmatpush2.bf16.msra.mxu0 %v2374
        %3747 = vmatprep.mubr.bf16.mxu0 %v809
        %3748 = vmatmul.mubr.bf16.gmra.mxu0 %v808
        %v3749 = vpop.f32.mrf.mxu0
        %v3750 = vadd.f32 %v3667, %v3749
        %v3751 = vpop.f32.mrf.mxu0
        %v3752 = vadd.f32 %v3669, %v3751
        %v3753 = vpop.f32.mrf.mxu0
        %v3754 = vadd.f32 %v3671, %v3753
        %v3755 = vpop.f32.mrf.mxu0
        %v3756 = vadd.f32 %v3673, %v3755
        %3757 = vmatprep.mubr.bf16.mxu0 %v817
        %3758 = vmatmul.mubr.bf16.gmra.mxu0 %v816
        %v3759 = vpop.f32.mrf.mxu0
        %v3760 = vadd.f32 %v3677, %v3759
        %v3761 = vpop.f32.mrf.mxu0
        %v3762 = vadd.f32 %v3679, %v3761
        %v3763 = vpop.f32.mrf.mxu0
        %v3764 = vadd.f32 %v3681, %v3763
        %v3765 = vpop.f32.mrf.mxu0
        %v3766 = vadd.f32 %v3683, %v3765
        %3767 = vmatprep.mubr.bf16.mxu0 %v825
        %3768 = vmatmul.mubr.bf16.gmra.mxu0 %v824
        %v3769 = vpop.f32.mrf.mxu0
        %v3770 = vadd.f32 %v3687, %v3769
        %v3771 = vpop.f32.mrf.mxu0
        %v3772 = vadd.f32 %v3689, %v3771
        %v3773 = vpop.f32.mrf.mxu0
        %v3774 = vadd.f32 %v3691, %v3773
        %v3775 = vpop.f32.mrf.mxu0
        %v3776 = vadd.f32 %v3693, %v3775
        %3777 = vmatprep.mubr.bf16.mxu0 %v833
        %3778 = vmatmul.mubr.bf16.gmra.mxu0 %v832
        %v3779 = vpop.f32.mrf.mxu0
        %v3780 = vadd.f32 %v3697, %v3779
        %v3781 = vpop.f32.mrf.mxu0
        %v3782 = vadd.f32 %v3699, %v3781
        %v3783 = vpop.f32.mrf.mxu0
        %v3784 = vadd.f32 %v3701, %v3783
        %v3785 = vpop.f32.mrf.mxu0
        %v3786 = vadd.f32 %v3703, %v3785
        %3787 = vmatprep.mubr.bf16.mxu0 %v841
        %3788 = vmatmul.mubr.bf16.gmra.mxu0 %v840
        %v3789 = vpop.f32.mrf.mxu0
        %v3790 = vadd.f32 %v3707, %v3789
        %v3791 = vpop.f32.mrf.mxu0
        %v3792 = vadd.f32 %v3709, %v3791
        %v3793 = vpop.f32.mrf.mxu0
        %v3794 = vadd.f32 %v3711, %v3793
        %v3795 = vpop.f32.mrf.mxu0
        %v3796 = vadd.f32 %v3713, %v3795
        %3797 = vdwg.mxu0
        %v3798 = vadd.f32 %v3086, %v3088
        %v3799 = vadd.f32 %v3798, %v3418
        %v3800 = vadd.f32 %v3799, %v3420
        %v3801 = vadd.f32 %v3800, %v3750
        %v3802 = vadd.f32 %v3801, %v3752
        %3803 = vadd.xlane.f32.xlu0 %v3802
        %v3804 = vpop.xlane.xlu0 %3803
        %v3805 = vadd.f32 %v3090, %v3092
        %v3806 = vadd.f32 %v3805, %v3422
        %v3807 = vadd.f32 %v3806, %v3424
        %v3808 = vadd.f32 %v3807, %v3754
        %v3809 = vadd.f32 %v3808, %v3756
        %3810 = vadd.xlane.f32.xlu0 %v3809
        %v3811 = vpop.xlane.xlu0 %3810
        %v3812 = vadd.f32 %v3096, %v3098
        %v3813 = vadd.f32 %v3812, %v3428
        %v3814 = vadd.f32 %v3813, %v3430
        %v3815 = vadd.f32 %v3814, %v3760
        %v3816 = vadd.f32 %v3815, %v3762
        %3817 = vadd.xlane.f32.xlu0 %v3816
        %v3818 = vpop.xlane.xlu0 %3817
        %v3819 = vadd.f32 %v3100, %v3102
        %v3820 = vadd.f32 %v3819, %v3432
        %v3821 = vadd.f32 %v3820, %v3434
        %v3822 = vadd.f32 %v3821, %v3764
        %v3823 = vadd.f32 %v3822, %v3766
        %3824 = vadd.xlane.f32.xlu0 %v3823
        %v3825 = vpop.xlane.xlu0 %3824
        %v3826 = vadd.f32 %v3106, %v3108
        %v3827 = vadd.f32 %v3826, %v3438
        %v3828 = vadd.f32 %v3827, %v3440
        %v3829 = vadd.f32 %v3828, %v3770
        %v3830 = vadd.f32 %v3829, %v3772
        %3831 = vadd.xlane.f32.xlu0 %v3830
        %v3832 = vpop.xlane.xlu0 %3831
        %v3833 = vadd.f32 %v3110, %v3112
        %v3834 = vadd.f32 %v3833, %v3442
        %v3835 = vadd.f32 %v3834, %v3444
        %v3836 = vadd.f32 %v3835, %v3774
        %v3837 = vadd.f32 %v3836, %v3776
        %3838 = vadd.xlane.f32.xlu0 %v3837
        %v3839 = vpop.xlane.xlu0 %3838
        %v3840 = vadd.f32 %v3116, %v3118
        %v3841 = vadd.f32 %v3840, %v3448
        %v3842 = vadd.f32 %v3841, %v3450
        %v3843 = vadd.f32 %v3842, %v3780
        %v3844 = vadd.f32 %v3843, %v3782
        %3845 = vadd.xlane.f32.xlu0 %v3844
        %v3846 = vpop.xlane.xlu0 %3845
        %v3847 = vadd.f32 %v3120, %v3122
        %v3848 = vadd.f32 %v3847, %v3452
        %v3849 = vadd.f32 %v3848, %v3454
        %v3850 = vadd.f32 %v3849, %v3784
        %v3851 = vadd.f32 %v3850, %v3786
        %3852 = vadd.xlane.f32.xlu0 %v3851
        %v3853 = vpop.xlane.xlu0 %3852
        %v3854 = vadd.f32 %v3126, %v3128
        %v3855 = vadd.f32 %v3854, %v3458
        %v3856 = vadd.f32 %v3855, %v3460
        %v3857 = vadd.f32 %v3856, %v3790
        %v3858 = vadd.f32 %v3857, %v3792
        %3859 = vadd.xlane.f32.xlu0 %v3858
        %v3860 = vpop.xlane.xlu0 %3859
        %vm3861 = vcmask 1044480
        %v3862 = vsel %vm3861, %v3130, 0.0
        %v3863 = vsel %vm3861, %v3132, 0.0
        %v3864 = vadd.f32 %v3862, %v3863
        %v3865 = vsel %vm3861, %v3462, 0.0
        %v3866 = vadd.f32 %v3864, %v3865
        %v3867 = vsel %vm3861, %v3464, 0.0
        %v3868 = vadd.f32 %v3866, %v3867
        %v3869 = vsel %vm3861, %v3794, 0.0
        %v3870 = vadd.f32 %v3868, %v3869
        %v3871 = vsel %vm3861, %v3796, 0.0
        %v3872 = vadd.f32 %v3870, %v3871
        %3873 = vadd.xlane.f32.xlu0 %v3872
        %v3874 = vpop.xlane.xlu0 %3873
        %v3875 = vrcp.pop 768.0
        %v3876 = vmul.f32 %v3804, %v3875
        %v3877 = vmul.f32 %v3811, %v3875
        %v3878 = vmul.f32 %v3818, %v3875
        %v3879 = vmul.f32 %v3825, %v3875
        %v3880 = vmul.f32 %v3832, %v3875
        %v3881 = vmul.f32 %v3839, %v3875
        %v3882 = vmul.f32 %v3846, %v3875
        %v3883 = vmul.f32 %v3853, %v3875
        %v3884 = vmul.f32 %v3860, %v3875
        %v3885 = vmul.f32 %v3874, %v3875
        %v3886 = vsub.f32 %v3086, %v3876
        %v3887 = vsub.f32 %v3088, %v3876
        %v3888 = vsub.f32 %v3418, %v3876
        %v3889 = vsub.f32 %v3420, %v3876
        %v3890 = vsub.f32 %v3750, %v3876
        %v3891 = vsub.f32 %v3752, %v3876
        %v3892 = vsub.f32 %v3090, %v3877
        %v3893 = vsub.f32 %v3092, %v3877
        %v3894 = vsub.f32 %v3422, %v3877
        %v3895 = vsub.f32 %v3424, %v3877
        %v3896 = vsub.f32 %v3754, %v3877
        %v3897 = vsub.f32 %v3756, %v3877
        %v3898 = vsub.f32 %v3096, %v3878
        %v3899 = vsub.f32 %v3098, %v3878
        %v3900 = vsub.f32 %v3428, %v3878
        %v3901 = vsub.f32 %v3430, %v3878
        %v3902 = vsub.f32 %v3760, %v3878
        %v3903 = vsub.f32 %v3762, %v3878
        %v3904 = vsub.f32 %v3100, %v3879
        %v3905 = vsub.f32 %v3102, %v3879
        %v3906 = vsub.f32 %v3432, %v3879
        %v3907 = vsub.f32 %v3434, %v3879
        %v3908 = vsub.f32 %v3764, %v3879
        %v3909 = vsub.f32 %v3766, %v3879
        %v3910 = vsub.f32 %v3106, %v3880
        %v3911 = vsub.f32 %v3108, %v3880
        %v3912 = vsub.f32 %v3438, %v3880
        %v3913 = vsub.f32 %v3440, %v3880
        %v3914 = vsub.f32 %v3770, %v3880
        %v3915 = vsub.f32 %v3772, %v3880
        %v3916 = vsub.f32 %v3110, %v3881
        %v3917 = vsub.f32 %v3112, %v3881
        %v3918 = vsub.f32 %v3442, %v3881
        %v3919 = vsub.f32 %v3444, %v3881
        %v3920 = vsub.f32 %v3774, %v3881
        %v3921 = vsub.f32 %v3776, %v3881
        %v3922 = vsub.f32 %v3116, %v3882
        %v3923 = vsub.f32 %v3118, %v3882
        %v3924 = vsub.f32 %v3448, %v3882
        %v3925 = vsub.f32 %v3450, %v3882
        %v3926 = vsub.f32 %v3780, %v3882
        %v3927 = vsub.f32 %v3782, %v3882
        %v3928 = vsub.f32 %v3120, %v3883
        %v3929 = vsub.f32 %v3122, %v3883
        %v3930 = vsub.f32 %v3452, %v3883
        %v3931 = vsub.f32 %v3454, %v3883
        %v3932 = vsub.f32 %v3784, %v3883
        %v3933 = vsub.f32 %v3786, %v3883
        %v3934 = vsub.f32 %v3126, %v3884
        %v3935 = vsub.f32 %v3128, %v3884
        %v3936 = vsub.f32 %v3458, %v3884
        %v3937 = vsub.f32 %v3460, %v3884
        %v3938 = vsub.f32 %v3790, %v3884
        %v3939 = vsub.f32 %v3792, %v3884
        %v3940 = vsub.f32 %v3130, %v3885
        %v3941 = vsub.f32 %v3132, %v3885
        %v3942 = vsub.f32 %v3462, %v3885
        %v3943 = vsub.f32 %v3464, %v3885
        %v3944 = vsub.f32 %v3794, %v3885
        %v3945 = vsub.f32 %v3796, %v3885
        %v3946 = vmul.f32 %v3886, %v3886
        %v3947 = vmul.f32 %v3887, %v3887
        %v3948 = vmul.f32 %v3888, %v3888
        %v3949 = vmul.f32 %v3889, %v3889
        %v3950 = vmul.f32 %v3890, %v3890
        %v3951 = vmul.f32 %v3891, %v3891
        %v3952 = vmul.f32 %v3892, %v3892
        %v3953 = vmul.f32 %v3893, %v3893
        %v3954 = vmul.f32 %v3894, %v3894
        %v3955 = vmul.f32 %v3895, %v3895
        %v3956 = vmul.f32 %v3896, %v3896
        %v3957 = vmul.f32 %v3897, %v3897
        %v3958 = vmul.f32 %v3898, %v3898
        %v3959 = vmul.f32 %v3899, %v3899
        %v3960 = vmul.f32 %v3900, %v3900
        %v3961 = vmul.f32 %v3901, %v3901
        %v3962 = vmul.f32 %v3902, %v3902
        %v3963 = vmul.f32 %v3903, %v3903
        %v3964 = vmul.f32 %v3904, %v3904
        %v3965 = vmul.f32 %v3905, %v3905
        %v3966 = vmul.f32 %v3906, %v3906
        %v3967 = vmul.f32 %v3907, %v3907
        %v3968 = vmul.f32 %v3908, %v3908
        %v3969 = vmul.f32 %v3909, %v3909
        %v3970 = vmul.f32 %v3910, %v3910
        %v3971 = vmul.f32 %v3911, %v3911
        %v3972 = vmul.f32 %v3912, %v3912
        %v3973 = vmul.f32 %v3913, %v3913
        %v3974 = vmul.f32 %v3914, %v3914
        %v3975 = vmul.f32 %v3915, %v3915
        %v3976 = vmul.f32 %v3916, %v3916
        %v3977 = vmul.f32 %v3917, %v3917
        %v3978 = vmul.f32 %v3918, %v3918
        %v3979 = vmul.f32 %v3919, %v3919
        %v3980 = vmul.f32 %v3920, %v3920
        %v3981 = vmul.f32 %v3921, %v3921
        %v3982 = vmul.f32 %v3922, %v3922
        %v3983 = vmul.f32 %v3923, %v3923
        %v3984 = vmul.f32 %v3924, %v3924
        %v3985 = vmul.f32 %v3925, %v3925
        %v3986 = vmul.f32 %v3926, %v3926
        %v3987 = vmul.f32 %v3927, %v3927
        %v3988 = vmul.f32 %v3928, %v3928
        %v3989 = vmul.f32 %v3929, %v3929
        %v3990 = vmul.f32 %v3930, %v3930
        %v3991 = vmul.f32 %v3931, %v3931
        %v3992 = vmul.f32 %v3932, %v3932
        %v3993 = vmul.f32 %v3933, %v3933
        %v3994 = vmul.f32 %v3934, %v3934
        %v3995 = vmul.f32 %v3935, %v3935
        %v3996 = vmul.f32 %v3936, %v3936
        %v3997 = vmul.f32 %v3937, %v3937
        %v3998 = vmul.f32 %v3938, %v3938
        %v3999 = vmul.f32 %v3939, %v3939
        %v4000 = vmul.f32 %v3940, %v3940
        %v4001 = vmul.f32 %v3941, %v3941
        %v4002 = vmul.f32 %v3942, %v3942
        %v4003 = vmul.f32 %v3943, %v3943
        %v4004 = vmul.f32 %v3944, %v3944
        %v4005 = vmul.f32 %v3945, %v3945
        %v4006 = vadd.f32 %v3946, %v3947
        %v4007 = vadd.f32 %v4006, %v3948
        %v4008 = vadd.f32 %v4007, %v3949
        %v4009 = vadd.f32 %v4008, %v3950
        %v4010 = vadd.f32 %v4009, %v3951
        %4011 = vadd.xlane.f32.xlu0 %v4010
        %v4012 = vpop.xlane.xlu0 %4011
        %v4013 = vadd.f32 %v3952, %v3953
        %v4014 = vadd.f32 %v4013, %v3954
        %v4015 = vadd.f32 %v4014, %v3955
        %v4016 = vadd.f32 %v4015, %v3956
        %v4017 = vadd.f32 %v4016, %v3957
        %4018 = vadd.xlane.f32.xlu0 %v4017
        %v4019 = vpop.xlane.xlu0 %4018
        %v4020 = vadd.f32 %v3958, %v3959
        %v4021 = vadd.f32 %v4020, %v3960
        %v4022 = vadd.f32 %v4021, %v3961
        %v4023 = vadd.f32 %v4022, %v3962
        %v4024 = vadd.f32 %v4023, %v3963
        %4025 = vadd.xlane.f32.xlu0 %v4024
        %v4026 = vpop.xlane.xlu0 %4025
        %v4027 = vadd.f32 %v3964, %v3965
        %v4028 = vadd.f32 %v4027, %v3966
        %v4029 = vadd.f32 %v4028, %v3967
        %v4030 = vadd.f32 %v4029, %v3968
        %v4031 = vadd.f32 %v4030, %v3969
        %4032 = vadd.xlane.f32.xlu0 %v4031
        %v4033 = vpop.xlane.xlu0 %4032
        %v4034 = vadd.f32 %v3970, %v3971
        %v4035 = vadd.f32 %v4034, %v3972
        %v4036 = vadd.f32 %v4035, %v3973
        %v4037 = vadd.f32 %v4036, %v3974
        %v4038 = vadd.f32 %v4037, %v3975
        %4039 = vadd.xlane.f32.xlu0 %v4038
        %v4040 = vpop.xlane.xlu0 %4039
        %v4041 = vadd.f32 %v3976, %v3977
        %v4042 = vadd.f32 %v4041, %v3978
        %v4043 = vadd.f32 %v4042, %v3979
        %v4044 = vadd.f32 %v4043, %v3980
        %v4045 = vadd.f32 %v4044, %v3981
        %4046 = vadd.xlane.f32.xlu0 %v4045
        %v4047 = vpop.xlane.xlu0 %4046
        %v4048 = vadd.f32 %v3982, %v3983
        %v4049 = vadd.f32 %v4048, %v3984
        %v4050 = vadd.f32 %v4049, %v3985
        %v4051 = vadd.f32 %v4050, %v3986
        %v4052 = vadd.f32 %v4051, %v3987
        %4053 = vadd.xlane.f32.xlu0 %v4052
        %v4054 = vpop.xlane.xlu0 %4053
        %v4055 = vadd.f32 %v3988, %v3989
        %v4056 = vadd.f32 %v4055, %v3990
        %v4057 = vadd.f32 %v4056, %v3991
        %v4058 = vadd.f32 %v4057, %v3992
        %v4059 = vadd.f32 %v4058, %v3993
        %4060 = vadd.xlane.f32.xlu0 %v4059
        %v4061 = vpop.xlane.xlu0 %4060
        %v4062 = vadd.f32 %v3994, %v3995
        %v4063 = vadd.f32 %v4062, %v3996
        %v4064 = vadd.f32 %v4063, %v3997
        %v4065 = vadd.f32 %v4064, %v3998
        %v4066 = vadd.f32 %v4065, %v3999
        %4067 = vadd.xlane.f32.xlu0 %v4066
        %v4068 = vpop.xlane.xlu0 %4067
        %v4069 = vsel %vm3861, %v4000, 0.0
        %v4070 = vsel %vm3861, %v4001, 0.0
        %v4071 = vadd.f32 %v4069, %v4070
        %v4072 = vsel %vm3861, %v4002, 0.0
        %v4073 = vadd.f32 %v4071, %v4072
        %v4074 = vsel %vm3861, %v4003, 0.0
        %v4075 = vadd.f32 %v4073, %v4074
        %v4076 = vsel %vm3861, %v4004, 0.0
        %v4077 = vadd.f32 %v4075, %v4076
        %v4078 = vsel %vm3861, %v4005, 0.0
        %v4079 = vadd.f32 %v4077, %v4078
        %4080 = vadd.xlane.f32.xlu0 %v4079
        %v4081 = vpop.xlane.xlu0 %4080
        %v4082 = vmul.f32 %v4012, %v3875
        %v4083 = vmul.f32 %v4019, %v3875
        %v4084 = vmul.f32 %v4026, %v3875
        %v4085 = vmul.f32 %v4033, %v3875
        %v4086 = vmul.f32 %v4040, %v3875
        %v4087 = vmul.f32 %v4047, %v3875
        %v4088 = vmul.f32 %v4054, %v3875
        %v4089 = vmul.f32 %v4061, %v3875
        %v4090 = vmul.f32 %v4068, %v3875
        %v4091 = vmul.f32 %v4081, %v3875
        %v4092 = vadd.f32 %v4082, 1e-05
        %v4093 = vadd.f32 %v4083, 1e-05
        %v4094 = vadd.f32 %v4084, 1e-05
        %v4095 = vadd.f32 %v4085, 1e-05
        %v4096 = vadd.f32 %v4086, 1e-05
        %v4097 = vadd.f32 %v4087, 1e-05
        %v4098 = vadd.f32 %v4088, 1e-05
        %v4099 = vadd.f32 %v4089, 1e-05
        %v4100 = vadd.f32 %v4090, 1e-05
        %v4101 = vadd.f32 %v4091, 1e-05
        %v4102 = vrsqrt.pop %v4092
        %v4103 = vrsqrt.pop %v4093
        %v4104 = vrsqrt.pop %v4094
        %v4105 = vrsqrt.pop %v4095
        %v4106 = vrsqrt.pop %v4096
        %v4107 = vrsqrt.pop %v4097
        %v4108 = vrsqrt.pop %v4098
        %v4109 = vrsqrt.pop %v4099
        %v4110 = vrsqrt.pop %v4100
        %v4111 = vrsqrt.pop %v4101
        %v4112 = vmul.f32 %v3886, %v4102
        %v4113 = vmul.f32 %v3887, %v4102
        %v4114 = vmul.f32 %v3888, %v4102
        %v4115 = vmul.f32 %v3889, %v4102
        %v4116 = vmul.f32 %v3890, %v4102
        %v4117 = vmul.f32 %v3891, %v4102
        %v4118 = vmul.f32 %v3892, %v4103
        %v4119 = vmul.f32 %v3893, %v4103
        %v4120 = vmul.f32 %v3894, %v4103
        %v4121 = vmul.f32 %v3895, %v4103
        %v4122 = vmul.f32 %v3896, %v4103
        %v4123 = vmul.f32 %v3897, %v4103
        %v4124 = vmul.f32 %v3898, %v4104
        %v4125 = vmul.f32 %v3899, %v4104
        %v4126 = vmul.f32 %v3900, %v4104
        %v4127 = vmul.f32 %v3901, %v4104
        %v4128 = vmul.f32 %v3902, %v4104
        %v4129 = vmul.f32 %v3903, %v4104
        %v4130 = vmul.f32 %v3904, %v4105
        %v4131 = vmul.f32 %v3905, %v4105
        %v4132 = vmul.f32 %v3906, %v4105
        %v4133 = vmul.f32 %v3907, %v4105
        %v4134 = vmul.f32 %v3908, %v4105
        %v4135 = vmul.f32 %v3909, %v4105
        %v4136 = vmul.f32 %v3910, %v4106
        %v4137 = vmul.f32 %v3911, %v4106
        %v4138 = vmul.f32 %v3912, %v4106
        %v4139 = vmul.f32 %v3913, %v4106
        %v4140 = vmul.f32 %v3914, %v4106
        %v4141 = vmul.f32 %v3915, %v4106
        %v4142 = vmul.f32 %v3916, %v4107
        %v4143 = vmul.f32 %v3917, %v4107
        %v4144 = vmul.f32 %v3918, %v4107
        %v4145 = vmul.f32 %v3919, %v4107
        %v4146 = vmul.f32 %v3920, %v4107
        %v4147 = vmul.f32 %v3921, %v4107
        %v4148 = vmul.f32 %v3922, %v4108
        %v4149 = vmul.f32 %v3923, %v4108
        %v4150 = vmul.f32 %v3924, %v4108
        %v4151 = vmul.f32 %v3925, %v4108
        %v4152 = vmul.f32 %v3926, %v4108
        %v4153 = vmul.f32 %v3927, %v4108
        %v4154 = vmul.f32 %v3928, %v4109
        %v4155 = vmul.f32 %v3929, %v4109
        %v4156 = vmul.f32 %v3930, %v4109
        %v4157 = vmul.f32 %v3931, %v4109
        %v4158 = vmul.f32 %v3932, %v4109
        %v4159 = vmul.f32 %v3933, %v4109
        %v4160 = vmul.f32 %v3934, %v4110
        %v4161 = vmul.f32 %v3935, %v4110
        %v4162 = vmul.f32 %v3936, %v4110
        %v4163 = vmul.f32 %v3937, %v4110
        %v4164 = vmul.f32 %v3938, %v4110
        %v4165 = vmul.f32 %v3939, %v4110
        %v4166 = vmul.f32 %v3940, %v4111
        %v4167 = vmul.f32 %v3941, %v4111
        %v4168 = vmul.f32 %v3942, %v4111
        %v4169 = vmul.f32 %v3943, %v4111
        %v4170 = vmul.f32 %v3944, %v4111
        %v4171 = vmul.f32 %v3945, %v4111
        %v4172 = vld [vmem:[#allocation6] sm:$0x3f]
        %v4174 = vlaneseq
        %v4175 = vshrl.u32 %v4174, 7
        %v4176 = vsub.s32 0, %v4175
        %v4177 = vrot.slane %v4172, %v4176
        %v4178 = vlaneseq
        %v4179 = vshrl.u32 %v4178, 7
        %v4180 = vsub.s32 1, %v4179
        %v4181 = vrot.slane %v4172, %v4180
        %v4182 = vlaneseq
        %v4183 = vshrl.u32 %v4182, 7
        %v4184 = vsub.s32 2, %v4183
        %v4185 = vrot.slane %v4172, %v4184
        %v4186 = vlaneseq
        %v4187 = vshrl.u32 %v4186, 7
        %v4188 = vsub.s32 3, %v4187
        %v4189 = vrot.slane %v4172, %v4188
        %v4190 = vlaneseq
        %v4191 = vshrl.u32 %v4190, 7
        %v4192 = vsub.s32 4, %v4191
        %v4193 = vrot.slane %v4172, %v4192
        %v4194 = vlaneseq
        %v4195 = vshrl.u32 %v4194, 7
        %v4196 = vsub.s32 5, %v4195
        %v4197 = vrot.slane %v4172, %v4196
        %v4204 = vmul.f32 %v4112, %v4177
        %v4205 = vmul.f32 %v4113, %v4181
        %v4206 = vmul.f32 %v4114, %v4185
        %v4207 = vmul.f32 %v4115, %v4189
        %v4208 = vmul.f32 %v4116, %v4193
        %v4209 = vmul.f32 %v4117, %v4197
        %v4210 = vmul.f32 %v4118, %v4177
        %v4211 = vmul.f32 %v4119, %v4181
        %v4212 = vmul.f32 %v4120, %v4185
        %v4213 = vmul.f32 %v4121, %v4189
        %v4214 = vmul.f32 %v4122, %v4193
        %v4215 = vmul.f32 %v4123, %v4197
        %v4216 = vmul.f32 %v4124, %v4177
        %v4217 = vmul.f32 %v4125, %v4181
        %v4218 = vmul.f32 %v4126, %v4185
        %v4219 = vmul.f32 %v4127, %v4189
        %v4220 = vmul.f32 %v4128, %v4193
        %v4221 = vmul.f32 %v4129, %v4197
        %v4222 = vmul.f32 %v4130, %v4177
        %v4223 = vmul.f32 %v4131, %v4181
        %v4224 = vmul.f32 %v4132, %v4185
        %v4225 = vmul.f32 %v4133, %v4189
        %v4226 = vmul.f32 %v4134, %v4193
        %v4227 = vmul.f32 %v4135, %v4197
        %v4228 = vmul.f32 %v4136, %v4177
        %v4229 = vmul.f32 %v4137, %v4181
        %v4230 = vmul.f32 %v4138, %v4185
        %v4231 = vmul.f32 %v4139, %v4189
        %v4232 = vmul.f32 %v4140, %v4193
        %v4233 = vmul.f32 %v4141, %v4197
        %v4234 = vmul.f32 %v4142, %v4177
        %v4235 = vmul.f32 %v4143, %v4181
        %v4236 = vmul.f32 %v4144, %v4185
        %v4237 = vmul.f32 %v4145, %v4189
        %v4238 = vmul.f32 %v4146, %v4193
        %v4239 = vmul.f32 %v4147, %v4197
        %v4240 = vmul.f32 %v4148, %v4177
        %v4241 = vmul.f32 %v4149, %v4181
        %v4242 = vmul.f32 %v4150, %v4185
        %v4243 = vmul.f32 %v4151, %v4189
        %v4244 = vmul.f32 %v4152, %v4193
        %v4245 = vmul.f32 %v4153, %v4197
        %v4246 = vmul.f32 %v4154, %v4177
        %v4247 = vmul.f32 %v4155, %v4181
        %v4248 = vmul.f32 %v4156, %v4185
        %v4249 = vmul.f32 %v4157, %v4189
        %v4250 = vmul.f32 %v4158, %v4193
        %v4251 = vmul.f32 %v4159, %v4197
        %v4252 = vmul.f32 %v4160, %v4177
        %v4253 = vmul.f32 %v4161, %v4181
        %v4254 = vmul.f32 %v4162, %v4185
        %v4255 = vmul.f32 %v4163, %v4189
        %v4256 = vmul.f32 %v4164, %v4193
        %v4257 = vmul.f32 %v4165, %v4197
        %v4258 = vmul.f32 %v4166, %v4177
        %v4259 = vmul.f32 %v4167, %v4181
        %v4260 = vmul.f32 %v4168, %v4185
        %v4261 = vmul.f32 %v4169, %v4189
        %v4262 = vmul.f32 %v4170, %v4193
        %v4263 = vmul.f32 %v4171, %v4197
        %v4264 = vld [vmem:[#allocation7] sm:$0x3f]
        %v4266 = vlaneseq
        %v4267 = vshrl.u32 %v4266, 7
        %v4268 = vsub.s32 0, %v4267
        %v4269 = vrot.slane %v4264, %v4268
        %v4270 = vlaneseq
        %v4271 = vshrl.u32 %v4270, 7
        %v4272 = vsub.s32 1, %v4271
        %v4273 = vrot.slane %v4264, %v4272
        %v4274 = vlaneseq
        %v4275 = vshrl.u32 %v4274, 7
        %v4276 = vsub.s32 2, %v4275
        %v4277 = vrot.slane %v4264, %v4276
        %v4278 = vlaneseq
        %v4279 = vshrl.u32 %v4278, 7
        %v4280 = vsub.s32 3, %v4279
        %v4281 = vrot.slane %v4264, %v4280
        %v4282 = vlaneseq
        %v4283 = vshrl.u32 %v4282, 7
        %v4284 = vsub.s32 4, %v4283
        %v4285 = vrot.slane %v4264, %v4284
        %v4286 = vlaneseq
        %v4287 = vshrl.u32 %v4286, 7
        %v4288 = vsub.s32 5, %v4287
        %v4289 = vrot.slane %v4264, %v4288
        %v4296 = vadd.f32 %v4204, %v4269
        %v4297 = vadd.f32 %v4205, %v4273
        %v4298 = vadd.f32 %v4206, %v4277
        %v4299 = vadd.f32 %v4207, %v4281
        %v4300 = vadd.f32 %v4208, %v4285
        %v4301 = vadd.f32 %v4209, %v4289
        %v4302 = vadd.f32 %v4210, %v4269
        %v4303 = vadd.f32 %v4211, %v4273
        %v4304 = vadd.f32 %v4212, %v4277
        %v4305 = vadd.f32 %v4213, %v4281
        %v4306 = vadd.f32 %v4214, %v4285
        %v4307 = vadd.f32 %v4215, %v4289
        %v4308 = vadd.f32 %v4216, %v4269
        %v4309 = vadd.f32 %v4217, %v4273
        %v4310 = vadd.f32 %v4218, %v4277
        %v4311 = vadd.f32 %v4219, %v4281
        %v4312 = vadd.f32 %v4220, %v4285
        %v4313 = vadd.f32 %v4221, %v4289
        %v4314 = vadd.f32 %v4222, %v4269
        %v4315 = vadd.f32 %v4223, %v4273
        %v4316 = vadd.f32 %v4224, %v4277
        %v4317 = vadd.f32 %v4225, %v4281
        %v4318 = vadd.f32 %v4226, %v4285
        %v4319 = vadd.f32 %v4227, %v4289
        %v4320 = vadd.f32 %v4228, %v4269
        %v4321 = vadd.f32 %v4229, %v4273
        %v4322 = vadd.f32 %v4230, %v4277
        %v4323 = vadd.f32 %v4231, %v4281
        %v4324 = vadd.f32 %v4232, %v4285
        %v4325 = vadd.f32 %v4233, %v4289
        %v4326 = vadd.f32 %v4234, %v4269
        %v4327 = vadd.f32 %v4235, %v4273
        %v4328 = vadd.f32 %v4236, %v4277
        %v4329 = vadd.f32 %v4237, %v4281
        %v4330 = vadd.f32 %v4238, %v4285
        %v4331 = vadd.f32 %v4239, %v4289
        %v4332 = vadd.f32 %v4240, %v4269
        %v4333 = vadd.f32 %v4241, %v4273
        %v4334 = vadd.f32 %v4242, %v4277
        %v4335 = vadd.f32 %v4243, %v4281
        %v4336 = vadd.f32 %v4244, %v4285
        %v4337 = vadd.f32 %v4245, %v4289
        %v4338 = vadd.f32 %v4246, %v4269
        %v4339 = vadd.f32 %v4247, %v4273
        %v4340 = vadd.f32 %v4248, %v4277
        %v4341 = vadd.f32 %v4249, %v4281
        %v4342 = vadd.f32 %v4250, %v4285
        %v4343 = vadd.f32 %v4251, %v4289
        %v4344 = vadd.f32 %v4252, %v4269
        %v4345 = vadd.f32 %v4253, %v4273
        %v4346 = vadd.f32 %v4254, %v4277
        %v4347 = vadd.f32 %v4255, %v4281
        %v4348 = vadd.f32 %v4256, %v4285
        %v4349 = vadd.f32 %v4257, %v4289
        %v4350 = vadd.f32 %v4258, %v4269
        %v4351 = vadd.f32 %v4259, %v4273
        %v4352 = vadd.f32 %v4260, %v4277
        %v4353 = vadd.f32 %v4261, %v4281
        %v4354 = vadd.f32 %v4262, %v4285
        %v4355 = vadd.f32 %v4263, %v4289
        %4356 = vst [vmem:[%s257] sm:$0xff] %v4296
        %4357 = vst [vmem:[%s257 + $0x8] sm:$0xff] %v4297
        %4358 = vst [vmem:[%s257 + $0x10] sm:$0xff] %v4298
        %4359 = vst [vmem:[%s257 + $0x18] sm:$0xff] %v4299
        %4360 = vst [vmem:[%s257 + $0x20] sm:$0xff] %v4300
        %4361 = vst [vmem:[%s257 + $0x28] sm:$0xff] %v4301
        %4362 = vst [vmem:[%s257 + $0x30] sm:$0xff] %v4302
        %4363 = vst [vmem:[%s257 + $0x38] sm:$0xff] %v4303
        %4364 = vst [vmem:[%s257 + $0x40] sm:$0xff] %v4304
        %4365 = vst [vmem:[%s257 + $0x48] sm:$0xff] %v4305
        %4366 = vst [vmem:[%s257 + $0x50] sm:$0xff] %v4306
        %4367 = vst [vmem:[%s257 + $0x58] sm:$0xff] %v4307
        %4368 = vst [vmem:[%s257 + $0x60] sm:$0xff] %v4308
        %4369 = vst [vmem:[%s257 + $0x68] sm:$0xff] %v4309
        %4370 = vst [vmem:[%s257 + $0x70] sm:$0xff] %v4310
        %4371 = vst [vmem:[%s257 + $0x78] sm:$0xff] %v4311
        %4372 = vst [vmem:[%s257 + $0x80] sm:$0xff] %v4312
        %4373 = vst [vmem:[%s257 + $0x88] sm:$0xff] %v4313
        %4374 = vst [vmem:[%s257 + $0x90] sm:$0xff] %v4314
        %4375 = vst [vmem:[%s257 + $0x98] sm:$0xff] %v4315
        %4376 = vst [vmem:[%s257 + $0xa0] sm:$0xff] %v4316
        %4377 = vst [vmem:[%s257 + $0xa8] sm:$0xff] %v4317
        %4378 = vst [vmem:[%s257 + $0xb0] sm:$0xff] %v4318
        %4379 = vst [vmem:[%s257 + $0xb8] sm:$0xff] %v4319
        %4380 = vst [vmem:[%s257 + $0xc0] sm:$0xff] %v4320
        %4381 = vst [vmem:[%s257 + $0xc8] sm:$0xff] %v4321
        %4382 = vst [vmem:[%s257 + $0xd0] sm:$0xff] %v4322
        %4383 = vst [vmem:[%s257 + $0xd8] sm:$0xff] %v4323
        %4384 = vst [vmem:[%s257 + $0xe0] sm:$0xff] %v4324
        %4385 = vst [vmem:[%s257 + $0xe8] sm:$0xff] %v4325
        %4386 = vst [vmem:[%s257 + $0xf0] sm:$0xff] %v4326
        %4387 = vst [vmem:[%s257 + $0xf8] sm:$0xff] %v4327
        %4388 = vst [vmem:[%s257 + $0x100] sm:$0xff] %v4328
        %4389 = vst [vmem:[%s257 + $0x108] sm:$0xff] %v4329
        %4390 = vst [vmem:[%s257 + $0x110] sm:$0xff] %v4330
        %4391 = vst [vmem:[%s257 + $0x118] sm:$0xff] %v4331
        %4392 = vst [vmem:[%s257 + $0x120] sm:$0xff] %v4332
        %4393 = vst [vmem:[%s257 + $0x128] sm:$0xff] %v4333
        %4394 = vst [vmem:[%s257 + $0x130] sm:$0xff] %v4334
        %4395 = vst [vmem:[%s257 + $0x138] sm:$0xff] %v4335
        %4396 = vst [vmem:[%s257 + $0x140] sm:$0xff] %v4336
        %4397 = vst [vmem:[%s257 + $0x148] sm:$0xff] %v4337
        %4398 = vst [vmem:[%s257 + $0x150] sm:$0xff] %v4338
        %4399 = vst [vmem:[%s257 + $0x158] sm:$0xff] %v4339
        %4400 = vst [vmem:[%s257 + $0x160] sm:$0xff] %v4340
        %4401 = vst [vmem:[%s257 + $0x168] sm:$0xff] %v4341
        %4402 = vst [vmem:[%s257 + $0x170] sm:$0xff] %v4342
        %4403 = vst [vmem:[%s257 + $0x178] sm:$0xff] %v4343
        %4404 = vst [vmem:[%s257 + $0x180] sm:$0xff] %v4344
        %4405 = vst [vmem:[%s257 + $0x188] sm:$0xff] %v4345
        %4406 = vst [vmem:[%s257 + $0x190] sm:$0xff] %v4346
        %4407 = vst [vmem:[%s257 + $0x198] sm:$0xff] %v4347
        %4408 = vst [vmem:[%s257 + $0x1a0] sm:$0xff] %v4348
        %4409 = vst [vmem:[%s257 + $0x1a8] sm:$0xff] %v4349
        %4410 = vst [vmem:[%s257 + $0x1b0] sm:$0x1f] %v4350
        %4411 = vst [vmem:[%s257 + $0x1b8] sm:$0x1f] %v4351
        %4412 = vst [vmem:[%s257 + $0x1c0] sm:$0x1f] %v4352
        %4413 = vst [vmem:[%s257 + $0x1c8] sm:$0x1f] %v4353
        %4414 = vst [vmem:[%s257 + $0x1d0] sm:$0x1f] %v4354
        %4415 = vst [vmem:[%s257 + $0x1d8] sm:$0x1f] %v4355
        %p4416 = scmp.lt.s32.totalorder %s20, 1
        %s4417 = scalar_select %p4416, %s20, 1
        %s4418 = smul.addr %s4417, 60
        %s4419 = smul.addr %s4418, 8
        %s4420 = scalar_lea.vmem %s4, %s4419
        // Predicated region
        $region53: #{tpu_custom_call.1} parent=35 // pred_check
          %p4421 = pneg %p127
        $region54: #{tpu_custom_call.1} parent=35 // pred_check_branch
          %4423 = sbr.rel (%p4421) target = $region56
        $region55: #{tpu_custom_call.1} parent=35 // pred_region
          _
        $region56: #{tpu_custom_call.1} parent=35 // pred_fallthru
          _
      $region36: #{tpu_custom_call.1} parent=5 // pred_fallthru
        _
      %p4424 = scmp.le.s32.totalorder 2, %s15
      // Predicated region
      $region57: #{tpu_custom_call.1} parent=5 // pred_check
        %p4425 = pneg %p4424
      $region58: #{tpu_custom_call.1} parent=5 // pred_check_branch
        %4427 = sbr.rel (%p4425) target = $region60
      $region59: #{tpu_custom_call.1} parent=5 // pred_region
        %s4428 = ssub.s32 %s15, 2
        // Predicated region
        $region61: #{tpu_custom_call.1} parent=59 // pred_check
          %p4429 = pneg %p133
        $region62: #{tpu_custom_call.1} parent=59 // pred_check_branch
          %4431 = sbr.rel (%p4429) target = $region64
        $region63: #{tpu_custom_call.1} parent=59 // pred_region
          %p4432 = scmp.lt.s32.totalorder %s21, 1
          %s4433 = scalar_select %p4432, %s21, 1
          %s4434 = smul.addr %s4433, 60
          %s4435 = smul.addr %s4434, 8
          %s4436 = scalar_lea.vmem %s4, %s4435
        $region64: #{tpu_custom_call.1} parent=59 // pred_fallthru
          _
      $region60: #{tpu_custom_call.1} parent=5 // pred_fallthru
        _
    $region6: #{tpu_custom_call.1} parent=1 // loop_footer
      %s19 = sadd.s32 1, %s15
    $region7: #{tpu_custom_call.1} parent=1 // loop_footer_branch
      %14 = sbr.rel target = $region3
    $region8: #{tpu_custom_call.1} parent=1 // loop_exit
      _
    %4437 = vsyncpa [#allocation3], 1
    %s4438 = scalar_lea.sflag [#allocation3], 1
    %4439 = vsyncpa %s4438, 1
    %4440 = vsyncpa [#allocation5], 1
    %4441 = vsyncpa [#allocation8], 1

</llo_original>
